<compile_context>
chip_gen: v7x
topology: tpu7x:2x2x1
jax: 0.10.0
libtpu: 0.0.40
codegen_flags: <defaults>
</compile_context>

<pallas_src>
import jax
import jax.numpy as jnp
from jax.experimental import pallas as pl
from jax.experimental.pallas import tpu as pltpu

BN_EPS = 1e-5
LANE = 128


def _round_up(x, m):
    return (x + m - 1) // m * m


def _gen_block(x, w_ref, gb_ref):
    """Linear (bias folded away by BN) -> BatchNorm1d (train mode) -> ReLU."""
    y = jnp.dot(x, w_ref[...], preferred_element_type=jnp.float32)
    inv_n = 1.0 / y.shape[0]
    # One-pass batch statistics (biased variance, as PyTorch BN uses in forward).
    mean = jnp.sum(y, axis=0, keepdims=True) * inv_n
    mean_sq = jnp.sum(y * y, axis=0, keepdims=True) * inv_n
    var = jnp.maximum(mean_sq - mean * mean, 0.0)
    gamma = gb_ref[0:1, :]
    beta = gb_ref[1:2, :]
    s = gamma * jax.lax.rsqrt(var + BN_EPS)   # (1, D)
    t = beta - mean * s                        # (1, D)
    return jnp.maximum(y * s + t, 0.0)         # single (N, D) mul + add


def generator_kernel(noise_ref,
                     w1, gb1, w2, gb2, w3, gb3, w4, gb4, w5, b5,
                     out_ref):
    x = noise_ref[...]
    x = _gen_block(x, w1, gb1)
    x = _gen_block(x, w2, gb2)
    x = _gen_block(x, w3, gb3)
    x = _gen_block(x, w4, gb4)
    logits = jnp.dot(x, w5[...], preferred_element_type=jnp.float32) + b5[...]
    out_ref[...] = jax.nn.sigmoid(logits)


def _pack_params(params):
    """params: [w1,b1,g1,be1, ..., w4,b4,g4,be4, w5,b5] with weights as (in, out).

    Returns lane-padded, packed kernel args:
      [W1p, gb1, W2p, gb2, W3p, gb3, W4p, gb4, W5p, b5p]
    Linear biases of the BN blocks are dropped: train-mode BN subtracts the batch
    mean per feature, so a constant bias cancels exactly. Padded feature lanes stay
    exactly zero through BN/ReLU because gamma/beta/weight pads are zero.
    """
    packed = []
    pad_in = 0  # zero rows to append so the next weight matches the padded activation
    for i in range(4):
        w, _b, g, be = params[4 * i: 4 * i + 4]
        _din, dout = w.shape
        dout_p = _round_up(dout, LANE)
        wp = jnp.pad(w, ((0, pad_in), (0, dout_p - dout)))
        gb = jnp.pad(jnp.concatenate([g, be], axis=0), ((0, 0), (0, dout_p - dout)))
        packed += [wp, gb]
        pad_in = dout_p - dout
    w5, b5 = params[-2], params[-1]
    _din, im_dim = w5.shape
    im_p = _round_up(im_dim, LANE)
    packed += [jnp.pad(w5, ((0, pad_in), (0, im_p - im_dim))),
               jnp.pad(b5, ((0, 0), (0, im_p - im_dim)))]
    return packed, im_dim, im_p


def generator_forward(noise, params):
    """noise: (N, z_dim) -> (N, im_dim)  [one BN batch, exact module semantics]
             (B, N, z_dim) -> (B, N, im_dim)  [B independent BN batches, gridded]"""
    squeeze = noise.ndim == 2
    if squeeze:
        noise = noise[None]
    B, N, z_dim = noise.shape
    packed, im_dim, im_p = _pack_params(params)

    noise_spec = pl.BlockSpec((None, N, z_dim), lambda b: (b, 0, 0))
    param_specs = [pl.BlockSpec(p.shape, lambda b: (0, 0)) for p in packed]
    out_spec = pl.BlockSpec((None, N, im_p), lambda b: (b, 0, 0))

    d1, d2, d3, d4 = (packed[0].shape[1], packed[2].shape[1],
                      packed[4].shape[1], packed[6].shape[1])
    flops = 2 * B * N * (z_dim * d1 + d1 * d2 + d2 * d3 + d3 * d4 + d4 * im_p)
    bytes_accessed = 4 * (noise.size + sum(int(p.size) for p in packed) + B * N * im_p)
    cost = pl.CostEstimate(flops=int(flops),
                           transcendentals=int(B * N * im_p),
                           bytes_accessed=int(bytes_accessed))

    out = pl.pallas_call(
        generator_kernel,
        grid=(B,),
        in_specs=[noise_spec] + param_specs,
        out_specs=out_spec,
        out_shape=jax.ShapeDtypeStruct((B, N, im_p), jnp.float32),
        compiler_params=pltpu.CompilerParams(
            dimension_semantics=("parallel",)),  # v7x: 2 TCs split the batch axis
        cost_estimate=cost,
    )(noise, *packed)

    out = out[..., :im_dim]  # strip lane padding
    return out[0] if squeeze else out


def generator_ref(noise, params):
    """Pure-JAX reference matching PyTorch semantics (train-mode BN, with Linear bias)."""
    def single(x):
        for i in range(4):
            w, b, g, be = params[4 * i: 4 * i + 4]
            y = x @ w + b
            mean = y.mean(axis=0, keepdims=True)
            var = ((y - mean) ** 2).mean(axis=0, keepdims=True)
            x = jnp.maximum((y - mean) * jax.lax.rsqrt(var + BN_EPS) * g + be, 0.0)
        return jax.nn.sigmoid(x @ params[16] + params[17])
    if noise.ndim == 3:
        return jnp.stack([single(noise[i]) for i in range(noise.shape[0])])
    return single(noise)


def make_params(key, z_dim=10, hidden_dim=64, im_dim=784):
    """Deterministic synthetic parameters with the shapes implied by Generator.__init__.
    Weights are stored as (in_features, out_features); transpose real PyTorch weights."""
    block_dims = [
        (z_dim, hidden_dim),
        (hidden_dim, hidden_dim * 2),
        (hidden_dim * 2, hidden_dim * 4),
        (hidden_dim * 4, hidden_dim * 8),
    ]
    keys = jax.random.split(key, 4 * len(block_dims) + 2)
    params = []
    ki = 0
    for din, dout in block_dims:
        w = jax.random.normal(keys[ki], (din, dout), jnp.float32) / jnp.sqrt(float(din)); ki += 1
        b = 0.1 * jax.random.normal(keys[ki], (1, dout), jnp.float32); ki += 1
        g = 1.0 + 0.1 * jax.random.normal(keys[ki], (1, dout), jnp.float32); ki += 1
        be = 0.1 * jax.random.normal(keys[ki], (1, dout), jnp.float32); ki += 1
        params += [w, b, g, be]
    din = hidden_dim * 8
    w5 = jax.random.normal(keys[ki], (din, im_dim), jnp.float32) / jnp.sqrt(float(din)); ki += 1
    b5 = 0.1 * jax.random.normal(keys[ki], (1, im_dim), jnp.float32)
    params += [w5, b5]
    return params


if __name__ == "__main__":
    B, N, z_dim, hidden_dim, im_dim = 2, 128, 10, 64, 784

    key = jax.random.PRNGKey(0)
    pkey, nkey = jax.random.split(key)
    params = make_params(pkey, z_dim=z_dim, hidden_dim=hidden_dim, im_dim=im_dim)
    noise = jax.random.normal(nkey, (B, N, z_dim), jnp.float32)

    # Gridded path: B independent BN batches in one pallas_call.
    out = jax.block_until_ready(generator_forward(noise, params))
    ref = jax.block_until_ready(generator_ref(noise, params))
    assert out.shape == (B, N, im_dim)
    assert jnp.allclose(out, ref, atol=2e-3, rtol=2e-3), "batched mismatch vs reference"

    # Single-batch path: exact equivalent of Generator.forward(noise).
    out1 = jax.block_until_ready(generator_forward(noise[0], params))
    assert out1.shape == (N, im_dim)
    assert jnp.allclose(out1, ref[0], atol=2e-3, rtol=2e-3), "single-batch mismatch"

    print("KERNEL_OK")
</pallas_src>

<mosaic_0001>
module attributes {stable_mosaic.version = 11 : i64} {
  func.func @generator_kernel(%arg0: i32, %arg1: memref<1x128x10xf32, #tpu.memory_space<vmem>>, %arg2: memref<10x128xf32, #tpu.memory_space<vmem>>, %arg3: memref<2x128xf32, #tpu.memory_space<vmem>>, %arg4: memref<128x128xf32, #tpu.memory_space<vmem>>, %arg5: memref<2x128xf32, #tpu.memory_space<vmem>>, %arg6: memref<128x256xf32, #tpu.memory_space<vmem>>, %arg7: memref<2x256xf32, #tpu.memory_space<vmem>>, %arg8: memref<256x512xf32, #tpu.memory_space<vmem>>, %arg9: memref<2x512xf32, #tpu.memory_space<vmem>>, %arg10: memref<512x896xf32, #tpu.memory_space<vmem>>, %arg11: memref<1x896xf32, #tpu.memory_space<vmem>>, %arg12: memref<1x128x896xf32, #tpu.memory_space<vmem>>) attributes {dimension_semantics = [#tpu.dimension_semantics<parallel>], iteration_bounds = array<i64: 2>, scalar_prefetch = 0 : i64, scratch_operands = 0 : i64, tpu.core_type = #tpu.core_type<tc>, window_params = [{transform_indices = @transform_0, window_bounds = array<i64: 1, 128, 10>}, {pipeline_mode = #tpu.pipeline_mode<synchronous>, transform_indices = @transform_1, window_bounds = array<i64: 10, 128>}, {pipeline_mode = #tpu.pipeline_mode<synchronous>, transform_indices = @transform_2, window_bounds = array<i64: 2, 128>}, {pipeline_mode = #tpu.pipeline_mode<synchronous>, transform_indices = @transform_3, window_bounds = array<i64: 128, 128>}, {pipeline_mode = #tpu.pipeline_mode<synchronous>, transform_indices = @transform_4, window_bounds = array<i64: 2, 128>}, {pipeline_mode = #tpu.pipeline_mode<synchronous>, transform_indices = @transform_5, window_bounds = array<i64: 128, 256>}, {pipeline_mode = #tpu.pipeline_mode<synchronous>, transform_indices = @transform_6, window_bounds = array<i64: 2, 256>}, {pipeline_mode = #tpu.pipeline_mode<synchronous>, transform_indices = @transform_7, window_bounds = array<i64: 256, 512>}, {pipeline_mode = #tpu.pipeline_mode<synchronous>, transform_indices = @transform_8, window_bounds = array<i64: 2, 512>}, {pipeline_mode = #tpu.pipeline_mode<synchronous>, transform_indices = @transform_9, window_bounds = array<i64: 512, 896>}, {pipeline_mode = #tpu.pipeline_mode<synchronous>, transform_indices = @transform_10, window_bounds = array<i64: 1, 896>}, {transform_indices = @transform_11, window_bounds = array<i64: 1, 128, 896>}]} {
    %c0 = arith.constant 0 : index
    %c0_0 = arith.constant 0 : index
    %c0_1 = arith.constant 0 : index
    %0 = vector.load %arg1[%c0, %c0_0, %c0_1] : memref<1x128x10xf32, #tpu.memory_space<vmem>>, vector<1x128x10xf32>
    %1 = vector.shape_cast %0 : vector<1x128x10xf32> to vector<128x10xf32>
    %c0_2 = arith.constant 0 : index
    %c0_3 = arith.constant 0 : index
    %2 = vector.load %arg2[%c0_2, %c0_3] : memref<10x128xf32, #tpu.memory_space<vmem>>, vector<10x128xf32>
    %cst = arith.constant dense<0.000000e+00> : vector<128x128xf32>
    %3 = tpu.matmul %1, %2, %cst {dimension_numbers = #tpu.dot_dimension_numbers<[1], [0], [0], [1], [0, 0, 1, 1], [], []>} : vector<128x10xf32>, vector<10x128xf32>, vector<128x128xf32> -> vector<128x128xf32>
    %cst_4 = arith.constant dense<0.000000e+00> : vector<128xf32>
    %4 = vector.multi_reduction <add>, %3, %cst_4 [0] : vector<128x128xf32> to vector<128xf32>
    %5 = vector.shape_cast %4 : vector<128xf32> to vector<1x128xf32>
    %cst_5 = arith.constant 7.812500e-03 : f32
    %6 = vector.broadcast %cst_5 : f32 to vector<1x128xf32>
    %7 = arith.mulf %5, %6 : vector<1x128xf32>
    %8 = arith.mulf %3, %3 : vector<128x128xf32>
    %cst_6 = arith.constant dense<0.000000e+00> : vector<128xf32>
    %9 = vector.multi_reduction <add>, %8, %cst_6 [0] : vector<128x128xf32> to vector<128xf32>
    %10 = vector.shape_cast %9 : vector<128xf32> to vector<1x128xf32>
    %cst_7 = arith.constant 7.812500e-03 : f32
    %11 = vector.broadcast %cst_7 : f32 to vector<1x128xf32>
    %12 = arith.mulf %10, %11 : vector<1x128xf32>
    %13 = arith.mulf %7, %7 : vector<1x128xf32>
    %14 = arith.subf %12, %13 : vector<1x128xf32>
    %cst_8 = arith.constant 0.000000e+00 : f32
    %15 = vector.broadcast %cst_8 : f32 to vector<1x128xf32>
    %16 = arith.maximumf %14, %15 : vector<1x128xf32>
    %c0_9 = arith.constant 0 : index
    %c0_10 = arith.constant 0 : index
    %17 = vector.load %arg3[%c0_9, %c0_10] : memref<2x128xf32, #tpu.memory_space<vmem>>, vector<1x128xf32>
    %c1 = arith.constant 1 : index
    %c0_11 = arith.constant 0 : index
    %18 = vector.load %arg3[%c1, %c0_11] : memref<2x128xf32, #tpu.memory_space<vmem>>, vector<1x128xf32>
    %cst_12 = arith.constant 9.99999974E-6 : f32
    %19 = vector.broadcast %cst_12 : f32 to vector<1x128xf32>
    %20 = arith.addf %16, %19 : vector<1x128xf32>
    %21 = math.rsqrt %20 : vector<1x128xf32>
    %22 = arith.mulf %17, %21 : vector<1x128xf32>
    %23 = arith.mulf %7, %22 : vector<1x128xf32>
    %24 = arith.subf %18, %23 : vector<1x128xf32>
    %25 = vector.broadcast %22 : vector<1x128xf32> to vector<128x128xf32>
    %26 = arith.mulf %3, %25 : vector<128x128xf32>
    %27 = vector.broadcast %24 : vector<1x128xf32> to vector<128x128xf32>
    %28 = arith.addf %26, %27 : vector<128x128xf32>
    %cst_13 = arith.constant 0.000000e+00 : f32
    %29 = vector.broadcast %cst_13 : f32 to vector<128x128xf32>
    %30 = arith.maximumf %28, %29 : vector<128x128xf32>
    %c0_14 = arith.constant 0 : index
    %c0_15 = arith.constant 0 : index
    %31 = vector.load %arg4[%c0_14, %c0_15] : memref<128x128xf32, #tpu.memory_space<vmem>>, vector<128x128xf32>
    %cst_16 = arith.constant dense<0.000000e+00> : vector<128x128xf32>
    %32 = tpu.matmul %30, %31, %cst_16 {dimension_numbers = #tpu.dot_dimension_numbers<[1], [0], [0], [1], [0, 0, 1, 1], [], []>} : vector<128x128xf32>, vector<128x128xf32>, vector<128x128xf32> -> vector<128x128xf32>
    %cst_17 = arith.constant dense<0.000000e+00> : vector<128xf32>
    %33 = vector.multi_reduction <add>, %32, %cst_17 [0] : vector<128x128xf32> to vector<128xf32>
    %34 = vector.shape_cast %33 : vector<128xf32> to vector<1x128xf32>
    %cst_18 = arith.constant 7.812500e-03 : f32
    %35 = vector.broadcast %cst_18 : f32 to vector<1x128xf32>
    %36 = arith.mulf %34, %35 : vector<1x128xf32>
    %37 = arith.mulf %32, %32 : vector<128x128xf32>
    %cst_19 = arith.constant dense<0.000000e+00> : vector<128xf32>
    %38 = vector.multi_reduction <add>, %37, %cst_19 [0] : vector<128x128xf32> to vector<128xf32>
    %39 = vector.shape_cast %38 : vector<128xf32> to vector<1x128xf32>
    %cst_20 = arith.constant 7.812500e-03 : f32
    %40 = vector.broadcast %cst_20 : f32 to vector<1x128xf32>
    %41 = arith.mulf %39, %40 : vector<1x128xf32>
    %42 = arith.mulf %36, %36 : vector<1x128xf32>
    %43 = arith.subf %41, %42 : vector<1x128xf32>
    %cst_21 = arith.constant 0.000000e+00 : f32
    %44 = vector.broadcast %cst_21 : f32 to vector<1x128xf32>
    %45 = arith.maximumf %43, %44 : vector<1x128xf32>
    %c0_22 = arith.constant 0 : index
    %c0_23 = arith.constant 0 : index
    %46 = vector.load %arg5[%c0_22, %c0_23] : memref<2x128xf32, #tpu.memory_space<vmem>>, vector<1x128xf32>
    %c1_24 = arith.constant 1 : index
    %c0_25 = arith.constant 0 : index
    %47 = vector.load %arg5[%c1_24, %c0_25] : memref<2x128xf32, #tpu.memory_space<vmem>>, vector<1x128xf32>
    %cst_26 = arith.constant 9.99999974E-6 : f32
    %48 = vector.broadcast %cst_26 : f32 to vector<1x128xf32>
    %49 = arith.addf %45, %48 : vector<1x128xf32>
    %50 = math.rsqrt %49 : vector<1x128xf32>
    %51 = arith.mulf %46, %50 : vector<1x128xf32>
    %52 = arith.mulf %36, %51 : vector<1x128xf32>
    %53 = arith.subf %47, %52 : vector<1x128xf32>
    %54 = vector.broadcast %51 : vector<1x128xf32> to vector<128x128xf32>
    %55 = arith.mulf %32, %54 : vector<128x128xf32>
    %56 = vector.broadcast %53 : vector<1x128xf32> to vector<128x128xf32>
    %57 = arith.addf %55, %56 : vector<128x128xf32>
    %cst_27 = arith.constant 0.000000e+00 : f32
    %58 = vector.broadcast %cst_27 : f32 to vector<128x128xf32>
    %59 = arith.maximumf %57, %58 : vector<128x128xf32>
    %c0_28 = arith.constant 0 : index
    %c0_29 = arith.constant 0 : index
    %60 = vector.load %arg6[%c0_28, %c0_29] : memref<128x256xf32, #tpu.memory_space<vmem>>, vector<128x256xf32>
    %cst_30 = arith.constant dense<0.000000e+00> : vector<128x256xf32>
    %61 = tpu.matmul %59, %60, %cst_30 {dimension_numbers = #tpu.dot_dimension_numbers<[1], [0], [0], [1], [0, 0, 1, 1], [], []>} : vector<128x128xf32>, vector<128x256xf32>, vector<128x256xf32> -> vector<128x256xf32>
    %cst_31 = arith.constant dense<0.000000e+00> : vector<256xf32>
    %62 = vector.multi_reduction <add>, %61, %cst_31 [0] : vector<128x256xf32> to vector<256xf32>
    %63 = vector.shape_cast %62 : vector<256xf32> to vector<1x256xf32>
    %cst_32 = arith.constant 7.812500e-03 : f32
    %64 = vector.broadcast %cst_32 : f32 to vector<1x256xf32>
    %65 = arith.mulf %63, %64 : vector<1x256xf32>
    %66 = arith.mulf %61, %61 : vector<128x256xf32>
    %cst_33 = arith.constant dense<0.000000e+00> : vector<256xf32>
    %67 = vector.multi_reduction <add>, %66, %cst_33 [0] : vector<128x256xf32> to vector<256xf32>
    %68 = vector.shape_cast %67 : vector<256xf32> to vector<1x256xf32>
    %cst_34 = arith.constant 7.812500e-03 : f32
    %69 = vector.broadcast %cst_34 : f32 to vector<1x256xf32>
    %70 = arith.mulf %68, %69 : vector<1x256xf32>
    %71 = arith.mulf %65, %65 : vector<1x256xf32>
    %72 = arith.subf %70, %71 : vector<1x256xf32>
    %cst_35 = arith.constant 0.000000e+00 : f32
    %73 = vector.broadcast %cst_35 : f32 to vector<1x256xf32>
    %74 = arith.maximumf %72, %73 : vector<1x256xf32>
    %c0_36 = arith.constant 0 : index
    %c0_37 = arith.constant 0 : index
    %75 = vector.load %arg7[%c0_36, %c0_37] : memref<2x256xf32, #tpu.memory_space<vmem>>, vector<1x256xf32>
    %c1_38 = arith.constant 1 : index
    %c0_39 = arith.constant 0 : index
    %76 = vector.load %arg7[%c1_38, %c0_39] : memref<2x256xf32, #tpu.memory_space<vmem>>, vector<1x256xf32>
    %cst_40 = arith.constant 9.99999974E-6 : f32
    %77 = vector.broadcast %cst_40 : f32 to vector<1x256xf32>
    %78 = arith.addf %74, %77 : vector<1x256xf32>
    %79 = math.rsqrt %78 : vector<1x256xf32>
    %80 = arith.mulf %75, %79 : vector<1x256xf32>
    %81 = arith.mulf %65, %80 : vector<1x256xf32>
    %82 = arith.subf %76, %81 : vector<1x256xf32>
    %83 = vector.broadcast %80 : vector<1x256xf32> to vector<128x256xf32>
    %84 = arith.mulf %61, %83 : vector<128x256xf32>
    %85 = vector.broadcast %82 : vector<1x256xf32> to vector<128x256xf32>
    %86 = arith.addf %84, %85 : vector<128x256xf32>
    %cst_41 = arith.constant 0.000000e+00 : f32
    %87 = vector.broadcast %cst_41 : f32 to vector<128x256xf32>
    %88 = arith.maximumf %86, %87 : vector<128x256xf32>
    %c0_42 = arith.constant 0 : index
    %c0_43 = arith.constant 0 : index
    %89 = vector.load %arg8[%c0_42, %c0_43] : memref<256x512xf32, #tpu.memory_space<vmem>>, vector<256x512xf32>
    %cst_44 = arith.constant dense<0.000000e+00> : vector<128x512xf32>
    %90 = tpu.matmul %88, %89, %cst_44 {dimension_numbers = #tpu.dot_dimension_numbers<[1], [0], [0], [1], [0, 0, 1, 1], [], []>} : vector<128x256xf32>, vector<256x512xf32>, vector<128x512xf32> -> vector<128x512xf32>
    %cst_45 = arith.constant dense<0.000000e+00> : vector<512xf32>
    %91 = vector.multi_reduction <add>, %90, %cst_45 [0] : vector<128x512xf32> to vector<512xf32>
    %92 = vector.shape_cast %91 : vector<512xf32> to vector<1x512xf32>
    %cst_46 = arith.constant 7.812500e-03 : f32
    %93 = vector.broadcast %cst_46 : f32 to vector<1x512xf32>
    %94 = arith.mulf %92, %93 : vector<1x512xf32>
    %95 = arith.mulf %90, %90 : vector<128x512xf32>
    %cst_47 = arith.constant dense<0.000000e+00> : vector<512xf32>
    %96 = vector.multi_reduction <add>, %95, %cst_47 [0] : vector<128x512xf32> to vector<512xf32>
    %97 = vector.shape_cast %96 : vector<512xf32> to vector<1x512xf32>
    %cst_48 = arith.constant 7.812500e-03 : f32
    %98 = vector.broadcast %cst_48 : f32 to vector<1x512xf32>
    %99 = arith.mulf %97, %98 : vector<1x512xf32>
    %100 = arith.mulf %94, %94 : vector<1x512xf32>
    %101 = arith.subf %99, %100 : vector<1x512xf32>
    %cst_49 = arith.constant 0.000000e+00 : f32
    %102 = vector.broadcast %cst_49 : f32 to vector<1x512xf32>
    %103 = arith.maximumf %101, %102 : vector<1x512xf32>
    %c0_50 = arith.constant 0 : index
    %c0_51 = arith.constant 0 : index
    %104 = vector.load %arg9[%c0_50, %c0_51] : memref<2x512xf32, #tpu.memory_space<vmem>>, vector<1x512xf32>
    %c1_52 = arith.constant 1 : index
    %c0_53 = arith.constant 0 : index
    %105 = vector.load %arg9[%c1_52, %c0_53] : memref<2x512xf32, #tpu.memory_space<vmem>>, vector<1x512xf32>
    %cst_54 = arith.constant 9.99999974E-6 : f32
    %106 = vector.broadcast %cst_54 : f32 to vector<1x512xf32>
    %107 = arith.addf %103, %106 : vector<1x512xf32>
    %108 = math.rsqrt %107 : vector<1x512xf32>
    %109 = arith.mulf %104, %108 : vector<1x512xf32>
    %110 = arith.mulf %94, %109 : vector<1x512xf32>
    %111 = arith.subf %105, %110 : vector<1x512xf32>
    %112 = vector.broadcast %109 : vector<1x512xf32> to vector<128x512xf32>
    %113 = arith.mulf %90, %112 : vector<128x512xf32>
    %114 = vector.broadcast %111 : vector<1x512xf32> to vector<128x512xf32>
    %115 = arith.addf %113, %114 : vector<128x512xf32>
    %cst_55 = arith.constant 0.000000e+00 : f32
    %116 = vector.broadcast %cst_55 : f32 to vector<128x512xf32>
    %117 = arith.maximumf %115, %116 : vector<128x512xf32>
    %c0_56 = arith.constant 0 : index
    %c0_57 = arith.constant 0 : index
    %118 = vector.load %arg10[%c0_56, %c0_57] : memref<512x896xf32, #tpu.memory_space<vmem>>, vector<512x896xf32>
    %cst_58 = arith.constant dense<0.000000e+00> : vector<128x896xf32>
    %119 = tpu.matmul %117, %118, %cst_58 {dimension_numbers = #tpu.dot_dimension_numbers<[1], [0], [0], [1], [0, 0, 1, 1], [], []>} : vector<128x512xf32>, vector<512x896xf32>, vector<128x896xf32> -> vector<128x896xf32>
    %c0_59 = arith.constant 0 : index
    %c0_60 = arith.constant 0 : index
    %120 = vector.load %arg11[%c0_59, %c0_60] : memref<1x896xf32, #tpu.memory_space<vmem>>, vector<1x896xf32>
    %121 = vector.broadcast %120 : vector<1x896xf32> to vector<128x896xf32>
    %122 = arith.addf %119, %121 : vector<128x896xf32>
    %123 = arith.negf %122 : vector<128x896xf32>
    %124 = math.exp %123 : vector<128x896xf32>
    %cst_61 = arith.constant 1.000000e+00 : f32
    %125 = vector.broadcast %cst_61 : f32 to vector<128x896xf32>
    %126 = arith.addf %125, %124 : vector<128x896xf32>
    %127 = arith.divf %125, %126 : vector<128x896xf32>
    %c0_62 = arith.constant 0 : index
    %c0_63 = arith.constant 0 : index
    %c0_64 = arith.constant 0 : index
    %128 = vector.load %arg12[%c0_62, %c0_63, %c0_64] : memref<1x128x896xf32, #tpu.memory_space<vmem>>, vector<1x128x896xf32>
    %129 = vector.shape_cast %128 : vector<1x128x896xf32> to vector<128x896xf32>
    %130 = vector.shape_cast %127 : vector<128x896xf32> to vector<1x128x896xf32>
    tpu.vector_store %arg12[%c0_62, %c0_63, %c0_64], %130 {strides = array<i32>} : memref<1x128x896xf32, #tpu.memory_space<vmem>>, vector<1x128x896xf32>,
    return
  }
  func.func @transform_0(%arg0: i32) -> (i32, i32, i32) {
    %c0_i32 = arith.constant 0 : i32
    %c0_i32_0 = arith.constant 0 : i32
    %c0_i32_1 = arith.constant 0 : i32
    return %arg0, %c0_i32, %c0_i32_0 : i32, i32, i32
  }
  func.func @transform_1(%arg0: i32) -> (i32, i32) {
    %c0_i32 = arith.constant 0 : i32
    %c0_i32_0 = arith.constant 0 : i32
    %c0_i32_1 = arith.constant 0 : i32
    return %c0_i32, %c0_i32_0 : i32, i32
  }
  func.func @transform_2(%arg0: i32) -> (i32, i32) {
    %c0_i32 = arith.constant 0 : i32
    %c0_i32_0 = arith.constant 0 : i32
    %c0_i32_1 = arith.constant 0 : i32
    return %c0_i32, %c0_i32_0 : i32, i32
  }
  func.func @transform_3(%arg0: i32) -> (i32, i32) {
    %c0_i32 = arith.constant 0 : i32
    %c0_i32_0 = arith.constant 0 : i32
    %c0_i32_1 = arith.constant 0 : i32
    return %c0_i32, %c0_i32_0 : i32, i32
  }
  func.func @transform_4(%arg0: i32) -> (i32, i32) {
    %c0_i32 = arith.constant 0 : i32
    %c0_i32_0 = arith.constant 0 : i32
    %c0_i32_1 = arith.constant 0 : i32
    return %c0_i32, %c0_i32_0 : i32, i32
  }
  func.func @transform_5(%arg0: i32) -> (i32, i32) {
    %c0_i32 = arith.constant 0 : i32
    %c0_i32_0 = arith.constant 0 : i32
    %c0_i32_1 = arith.constant 0 : i32
    return %c0_i32, %c0_i32_0 : i32, i32
  }
  func.func @transform_6(%arg0: i32) -> (i32, i32) {
    %c0_i32 = arith.constant 0 : i32
    %c0_i32_0 = arith.constant 0 : i32
    %c0_i32_1 = arith.constant 0 : i32
    return %c0_i32, %c0_i32_0 : i32, i32
  }
  func.func @transform_7(%arg0: i32) -> (i32, i32) {
    %c0_i32 = arith.constant 0 : i32
    %c0_i32_0 = arith.constant 0 : i32
    %c0_i32_1 = arith.constant 0 : i32
    return %c0_i32, %c0_i32_0 : i32, i32
  }
  func.func @transform_8(%arg0: i32) -> (i32, i32) {
    %c0_i32 = arith.constant 0 : i32
    %c0_i32_0 = arith.constant 0 : i32
    %c0_i32_1 = arith.constant 0 : i32
    return %c0_i32, %c0_i32_0 : i32, i32
  }
  func.func @transform_9(%arg0: i32) -> (i32, i32) {
    %c0_i32 = arith.constant 0 : i32
    %c0_i32_0 = arith.constant 0 : i32
    %c0_i32_1 = arith.constant 0 : i32
    return %c0_i32, %c0_i32_0 : i32, i32
  }
  func.func @transform_10(%arg0: i32) -> (i32, i32) {
    %c0_i32 = arith.constant 0 : i32
    %c0_i32_0 = arith.constant 0 : i32
    %c0_i32_1 = arith.constant 0 : i32
    return %c0_i32, %c0_i32_0 : i32, i32
  }
  func.func @transform_11(%arg0: i32) -> (i32, i32, i32) {
    %c0_i32 = arith.constant 0 : i32
    %c0_i32_0 = arith.constant 0 : i32
    %c0_i32_1 = arith.constant 0 : i32
    return %arg0, %c0_i32, %c0_i32_0 : i32, i32, i32
  }
}

</mosaic_0001>

<llo_original>
// kernel: tpu_custom_call.1
$region0: #{tpu_custom_call.1}
  #allocation0 [shape = 'u32[]', space=smem, size = 0x4, offset = 0x4, fixed_abs, tag = 'smem constant byte address 0x4 - core index']
  #allocation1 [shape = 'u32[144,128]{1,0:T(1,128)}', space=vmem, size = 0x12000, scoped, tag = 'internal scratch']
  %s0 = inlined_call_operand.vmem [shape: f32[2,128,10], index: 0, kind: input, shape index: {}]
  %s1 = inlined_call_operand.hbm [shape: f32[10,128], index: 1, kind: input, shape index: {}]
  %s2 = inlined_call_operand.hbm [shape: f32[2,128], index: 2, kind: input, shape index: {}]
  %s3 = inlined_call_operand.hbm [shape: f32[128,128], index: 3, kind: input, shape index: {}]
  %s4 = inlined_call_operand.hbm [shape: f32[2,128], index: 4, kind: input, shape index: {}]
  %s5 = inlined_call_operand.hbm [shape: f32[128,256], index: 5, kind: input, shape index: {}]
  %s6 = inlined_call_operand.hbm [shape: f32[2,256], index: 6, kind: input, shape index: {}]
  %s7 = inlined_call_operand.hbm [shape: f32[256,512], index: 7, kind: input, shape index: {}]
  %s8 = inlined_call_operand.hbm [shape: f32[2,512], index: 8, kind: input, shape index: {}]
  %s9 = inlined_call_operand.hbm [shape: f32[512,896], index: 9, kind: input, shape index: {}]
  %s10 = inlined_call_operand.hbm [shape: f32[1,896], index: 10, kind: input, shape index: {}]
  %s11 = inlined_call_operand.hbm [shape: f32[2,128,896], index: 11, kind: output, shape index: {}]
  %s12 = sld [smem:[#allocation0]]
  $region117: #{tpu_custom_call.1} parent=0
    _
  %s14 = ssub.s32 1, %s12
  %s15 = scalar_select 0, %s14, %s12
  $region1: #{tpu_custom_call.1} parent=0
    #allocation2 [shape = 'u8[8192]{0}', space=vmem, size = 0x2000, scoped, tag = 'input window, operand 1, single buffered']
    #allocation3 [shape = 's32[2]{0}', space=sflag, size = 0x8, scoped, tag = 'scoped memory for tpu_custom_call.1']
    #allocation4 [shape = 's32[2]{0}', space=sflag, size = 0x8, scoped, tag = 'scoped memory for tpu_custom_call.1']
    #allocation5 [shape = 'u8[1024]{0}', space=vmem, size = 0x400, scoped, tag = 'input window, operand 2, single buffered']
    #allocation6 [shape = 's32[1]{0}', space=sflag, size = 0x4, scoped, tag = 'scoped memory for tpu_custom_call.1']
    #allocation7 [shape = 'u8[65536]{0}', space=vmem, size = 0x10000, scoped, tag = 'input window, operand 3, single buffered']
    #allocation8 [shape = 'u8[1024]{0}', space=vmem, size = 0x400, scoped, tag = 'input window, operand 4, single buffered']
    #allocation9 [shape = 's32[1]{0}', space=sflag, size = 0x4, scoped, tag = 'scoped memory for tpu_custom_call.1']
    #allocation10 [shape = 'u8[131072]{0}', space=vmem, size = 0x20000, scoped, tag = 'input window, operand 5, single buffered']
    #allocation11 [shape = 'u8[2048]{0}', space=vmem, size = 0x800, scoped, tag = 'input window, operand 6, single buffered']
    #allocation12 [shape = 's32[1]{0}', space=sflag, size = 0x4, scoped, tag = 'scoped memory for tpu_custom_call.1']
    #allocation13 [shape = 'u8[524288]{0}', space=vmem, size = 0x80000, scoped, tag = 'input window, operand 7, single buffered']
    #allocation14 [shape = 'u8[4096]{0}', space=vmem, size = 0x1000, scoped, tag = 'input window, operand 8, single buffered']
    #allocation15 [shape = 's32[1]{0}', space=sflag, size = 0x4, scoped, tag = 'scoped memory for tpu_custom_call.1']
    #allocation16 [shape = 'u8[1835008]{0}', space=vmem, size = 0x1c0000, scoped, tag = 'input window, operand 9, single buffered']
    #allocation17 [shape = 'u8[3584]{0}', space=vmem, size = 0x1000, scoped, tag = 'input window, operand 10, single buffered']
    #allocation18 [shape = 's32[1]{0}', space=sflag, size = 0x4, scoped, tag = 'scoped memory for tpu_custom_call.1']
    #allocation19 [shape = 'u8[917504]{0}', space=vmem, size = 0xe0000, scoped, tag = 'output window, operand 0']
    %16 = vsyncpa [#allocation3], 0
    %17 = vsyncpa [#allocation6], 0
    %18 = vsyncpa [#allocation9], 0
    %19 = vsyncpa [#allocation12], 0
    %20 = vsyncpa [#allocation15], 0
    %21 = vsyncpa [#allocation18], 0
    %22 = vsyncpa [#allocation4], 0
    %s23 = scalar_lea.sflag [#allocation4], 1
    %24 = vsyncpa %s23, 0
    loop: start=0, step=1, limit=4
    $region2: #{tpu_custom_call.1} parent=1 // loop_pre_header
      _
    $region3: #{tpu_custom_call.1} parent=1 // loop_header
      %s26 = sphi 0, %s30
      %p27 = scmp.ge.s32.totalorder %s26, 4
      %s36 = sphi 0, %s38
      %s39 = sphi 0, %s36
      %s40 = sphi 0, %s39
      %s56 = sphi 0, %s40
      %s60 = sphi 0, %s60
      %s62 = sphi 0, %s60
      %s63 = sphi 0, %s62
      %s77 = sphi 0, %s63
      %s81 = sphi 0, %s81
      %s83 = sphi 0, %s81
      %s84 = sphi 0, %s83
      %s98 = sphi 0, %s84
      %s102 = sphi 0, %s102
      %s104 = sphi 0, %s102
      %s105 = sphi 0, %s104
      %s119 = sphi 0, %s105
      %s123 = sphi 0, %s123
      %s125 = sphi 0, %s123
      %s126 = sphi 0, %s125
      %s140 = sphi 0, %s126
      %s144 = sphi 0, %s144
      %s146 = sphi 0, %s144
      %s147 = sphi 0, %s146
      %s161 = sphi 0, %s147
      %s165 = sphi 0, %s165
      %s167 = sphi 0, %s165
      %s168 = sphi 0, %s167
      %s182 = sphi 0, %s168
      %s186 = sphi 0, %s186
      %s188 = sphi 0, %s186
      %s189 = sphi 0, %s188
      %s203 = sphi 0, %s189
      %s207 = sphi 0, %s207
      %s209 = sphi 0, %s207
      %s210 = sphi 0, %s209
      %s224 = sphi 0, %s210
      %s228 = sphi 0, %s228
      %s230 = sphi 0, %s228
      %s231 = sphi 0, %s230
      %s245 = sphi 0, %s231
      %s249 = sphi 0, %s249
      %s251 = sphi 0, %s249
      %s252 = sphi 0, %s251
      %s266 = sphi 0, %s252
      %s272 = sphi 0, %s274
      %s275 = sphi 0, %s272
      %s276 = sphi 0, %s275
      %s292 = sphi 0, %s276
    $region4: #{tpu_custom_call.1} parent=1 // loop_header_branch
      %29 = sbr.rel (%p27) target = $region8
    $region5: #{tpu_custom_call.1} parent=1 // loop_body
      %s31 = ssub.s32 %s26, 1
      %s32 = ssub.s32 %s26, 2
      %s33 = sadd.s32 %s26, 1
      %s34 = ssub.s32 %s26, %s33
      %p35 = scmp.eq.s32.totalorder %s34, 0
      %s37 = sadd.s32 %s36, 1
      %s38 = scalar_select %p35, %s36, %s37
      %p41 = pneg %p35
      %p42 = scmp.eq.s32.totalorder %s26, 1
      %p43 = por %p41, %p42
      %p44 = scmp.ne.s32.totalorder %s36, %s39
      %p45 = scmp.eq.s32.totalorder %s26, 0
      %p46 = por %p44, %p45
      %p47 = scmp.ne.s32.totalorder %s36, %s39
      %p48 = scmp.eq.s32.totalorder %s31, 1
      %p49 = por %p47, %p48
      %p50 = scmp.ne.s32.totalorder %s39, %s40
      %p51 = scmp.eq.s32.totalorder %s31, 0
      %p52 = por %p50, %p51
      %p53 = scmp.ne.s32.totalorder %s39, %s40
      %p54 = scmp.eq.s32.totalorder %s32, 1
      %p55 = por %p53, %p54
      %p57 = scmp.ne.s32.totalorder %s40, %s56
      %p58 = scmp.eq.s32.totalorder %s32, 0
      %p59 = por %p57, %p58
      %s61 = sadd.s32 %s60, 1
      %p64 = scmp.eq.s32.totalorder %s26, 1
      %p65 = scmp.ne.s32.totalorder %s60, %s62
      %p66 = scmp.eq.s32.totalorder %s26, 0
      %p67 = por %p65, %p66
      %p68 = scmp.ne.s32.totalorder %s60, %s62
      %p69 = scmp.eq.s32.totalorder %s31, 1
      %p70 = por %p68, %p69
      %p71 = scmp.ne.s32.totalorder %s62, %s63
      %p72 = scmp.eq.s32.totalorder %s31, 0
      %p73 = por %p71, %p72
      %p74 = scmp.ne.s32.totalorder %s62, %s63
      %p75 = scmp.eq.s32.totalorder %s32, 1
      %p76 = por %p74, %p75
      %p78 = scmp.ne.s32.totalorder %s63, %s77
      %p79 = scmp.eq.s32.totalorder %s32, 0
      %p80 = por %p78, %p79
      %s82 = sadd.s32 %s81, 1
      %p85 = scmp.eq.s32.totalorder %s26, 1
      %p86 = scmp.ne.s32.totalorder %s81, %s83
      %p87 = scmp.eq.s32.totalorder %s26, 0
      %p88 = por %p86, %p87
      %p89 = scmp.ne.s32.totalorder %s81, %s83
      %p90 = scmp.eq.s32.totalorder %s31, 1
      %p91 = por %p89, %p90
      %p92 = scmp.ne.s32.totalorder %s83, %s84
      %p93 = scmp.eq.s32.totalorder %s31, 0
      %p94 = por %p92, %p93
      %p95 = scmp.ne.s32.totalorder %s83, %s84
      %p96 = scmp.eq.s32.totalorder %s32, 1
      %p97 = por %p95, %p96
      %p99 = scmp.ne.s32.totalorder %s84, %s98
      %p100 = scmp.eq.s32.totalorder %s32, 0
      %p101 = por %p99, %p100
      %s103 = sadd.s32 %s102, 1
      %p106 = scmp.eq.s32.totalorder %s26, 1
      %p107 = scmp.ne.s32.totalorder %s102, %s104
      %p108 = scmp.eq.s32.totalorder %s26, 0
      %p109 = por %p107, %p108
      %p110 = scmp.ne.s32.totalorder %s102, %s104
      %p111 = scmp.eq.s32.totalorder %s31, 1
      %p112 = por %p110, %p111
      %p113 = scmp.ne.s32.totalorder %s104, %s105
      %p114 = scmp.eq.s32.totalorder %s31, 0
      %p115 = por %p113, %p114
      %p116 = scmp.ne.s32.totalorder %s104, %s105
      %p117 = scmp.eq.s32.totalorder %s32, 1
      %p118 = por %p116, %p117
      %p120 = scmp.ne.s32.totalorder %s105, %s119
      %p121 = scmp.eq.s32.totalorder %s32, 0
      %p122 = por %p120, %p121
      %s124 = sadd.s32 %s123, 1
      %p127 = scmp.eq.s32.totalorder %s26, 1
      %p128 = scmp.ne.s32.totalorder %s123, %s125
      %p129 = scmp.eq.s32.totalorder %s26, 0
      %p130 = por %p128, %p129
      %p131 = scmp.ne.s32.totalorder %s123, %s125
      %p132 = scmp.eq.s32.totalorder %s31, 1
      %p133 = por %p131, %p132
      %p134 = scmp.ne.s32.totalorder %s125, %s126
      %p135 = scmp.eq.s32.totalorder %s31, 0
      %p136 = por %p134, %p135
      %p137 = scmp.ne.s32.totalorder %s125, %s126
      %p138 = scmp.eq.s32.totalorder %s32, 1
      %p139 = por %p137, %p138
      %p141 = scmp.ne.s32.totalorder %s126, %s140
      %p142 = scmp.eq.s32.totalorder %s32, 0
      %p143 = por %p141, %p142
      %s145 = sadd.s32 %s144, 1
      %p148 = scmp.eq.s32.totalorder %s26, 1
      %p149 = scmp.ne.s32.totalorder %s144, %s146
      %p150 = scmp.eq.s32.totalorder %s26, 0
      %p151 = por %p149, %p150
      %p152 = scmp.ne.s32.totalorder %s144, %s146
      %p153 = scmp.eq.s32.totalorder %s31, 1
      %p154 = por %p152, %p153
      %p155 = scmp.ne.s32.totalorder %s146, %s147
      %p156 = scmp.eq.s32.totalorder %s31, 0
      %p157 = por %p155, %p156
      %p158 = scmp.ne.s32.totalorder %s146, %s147
      %p159 = scmp.eq.s32.totalorder %s32, 1
      %p160 = por %p158, %p159
      %p162 = scmp.ne.s32.totalorder %s147, %s161
      %p163 = scmp.eq.s32.totalorder %s32, 0
      %p164 = por %p162, %p163
      %s166 = sadd.s32 %s165, 1
      %p169 = scmp.eq.s32.totalorder %s26, 1
      %p170 = scmp.ne.s32.totalorder %s165, %s167
      %p171 = scmp.eq.s32.totalorder %s26, 0
      %p172 = por %p170, %p171
      %p173 = scmp.ne.s32.totalorder %s165, %s167
      %p174 = scmp.eq.s32.totalorder %s31, 1
      %p175 = por %p173, %p174
      %p176 = scmp.ne.s32.totalorder %s167, %s168
      %p177 = scmp.eq.s32.totalorder %s31, 0
      %p178 = por %p176, %p177
      %p179 = scmp.ne.s32.totalorder %s167, %s168
      %p180 = scmp.eq.s32.totalorder %s32, 1
      %p181 = por %p179, %p180
      %p183 = scmp.ne.s32.totalorder %s168, %s182
      %p184 = scmp.eq.s32.totalorder %s32, 0
      %p185 = por %p183, %p184
      %s187 = sadd.s32 %s186, 1
      %p190 = scmp.eq.s32.totalorder %s26, 1
      %p191 = scmp.ne.s32.totalorder %s186, %s188
      %p192 = scmp.eq.s32.totalorder %s26, 0
      %p193 = por %p191, %p192
      %p194 = scmp.ne.s32.totalorder %s186, %s188
      %p195 = scmp.eq.s32.totalorder %s31, 1
      %p196 = por %p194, %p195
      %p197 = scmp.ne.s32.totalorder %s188, %s189
      %p198 = scmp.eq.s32.totalorder %s31, 0
      %p199 = por %p197, %p198
      %p200 = scmp.ne.s32.totalorder %s188, %s189
      %p201 = scmp.eq.s32.totalorder %s32, 1
      %p202 = por %p200, %p201
      %p204 = scmp.ne.s32.totalorder %s189, %s203
      %p205 = scmp.eq.s32.totalorder %s32, 0
      %p206 = por %p204, %p205
      %s208 = sadd.s32 %s207, 1
      %p211 = scmp.eq.s32.totalorder %s26, 1
      %p212 = scmp.ne.s32.totalorder %s207, %s209
      %p213 = scmp.eq.s32.totalorder %s26, 0
      %p214 = por %p212, %p213
      %p215 = scmp.ne.s32.totalorder %s207, %s209
      %p216 = scmp.eq.s32.totalorder %s31, 1
      %p217 = por %p215, %p216
      %p218 = scmp.ne.s32.totalorder %s209, %s210
      %p219 = scmp.eq.s32.totalorder %s31, 0
      %p220 = por %p218, %p219
      %p221 = scmp.ne.s32.totalorder %s209, %s210
      %p222 = scmp.eq.s32.totalorder %s32, 1
      %p223 = por %p221, %p222
      %p225 = scmp.ne.s32.totalorder %s210, %s224
      %p226 = scmp.eq.s32.totalorder %s32, 0
      %p227 = por %p225, %p226
      %s229 = sadd.s32 %s228, 1
      %p232 = scmp.eq.s32.totalorder %s26, 1
      %p233 = scmp.ne.s32.totalorder %s228, %s230
      %p234 = scmp.eq.s32.totalorder %s26, 0
      %p235 = por %p233, %p234
      %p236 = scmp.ne.s32.totalorder %s228, %s230
      %p237 = scmp.eq.s32.totalorder %s31, 1
      %p238 = por %p236, %p237
      %p239 = scmp.ne.s32.totalorder %s230, %s231
      %p240 = scmp.eq.s32.totalorder %s31, 0
      %p241 = por %p239, %p240
      %p242 = scmp.ne.s32.totalorder %s230, %s231
      %p243 = scmp.eq.s32.totalorder %s32, 1
      %p244 = por %p242, %p243
      %p246 = scmp.ne.s32.totalorder %s231, %s245
      %p247 = scmp.eq.s32.totalorder %s32, 0
      %p248 = por %p246, %p247
      %s250 = sadd.s32 %s249, 1
      %p253 = scmp.eq.s32.totalorder %s26, 1
      %p254 = scmp.ne.s32.totalorder %s249, %s251
      %p255 = scmp.eq.s32.totalorder %s26, 0
      %p256 = por %p254, %p255
      %p257 = scmp.ne.s32.totalorder %s249, %s251
      %p258 = scmp.eq.s32.totalorder %s31, 1
      %p259 = por %p257, %p258
      %p260 = scmp.ne.s32.totalorder %s251, %s252
      %p261 = scmp.eq.s32.totalorder %s31, 0
      %p262 = por %p260, %p261
      %p263 = scmp.ne.s32.totalorder %s251, %s252
      %p264 = scmp.eq.s32.totalorder %s32, 1
      %p265 = por %p263, %p264
      %p267 = scmp.ne.s32.totalorder %s252, %s266
      %p268 = scmp.eq.s32.totalorder %s32, 0
      %p269 = por %p267, %p268
      %s270 = ssub.s32 %s26, %s33
      %p271 = scmp.eq.s32.totalorder %s270, 0
      %s273 = sadd.s32 %s272, 1
      %s274 = scalar_select %p271, %s272, %s273
      %p277 = pneg %p271
      %p278 = scmp.eq.s32.totalorder %s26, 1
      %p279 = por %p277, %p278
      %p280 = scmp.ne.s32.totalorder %s272, %s275
      %p281 = scmp.eq.s32.totalorder %s26, 0
      %p282 = por %p280, %p281
      %p283 = scmp.ne.s32.totalorder %s272, %s275
      %p284 = scmp.eq.s32.totalorder %s31, 1
      %p285 = por %p283, %p284
      %p286 = scmp.ne.s32.totalorder %s275, %s276
      %p287 = scmp.eq.s32.totalorder %s31, 0
      %p288 = por %p286, %p287
      %p289 = scmp.ne.s32.totalorder %s275, %s276
      %p290 = scmp.eq.s32.totalorder %s32, 1
      %p291 = por %p289, %p290
      %p293 = scmp.ne.s32.totalorder %s276, %s292
      %p294 = scmp.eq.s32.totalorder %s32, 0
      %p295 = por %p293, %p294
      %p296 = scmp.le.s32.totalorder 1, %s26
      %p297 = scmp.lt.s32.totalorder %s26, 3
      %p298 = pnand %p296, %p297
      %p299 = pneg %p298
      // Predicated region
      $region9: #{tpu_custom_call.1} parent=5 // pred_check
        _
      $region10: #{tpu_custom_call.1} parent=5 // pred_check_branch
        %301 = sbr.rel (%p298) target = $region12
      $region11: #{tpu_custom_call.1} parent=5 // pred_region
        %s302 = ssub.s32 %s26, 1
        // Predicated region
        $region13: #{tpu_custom_call.1} parent=11 // pred_check
          %p303 = pneg %p73
        $region14: #{tpu_custom_call.1} parent=11 // pred_check_branch
          %305 = sbr.rel (%p303) target = $region16
        $region15: #{tpu_custom_call.1} parent=11 // pred_region
          %s307 = ssub.s32 256, 256
          %308 = vsyncadd [#allocation3], %s307
          %s309 = sshll.u32 [#allocation2], 4
          %s310 = int_to_ptr.vmem [resolvable:$true] %s309
          %315 = dma.hbm_to_vmem [thread:$0]  %s1, 256, %s310, [#allocation3], 128, 128, 8
        $region16: #{tpu_custom_call.1} parent=11 // pred_fallthru
          _
        // Predicated region
        $region17: #{tpu_custom_call.1} parent=11 // pred_check
          %p316 = pneg %p94
        $region18: #{tpu_custom_call.1} parent=11 // pred_check_branch
          %318 = sbr.rel (%p316) target = $region20
        $region19: #{tpu_custom_call.1} parent=11 // pred_region
          %s320 = ssub.s32 32, 32
          %321 = vsyncadd [#allocation6], %s320
          %s323 = sshll.u32 [#allocation5], 4
          %s324 = int_to_ptr.vmem [resolvable:$true] %s323
          %326 = dma.hbm_to_vmem [thread:$0]  %s2, 32, %s324, [#allocation6]
        $region20: #{tpu_custom_call.1} parent=11 // pred_fallthru
          _
        // Predicated region
        $region21: #{tpu_custom_call.1} parent=11 // pred_check
          %p327 = pneg %p115
        $region22: #{tpu_custom_call.1} parent=11 // pred_check_branch
          %329 = sbr.rel (%p327) target = $region24
        $region23: #{tpu_custom_call.1} parent=11 // pred_region
          %s331 = ssub.s32 2048, 2048
          %332 = vsyncadd [#allocation6], %s331
          %s333 = sshll.u32 [#allocation7], 4
          %s334 = int_to_ptr.vmem [resolvable:$true] %s333
          %339 = dma.hbm_to_vmem [thread:$0]  %s3, 2048, %s334, [#allocation6], 128, 128, 8
        $region24: #{tpu_custom_call.1} parent=11 // pred_fallthru
          _
        // Predicated region
        $region25: #{tpu_custom_call.1} parent=11 // pred_check
          %p340 = pneg %p136
        $region26: #{tpu_custom_call.1} parent=11 // pred_check_branch
          %342 = sbr.rel (%p340) target = $region28
        $region27: #{tpu_custom_call.1} parent=11 // pred_region
          %s344 = ssub.s32 32, 32
          %345 = vsyncadd [#allocation9], %s344
          %s347 = sshll.u32 [#allocation8], 4
          %s348 = int_to_ptr.vmem [resolvable:$true] %s347
          %350 = dma.hbm_to_vmem [thread:$0]  %s4, 32, %s348, [#allocation9]
        $region28: #{tpu_custom_call.1} parent=11 // pred_fallthru
          _
        // Predicated region
        $region29: #{tpu_custom_call.1} parent=11 // pred_check
          %p351 = pneg %p157
        $region30: #{tpu_custom_call.1} parent=11 // pred_check_branch
          %353 = sbr.rel (%p351) target = $region32
        $region31: #{tpu_custom_call.1} parent=11 // pred_region
          %s355 = ssub.s32 4096, 4096
          %356 = vsyncadd [#allocation9], %s355
          %s357 = sshll.u32 [#allocation10], 4
          %s358 = int_to_ptr.vmem [resolvable:$true] %s357
          %363 = dma.hbm_to_vmem [thread:$0]  %s5, 4096, %s358, [#allocation9], 256, 256, 16
        $region32: #{tpu_custom_call.1} parent=11 // pred_fallthru
          _
        // Predicated region
        $region33: #{tpu_custom_call.1} parent=11 // pred_check
          %p364 = pneg %p178
        $region34: #{tpu_custom_call.1} parent=11 // pred_check_branch
          %366 = sbr.rel (%p364) target = $region36
        $region35: #{tpu_custom_call.1} parent=11 // pred_region
          %s368 = ssub.s32 64, 64
          %369 = vsyncadd [#allocation12], %s368
          %s371 = sshll.u32 [#allocation11], 4
          %s372 = int_to_ptr.vmem [resolvable:$true] %s371
          %374 = dma.hbm_to_vmem [thread:$0]  %s6, 64, %s372, [#allocation12]
        $region36: #{tpu_custom_call.1} parent=11 // pred_fallthru
          _
        // Predicated region
        $region37: #{tpu_custom_call.1} parent=11 // pred_check
          %p375 = pneg %p199
        $region38: #{tpu_custom_call.1} parent=11 // pred_check_branch
          %377 = sbr.rel (%p375) target = $region40
        $region39: #{tpu_custom_call.1} parent=11 // pred_region
          %s379 = ssub.s32 16384, 16384
          %380 = vsyncadd [#allocation12], %s379
          %s381 = sshll.u32 [#allocation13], 4
          %s382 = int_to_ptr.vmem [resolvable:$true] %s381
          %387 = dma.hbm_to_vmem [thread:$0]  %s7, 16384, %s382, [#allocation12], 512, 512, 32
        $region40: #{tpu_custom_call.1} parent=11 // pred_fallthru
          _
        // Predicated region
        $region41: #{tpu_custom_call.1} parent=11 // pred_check
          %p388 = pneg %p220
        $region42: #{tpu_custom_call.1} parent=11 // pred_check_branch
          %390 = sbr.rel (%p388) target = $region44
        $region43: #{tpu_custom_call.1} parent=11 // pred_region
          %s392 = ssub.s32 128, 128
          %393 = vsyncadd [#allocation15], %s392
          %s395 = sshll.u32 [#allocation14], 4
          %s396 = int_to_ptr.vmem [resolvable:$true] %s395
          %398 = dma.hbm_to_vmem [thread:$0]  %s8, 128, %s396, [#allocation15]
        $region44: #{tpu_custom_call.1} parent=11 // pred_fallthru
          _
        // Predicated region
        $region45: #{tpu_custom_call.1} parent=11 // pred_check
          %p399 = pneg %p241
        $region46: #{tpu_custom_call.1} parent=11 // pred_check_branch
          %401 = sbr.rel (%p399) target = $region48
        $region47: #{tpu_custom_call.1} parent=11 // pred_region
          %s403 = ssub.s32 57344, 57344
          %404 = vsyncadd [#allocation15], %s403
          %s405 = sshll.u32 [#allocation16], 4
          %s406 = int_to_ptr.vmem [resolvable:$true] %s405
          %411 = dma.hbm_to_vmem [thread:$0]  %s9, 57344, %s406, [#allocation15], 896, 896, 56
        $region48: #{tpu_custom_call.1} parent=11 // pred_fallthru
          _
        // Predicated region
        $region49: #{tpu_custom_call.1} parent=11 // pred_check
          %p412 = pneg %p262
        $region50: #{tpu_custom_call.1} parent=11 // pred_check_branch
          %414 = sbr.rel (%p412) target = $region52
        $region51: #{tpu_custom_call.1} parent=11 // pred_region
          %s416 = ssub.s32 112, 112
          %417 = vsyncadd [#allocation18], %s416
          %s419 = sshll.u32 [#allocation17], 4
          %s420 = int_to_ptr.vmem [resolvable:$true] %s419
          %422 = dma.hbm_to_vmem [thread:$0]  %s10, 112, %s420, [#allocation18]
        $region52: #{tpu_custom_call.1} parent=11 // pred_fallthru
          _
      $region12: #{tpu_custom_call.1} parent=5 // pred_fallthru
        _
      %p423 = scmp.lt.s32.totalorder %s26, 2
      // Predicated region
      $region53: #{tpu_custom_call.1} parent=5 // pred_check
        %p424 = pneg %p423
      $region54: #{tpu_custom_call.1} parent=5 // pred_check_branch
        %426 = sbr.rel (%p424) target = $region56
      $region55: #{tpu_custom_call.1} parent=5 // pred_region
        // Predicated region
        $region57: #{tpu_custom_call.1} parent=55 // pred_check
          %p427 = pneg %p46
        $region58: #{tpu_custom_call.1} parent=55 // pred_check_branch
          %429 = sbr.rel (%p427) target = $region60
        $region59: #{tpu_custom_call.1} parent=55 // pred_region
          %p430 = scmp.lt.s32.totalorder %s26, 1
          %s431 = scalar_select %p430, %s26, 1
          %s432 = smul.addr %s431, 16
          %s433 = smul.addr %s432, 8
          %s434 = scalar_lea.vmem %s0, %s433
        $region60: #{tpu_custom_call.1} parent=55 // pred_fallthru
          _
      $region56: #{tpu_custom_call.1} parent=5 // pred_fallthru
        _
      %p435 = scmp.le.s32.totalorder 1, %s26
      %p436 = scmp.lt.s32.totalorder %s26, 3
      %p437 = pnand %p435, %p436
      %p438 = pneg %p437
      // Predicated region
      $region61: #{tpu_custom_call.1} parent=5 // pred_check
        _
      $region62: #{tpu_custom_call.1} parent=5 // pred_check_branch
        %440 = sbr.rel (%p437) target = $region64
      $region63: #{tpu_custom_call.1} parent=5 // pred_region
        %s441 = ssub.s32 %s26, 1
        // Predicated region
        $region65: #{tpu_custom_call.1} parent=63 // pred_check
          %p442 = pneg %p73
        $region66: #{tpu_custom_call.1} parent=63 // pred_check_branch
          %444 = sbr.rel (%p442) target = $region68
        $region67: #{tpu_custom_call.1} parent=63 // pred_region
          %445 = dma.done [#allocation3], 256
        $region68: #{tpu_custom_call.1} parent=63 // pred_fallthru
          _
        // Predicated region
        $region69: #{tpu_custom_call.1} parent=63 // pred_check
          %p446 = pneg %p94
        $region70: #{tpu_custom_call.1} parent=63 // pred_check_branch
          %448 = sbr.rel (%p446) target = $region72
        $region71: #{tpu_custom_call.1} parent=63 // pred_region
          %449 = dma.done [#allocation6], 32
        $region72: #{tpu_custom_call.1} parent=63 // pred_fallthru
          _
        // Predicated region
        $region73: #{tpu_custom_call.1} parent=63 // pred_check
          %p450 = pneg %p115
        $region74: #{tpu_custom_call.1} parent=63 // pred_check_branch
          %452 = sbr.rel (%p450) target = $region76
        $region75: #{tpu_custom_call.1} parent=63 // pred_region
          %453 = dma.done [#allocation6], 2048
        $region76: #{tpu_custom_call.1} parent=63 // pred_fallthru
          _
        // Predicated region
        $region77: #{tpu_custom_call.1} parent=63 // pred_check
          %p454 = pneg %p136
        $region78: #{tpu_custom_call.1} parent=63 // pred_check_branch
          %456 = sbr.rel (%p454) target = $region80
        $region79: #{tpu_custom_call.1} parent=63 // pred_region
          %457 = dma.done [#allocation9], 32
        $region80: #{tpu_custom_call.1} parent=63 // pred_fallthru
          _
        // Predicated region
        $region81: #{tpu_custom_call.1} parent=63 // pred_check
          %p458 = pneg %p157
        $region82: #{tpu_custom_call.1} parent=63 // pred_check_branch
          %460 = sbr.rel (%p458) target = $region84
        $region83: #{tpu_custom_call.1} parent=63 // pred_region
          %461 = dma.done [#allocation9], 4096
        $region84: #{tpu_custom_call.1} parent=63 // pred_fallthru
          _
        // Predicated region
        $region85: #{tpu_custom_call.1} parent=63 // pred_check
          %p462 = pneg %p178
        $region86: #{tpu_custom_call.1} parent=63 // pred_check_branch
          %464 = sbr.rel (%p462) target = $region88
        $region87: #{tpu_custom_call.1} parent=63 // pred_region
          %465 = dma.done [#allocation12], 64
        $region88: #{tpu_custom_call.1} parent=63 // pred_fallthru
          _
        // Predicated region
        $region89: #{tpu_custom_call.1} parent=63 // pred_check
          %p466 = pneg %p199
        $region90: #{tpu_custom_call.1} parent=63 // pred_check_branch
          %468 = sbr.rel (%p466) target = $region92
        $region91: #{tpu_custom_call.1} parent=63 // pred_region
          %469 = dma.done [#allocation12], 16384
        $region92: #{tpu_custom_call.1} parent=63 // pred_fallthru
          _
        // Predicated region
        $region93: #{tpu_custom_call.1} parent=63 // pred_check
          %p470 = pneg %p220
        $region94: #{tpu_custom_call.1} parent=63 // pred_check_branch
          %472 = sbr.rel (%p470) target = $region96
        $region95: #{tpu_custom_call.1} parent=63 // pred_region
          %473 = dma.done [#allocation15], 128
        $region96: #{tpu_custom_call.1} parent=63 // pred_fallthru
          _
        // Predicated region
        $region97: #{tpu_custom_call.1} parent=63 // pred_check
          %p474 = pneg %p241
        $region98: #{tpu_custom_call.1} parent=63 // pred_check_branch
          %476 = sbr.rel (%p474) target = $region100
        $region99: #{tpu_custom_call.1} parent=63 // pred_region
          %477 = dma.done [#allocation15], 57344
        $region100: #{tpu_custom_call.1} parent=63 // pred_fallthru
          _
        // Predicated region
        $region101: #{tpu_custom_call.1} parent=63 // pred_check
          %p478 = pneg %p262
        $region102: #{tpu_custom_call.1} parent=63 // pred_check_branch
          %480 = sbr.rel (%p478) target = $region104
        $region103: #{tpu_custom_call.1} parent=63 // pred_region
          %481 = dma.done [#allocation18], 112
        $region104: #{tpu_custom_call.1} parent=63 // pred_fallthru
          _
        %p482 = scmp.lt.s32.totalorder %s31, 1
        %s483 = scalar_select %p482, %s31, 1
        %s484 = smul.addr %s483, 16
        %s485 = smul.addr %s484, 8
        %s486 = scalar_lea.vmem %s0, %s485
        %p487 = pneg %p52
        %p488 = pneg %p49
        %p489 = pneg %p73
        %p490 = pneg %p70
        %p491 = pneg %p94
        %p492 = pneg %p91
        %p493 = pneg %p115
        %p494 = pneg %p112
        %p495 = pneg %p136
        %p496 = pneg %p133
        %p497 = pneg %p157
        %p498 = pneg %p154
        %p499 = pneg %p178
        %p500 = pneg %p175
        %p501 = pneg %p199
        %p502 = pneg %p196
        %p503 = pneg %p220
        %p504 = pneg %p217
        %p505 = pneg %p241
        %p506 = pneg %p238
        %p507 = pneg %p262
        %p508 = pneg %p259
        %p509 = pneg %p288
        %p510 = pneg %p285
        %s511 = sand.u32 %s275, 1
        %s512 = scalar_lea.sflag [#allocation4], %s511
        %s513 = sand.u32 %s275, 1
        %s514 = smul.addr %s513, 896
        %s515 = scalar_lea.vmem [#allocation19], %s514
        %p516 = scmp.lt.s32.totalorder %s31, 1
        %s517 = scalar_select %p516, %s31, 1
        %s518 = smul.addr %s517, 16
        %s519 = smul.addr %s518, 8
        %s520 = scalar_lea.vmem %s0, %s519
        %v521 = vld [vmem:[%s520] sm:$0xff]
        %v522 = vld [vmem:[%s520 + $0x8] sm:$0xff]
        %v523 = vld [vmem:[%s520 + $0x10] sm:$0xff]
        %v524 = vld [vmem:[%s520 + $0x18] sm:$0xff]
        %v525 = vld [vmem:[%s520 + $0x20] sm:$0xff]
        %v526 = vld [vmem:[%s520 + $0x28] sm:$0xff]
        %v527 = vld [vmem:[%s520 + $0x30] sm:$0xff]
        %v528 = vld [vmem:[%s520 + $0x38] sm:$0xff]
        %v529 = vld [vmem:[%s520 + $0x40] sm:$0xff]
        %v530 = vld [vmem:[%s520 + $0x48] sm:$0xff]
        %v531 = vld [vmem:[%s520 + $0x50] sm:$0xff]
        %v532 = vld [vmem:[%s520 + $0x58] sm:$0xff]
        %v533 = vld [vmem:[%s520 + $0x60] sm:$0xff]
        %v534 = vld [vmem:[%s520 + $0x68] sm:$0xff]
        %v535 = vld [vmem:[%s520 + $0x70] sm:$0xff]
        %v536 = vld [vmem:[%s520 + $0x78] sm:$0xff]
        %v537 = vld [vmem:[#allocation2] sm:$0xff]
        %v538 = vld [vmem:[#allocation2 + $0x8] sm:$0x3]
        %vm539 = vcmask 80896
        %v541 = vsel %vm539, %v521, 0
        %v544 = vsel %vm539, %v522, 0
        %v547 = vsel %vm539, %v523, 0
        %v550 = vsel %vm539, %v524, 0
        %v553 = vsel %vm539, %v525, 0
        %v556 = vsel %vm539, %v526, 0
        %v559 = vsel %vm539, %v527, 0
        %v562 = vsel %vm539, %v528, 0
        %v565 = vsel %vm539, %v529, 0
        %v568 = vsel %vm539, %v530, 0
        %v571 = vsel %vm539, %v531, 0
        %v574 = vsel %vm539, %v532, 0
        %v577 = vsel %vm539, %v533, 0
        %v580 = vsel %vm539, %v534, 0
        %v583 = vsel %vm539, %v535, 0
        %v586 = vsel %vm539, %v536, 0
        %vm588 = vcmask 1041408
        %v590 = vsel %vm588, %v538, 0
        %592 = vmatprep.subr.mxu0 0.0
        %593 = vmatpush1.msra.mxu0 %v537
        %594 = vmatprep.subr.mxu0 0.0
        %595 = vmatpush1.msra.mxu0 %v590
        %596 = vmatprep.subr.mxu0 0.0
        %597 = vmatpush1.msra.mxu0 0.0
        %598 = vmatprep.subr.mxu0 0.0
        %599 = vmatpush1.msra.mxu0 0.0
        %600 = vmatprep.subr.mxu0 0.0
        %601 = vmatpush1.msra.mxu0 0.0
        %602 = vmatprep.subr.mxu0 0.0
        %603 = vmatpush1.msra.mxu0 0.0
        %604 = vmatprep.subr.mxu0 0.0
        %605 = vmatpush1.msra.mxu0 0.0
        %606 = vmatprep.subr.mxu0 0.0
        %607 = vmatpush1.msra.mxu0 0.0
        %608 = vmatprep.subr.mxu0 0.0
        %609 = vmatpush1.msra.mxu0 0.0
        %610 = vmatprep.subr.mxu0 0.0
        %611 = vmatpush1.msra.mxu0 0.0
        %612 = vmatprep.subr.mxu0 0.0
        %613 = vmatpush1.msra.mxu0 0.0
        %614 = vmatprep.subr.mxu0 0.0
        %615 = vmatpush1.msra.mxu0 0.0
        %616 = vmatprep.subr.mxu0 0.0
        %617 = vmatpush1.msra.mxu0 0.0
        %618 = vmatprep.subr.mxu0 0.0
        %619 = vmatpush1.msra.mxu0 0.0
        %620 = vmatprep.subr.mxu0 0.0
        %621 = vmatpush1.msra.mxu0 0.0
        %622 = vmatprep.subr.mxu0 0.0
        %623 = vmatpush1.msra.mxu0 0.0
        %624 = vmatprep.subr.mxu0 0.0
        %625 = vmatpush1.msra.mxu0 0.0
        %626 = vmatprep.subr.mxu0 0.0
        %627 = vmatpush1.msra.mxu0 0.0
        %628 = vmatprep.subr.mxu0 0.0
        %629 = vmatpush1.msra.mxu0 0.0
        %630 = vmatprep.subr.mxu0 0.0
        %631 = vmatpush1.msra.mxu0 0.0
        %632 = vmatprep.subr.mxu0 0.0
        %633 = vmatpush1.msra.mxu0 0.0
        %634 = vmatprep.subr.mxu0 0.0
        %635 = vmatpush1.msra.mxu0 0.0
        %636 = vmatprep.subr.mxu0 0.0
        %637 = vmatpush1.msra.mxu0 0.0
        %638 = vmatprep.subr.mxu0 0.0
        %639 = vmatpush1.msra.mxu0 0.0
        %640 = vmatprep.subr.mxu0 0.0
        %641 = vmatpush1.msra.mxu0 0.0
        %642 = vmatprep.subr.mxu0 0.0
        %643 = vmatpush1.msra.mxu0 0.0
        %644 = vmatprep.subr.mxu0 0.0
        %645 = vmatpush1.msra.mxu0 0.0
        %646 = vmatprep.subr.mxu0 0.0
        %647 = vmatpush1.msra.mxu0 0.0
        %648 = vmatprep.subr.mxu0 0.0
        %649 = vmatpush1.msra.mxu0 0.0
        %650 = vmatprep.subr.mxu0 0.0
        %651 = vmatpush1.msra.mxu0 0.0
        %652 = vmatprep.subr.mxu0 0.0
        %653 = vmatpush1.msra.mxu0 0.0
        %654 = vmatprep.subr.mxu0 0.0
        %655 = vmatpush1.msra.mxu0 0.0
        %656 = vmatprep.mubr.f32.mxu0 0.0
        %657 = vmatmul.mubr.f32.gmra.mrb[0].mxu0 %v541
        %v658 = vpop.f32.mrb[0].mxu0
        %v659 = vadd.f32 0.0, %v658
        %v660 = vpop.f32.mrb[0].mxu0
        %661 = vmatprep.mubr.f32.mxu0 0.0
        %662 = vmatmul.mubr.f32.gmra.mrb[0].mxu0 %v544
        %v663 = vpop.f32.mrb[0].mxu0
        %v664 = vadd.f32 0.0, %v663
        %v665 = vpop.f32.mrb[0].mxu0
        %666 = vmatprep.mubr.f32.mxu0 0.0
        %667 = vmatmul.mubr.f32.gmra.mrb[0].mxu0 %v547
        %v668 = vpop.f32.mrb[0].mxu0
        %v669 = vadd.f32 0.0, %v668
        %v670 = vpop.f32.mrb[0].mxu0
        %671 = vmatprep.mubr.f32.mxu0 0.0
        %672 = vmatmul.mubr.f32.gmra.mrb[0].mxu0 %v550
        %v673 = vpop.f32.mrb[0].mxu0
        %v674 = vadd.f32 0.0, %v673
        %v675 = vpop.f32.mrb[0].mxu0
        %676 = vmatprep.mubr.f32.mxu0 0.0
        %677 = vmatmul.mubr.f32.gmra.mrb[0].mxu0 %v553
        %v678 = vpop.f32.mrb[0].mxu0
        %v679 = vadd.f32 0.0, %v678
        %v680 = vpop.f32.mrb[0].mxu0
        %681 = vmatprep.mubr.f32.mxu0 0.0
        %682 = vmatmul.mubr.f32.gmra.mrb[0].mxu0 %v556
        %v683 = vpop.f32.mrb[0].mxu0
        %v684 = vadd.f32 0.0, %v683
        %v685 = vpop.f32.mrb[0].mxu0
        %686 = vmatprep.mubr.f32.mxu0 0.0
        %687 = vmatmul.mubr.f32.gmra.mrb[0].mxu0 %v559
        %v688 = vpop.f32.mrb[0].mxu0
        %v689 = vadd.f32 0.0, %v688
        %v690 = vpop.f32.mrb[0].mxu0
        %691 = vmatprep.mubr.f32.mxu0 0.0
        %692 = vmatmul.mubr.f32.gmra.mrb[0].mxu0 %v562
        %v693 = vpop.f32.mrb[0].mxu0
        %v694 = vadd.f32 0.0, %v693
        %v695 = vpop.f32.mrb[0].mxu0
        %696 = vmatprep.mubr.f32.mxu0 0.0
        %697 = vmatmul.mubr.f32.gmra.mrb[0].mxu0 %v565
        %v698 = vpop.f32.mrb[0].mxu0
        %v699 = vadd.f32 0.0, %v698
        %v700 = vpop.f32.mrb[0].mxu0
        %701 = vmatprep.mubr.f32.mxu0 0.0
        %702 = vmatmul.mubr.f32.gmra.mrb[0].mxu0 %v568
        %v703 = vpop.f32.mrb[0].mxu0
        %v704 = vadd.f32 0.0, %v703
        %v705 = vpop.f32.mrb[0].mxu0
        %706 = vmatprep.mubr.f32.mxu0 0.0
        %707 = vmatmul.mubr.f32.gmra.mrb[0].mxu0 %v571
        %v708 = vpop.f32.mrb[0].mxu0
        %v709 = vadd.f32 0.0, %v708
        %v710 = vpop.f32.mrb[0].mxu0
        %711 = vmatprep.mubr.f32.mxu0 0.0
        %712 = vmatmul.mubr.f32.gmra.mrb[0].mxu0 %v574
        %v713 = vpop.f32.mrb[0].mxu0
        %v714 = vadd.f32 0.0, %v713
        %v715 = vpop.f32.mrb[0].mxu0
        %716 = vmatprep.mubr.f32.mxu0 0.0
        %717 = vmatmul.mubr.f32.gmra.mrb[0].mxu0 %v577
        %v718 = vpop.f32.mrb[0].mxu0
        %v719 = vadd.f32 0.0, %v718
        %v720 = vpop.f32.mrb[0].mxu0
        %721 = vmatprep.mubr.f32.mxu0 0.0
        %722 = vmatmul.mubr.f32.gmra.mrb[0].mxu0 %v580
        %v723 = vpop.f32.mrb[0].mxu0
        %v724 = vadd.f32 0.0, %v723
        %v725 = vpop.f32.mrb[0].mxu0
        %726 = vmatprep.mubr.f32.mxu0 0.0
        %727 = vmatmul.mubr.f32.gmra.mrb[0].mxu0 %v583
        %v728 = vpop.f32.mrb[0].mxu0
        %v729 = vadd.f32 0.0, %v728
        %v730 = vpop.f32.mrb[0].mxu0
        %731 = vmatprep.mubr.f32.mxu0 0.0
        %732 = vmatmul.mubr.f32.gmra.mrb[0].mxu0 %v586
        %v733 = vpop.f32.mrb[0].mxu0
        %v734 = vadd.f32 0.0, %v733
        %v735 = vpop.f32.mrb[0].mxu0
        %736 = vdwg.mxu0
        %v737 = vadd.f32 %v659, %v664
        %v738 = vadd.f32 %v737, %v669
        %v739 = vadd.f32 %v738, %v674
        %v740 = vadd.f32 %v739, %v679
        %v741 = vadd.f32 %v740, %v684
        %v742 = vadd.f32 %v741, %v689
        %v743 = vadd.f32 %v742, %v694
        %v744 = vadd.f32 %v743, %v699
        %v745 = vadd.f32 %v744, %v704
        %v746 = vadd.f32 %v745, %v709
        %v747 = vadd.f32 %v746, %v714
        %v748 = vadd.f32 %v747, %v719
        %v749 = vadd.f32 %v748, %v724
        %v750 = vadd.f32 %v749, %v729
        %v751 = vadd.f32 %v750, %v734
        %v752 = vrot.slane %v751, 4
        %v753 = vadd.f32 %v751, %v752
        %v754 = vrot.slane %v753, 2
        %v755 = vadd.f32 %v753, %v754
        %v756 = vrot.slane %v755, 1
        %v757 = vadd.f32 %v755, %v756
        %v758 = vmul.f32 %v757, 0.0078125
        %v759 = vmul.f32 %v659, %v659
        %v760 = vmul.f32 %v664, %v664
        %v761 = vmul.f32 %v669, %v669
        %v762 = vmul.f32 %v674, %v674
        %v763 = vmul.f32 %v679, %v679
        %v764 = vmul.f32 %v684, %v684
        %v765 = vmul.f32 %v689, %v689
        %v766 = vmul.f32 %v694, %v694
        %v767 = vmul.f32 %v699, %v699
        %v768 = vmul.f32 %v704, %v704
        %v769 = vmul.f32 %v709, %v709
        %v770 = vmul.f32 %v714, %v714
        %v771 = vmul.f32 %v719, %v719
        %v772 = vmul.f32 %v724, %v724
        %v773 = vmul.f32 %v729, %v729
        %v774 = vmul.f32 %v734, %v734
        %v775 = vadd.f32 %v759, %v760
        %v776 = vadd.f32 %v775, %v761
        %v777 = vadd.f32 %v776, %v762
        %v778 = vadd.f32 %v777, %v763
        %v779 = vadd.f32 %v778, %v764
        %v780 = vadd.f32 %v779, %v765
        %v781 = vadd.f32 %v780, %v766
        %v782 = vadd.f32 %v781, %v767
        %v783 = vadd.f32 %v782, %v768
        %v784 = vadd.f32 %v783, %v769
        %v785 = vadd.f32 %v784, %v770
        %v786 = vadd.f32 %v785, %v771
        %v787 = vadd.f32 %v786, %v772
        %v788 = vadd.f32 %v787, %v773
        %v789 = vadd.f32 %v788, %v774
        %v790 = vrot.slane %v789, 4
        %v791 = vadd.f32 %v789, %v790
        %v792 = vrot.slane %v791, 2
        %v793 = vadd.f32 %v791, %v792
        %v794 = vrot.slane %v793, 1
        %v795 = vadd.f32 %v793, %v794
        %v796 = vmul.f32 %v795, 0.0078125
        %v797 = vmul.f32 %v758, %v758
        %v798 = vsub.f32 %v796, %v797
        %v799 = vmax.f32 %v798, 0.0
        %v800 = vld [vmem:[#allocation5] sm:$0x1]
        %v801 = vld [vmem:[#allocation5 + $0x1] sm:$0x1]
        %v802 = vadd.f32 %v799, 1e-05
        %v803 = vrsqrt.pop %v802
        %v804 = vmul.f32 %v800, %v803
        %v805 = vmul.f32 %v758, %v804
        %v806 = vsub.f32 %v801, %v805
        %v807 = vlaneseq
        %v808 = vshrl.u32 %v807, 7
        %v809 = vsub.s32 0, %v808
        %v810 = vrot.slane %v804, %v809
        %v811 = vmul.f32 %v659, %v810
        %v812 = vmul.f32 %v664, %v810
        %v813 = vmul.f32 %v669, %v810
        %v814 = vmul.f32 %v674, %v810
        %v815 = vmul.f32 %v679, %v810
        %v816 = vmul.f32 %v684, %v810
        %v817 = vmul.f32 %v689, %v810
        %v818 = vmul.f32 %v694, %v810
        %v819 = vmul.f32 %v699, %v810
        %v820 = vmul.f32 %v704, %v810
        %v821 = vmul.f32 %v709, %v810
        %v822 = vmul.f32 %v714, %v810
        %v823 = vmul.f32 %v719, %v810
        %v824 = vmul.f32 %v724, %v810
        %v825 = vmul.f32 %v729, %v810
        %v826 = vmul.f32 %v734, %v810
        %v827 = vlaneseq
        %v828 = vshrl.u32 %v827, 7
        %v829 = vsub.s32 0, %v828
        %v830 = vrot.slane %v806, %v829
        %v831 = vadd.f32 %v811, %v830
        %v832 = vadd.f32 %v812, %v830
        %v833 = vadd.f32 %v813, %v830
        %v834 = vadd.f32 %v814, %v830
        %v835 = vadd.f32 %v815, %v830
        %v836 = vadd.f32 %v816, %v830
        %v837 = vadd.f32 %v817, %v830
        %v838 = vadd.f32 %v818, %v830
        %v839 = vadd.f32 %v819, %v830
        %v840 = vadd.f32 %v820, %v830
        %v841 = vadd.f32 %v821, %v830
        %v842 = vadd.f32 %v822, %v830
        %v843 = vadd.f32 %v823, %v830
        %v844 = vadd.f32 %v824, %v830
        %v845 = vadd.f32 %v825, %v830
        %v846 = vadd.f32 %v826, %v830
        %v847 = vmax.f32 %v831, 0.0
        %v848 = vmax.f32 %v832, 0.0
        %v849 = vmax.f32 %v833, 0.0
        %v850 = vmax.f32 %v834, 0.0
        %v851 = vmax.f32 %v835, 0.0
        %v852 = vmax.f32 %v836, 0.0
        %v853 = vmax.f32 %v837, 0.0
        %v854 = vmax.f32 %v838, 0.0
        %v855 = vmax.f32 %v839, 0.0
        %v856 = vmax.f32 %v840, 0.0
        %v857 = vmax.f32 %v841, 0.0
        %v858 = vmax.f32 %v842, 0.0
        %v859 = vmax.f32 %v843, 0.0
        %v860 = vmax.f32 %v844, 0.0
        %v861 = vmax.f32 %v845, 0.0
        %v862 = vmax.f32 %v846, 0.0
        %v863 = vld [vmem:[#allocation7] sm:$0xff]
        %v864 = vld [vmem:[#allocation7 + $0x8] sm:$0xff]
        %v865 = vld [vmem:[#allocation7 + $0x10] sm:$0xff]
        %v866 = vld [vmem:[#allocation7 + $0x18] sm:$0xff]
        %v867 = vld [vmem:[#allocation7 + $0x20] sm:$0xff]
        %v868 = vld [vmem:[#allocation7 + $0x28] sm:$0xff]
        %v869 = vld [vmem:[#allocation7 + $0x30] sm:$0xff]
        %v870 = vld [vmem:[#allocation7 + $0x38] sm:$0xff]
        %v871 = vld [vmem:[#allocation7 + $0x40] sm:$0xff]
        %v872 = vld [vmem:[#allocation7 + $0x48] sm:$0xff]
        %v873 = vld [vmem:[#allocation7 + $0x50] sm:$0xff]
        %v874 = vld [vmem:[#allocation7 + $0x58] sm:$0xff]
        %v875 = vld [vmem:[#allocation7 + $0x60] sm:$0xff]
        %v876 = vld [vmem:[#allocation7 + $0x68] sm:$0xff]
        %v877 = vld [vmem:[#allocation7 + $0x70] sm:$0xff]
        %v878 = vld [vmem:[#allocation7 + $0x78] sm:$0xff]
        %879 = vmatprep.subr.mxu0 0.0
        %880 = vmatpush1.msra.mxu0 %v863
        %881 = vmatprep.subr.mxu0 0.0
        %882 = vmatpush1.msra.mxu0 %v864
        %883 = vmatprep.subr.mxu0 0.0
        %884 = vmatpush1.msra.mxu0 %v865
        %885 = vmatprep.subr.mxu0 0.0
        %886 = vmatpush1.msra.mxu0 %v866
        %887 = vmatprep.subr.mxu0 0.0
        %888 = vmatpush1.msra.mxu0 %v867
        %889 = vmatprep.subr.mxu0 0.0
        %890 = vmatpush1.msra.mxu0 %v868
        %891 = vmatprep.subr.mxu0 0.0
        %892 = vmatpush1.msra.mxu0 %v869
        %893 = vmatprep.subr.mxu0 0.0
        %894 = vmatpush1.msra.mxu0 %v870
        %895 = vmatprep.subr.mxu0 0.0
        %896 = vmatpush1.msra.mxu0 %v871
        %897 = vmatprep.subr.mxu0 0.0
        %898 = vmatpush1.msra.mxu0 %v872
        %899 = vmatprep.subr.mxu0 0.0
        %900 = vmatpush1.msra.mxu0 %v873
        %901 = vmatprep.subr.mxu0 0.0
        %902 = vmatpush1.msra.mxu0 %v874
        %903 = vmatprep.subr.mxu0 0.0
        %904 = vmatpush1.msra.mxu0 %v875
        %905 = vmatprep.subr.mxu0 0.0
        %906 = vmatpush1.msra.mxu0 %v876
        %907 = vmatprep.subr.mxu0 0.0
        %908 = vmatpush1.msra.mxu0 %v877
        %909 = vmatprep.subr.mxu0 0.0
        %910 = vmatpush1.msra.mxu0 %v878
        %911 = vmatprep.subr.mxu0 0.0
        %912 = vmatpush1.msra.mxu0 0.0
        %913 = vmatprep.subr.mxu0 0.0
        %914 = vmatpush1.msra.mxu0 0.0
        %915 = vmatprep.subr.mxu0 0.0
        %916 = vmatpush1.msra.mxu0 0.0
        %917 = vmatprep.subr.mxu0 0.0
        %918 = vmatpush1.msra.mxu0 0.0
        %919 = vmatprep.subr.mxu0 0.0
        %920 = vmatpush1.msra.mxu0 0.0
        %921 = vmatprep.subr.mxu0 0.0
        %922 = vmatpush1.msra.mxu0 0.0
        %923 = vmatprep.subr.mxu0 0.0
        %924 = vmatpush1.msra.mxu0 0.0
        %925 = vmatprep.subr.mxu0 0.0
        %926 = vmatpush1.msra.mxu0 0.0
        %927 = vmatprep.subr.mxu0 0.0
        %928 = vmatpush1.msra.mxu0 0.0
        %929 = vmatprep.subr.mxu0 0.0
        %930 = vmatpush1.msra.mxu0 0.0
        %931 = vmatprep.subr.mxu0 0.0
        %932 = vmatpush1.msra.mxu0 0.0
        %933 = vmatprep.subr.mxu0 0.0
        %934 = vmatpush1.msra.mxu0 0.0
        %935 = vmatprep.subr.mxu0 0.0
        %936 = vmatpush1.msra.mxu0 0.0
        %937 = vmatprep.subr.mxu0 0.0
        %938 = vmatpush1.msra.mxu0 0.0
        %939 = vmatprep.subr.mxu0 0.0
        %940 = vmatpush1.msra.mxu0 0.0
        %941 = vmatprep.subr.mxu0 0.0
        %942 = vmatpush1.msra.mxu0 0.0
        %943 = vmatprep.mubr.f32.mxu0 0.0
        %944 = vmatmul.mubr.f32.gmra.mrb[0].mxu0 %v847
        %v945 = vpop.f32.mrb[0].mxu0
        %v946 = vadd.f32 0.0, %v945
        %v947 = vpop.f32.mrb[0].mxu0
        %948 = vmatprep.mubr.f32.mxu0 0.0
        %949 = vmatmul.mubr.f32.gmra.mrb[0].mxu0 %v848
        %v950 = vpop.f32.mrb[0].mxu0
        %v951 = vadd.f32 0.0, %v950
        %v952 = vpop.f32.mrb[0].mxu0
        %953 = vmatprep.mubr.f32.mxu0 0.0
        %954 = vmatmul.mubr.f32.gmra.mrb[0].mxu0 %v849
        %v955 = vpop.f32.mrb[0].mxu0
        %v956 = vadd.f32 0.0, %v955
        %v957 = vpop.f32.mrb[0].mxu0
        %958 = vmatprep.mubr.f32.mxu0 0.0
        %959 = vmatmul.mubr.f32.gmra.mrb[0].mxu0 %v850
        %v960 = vpop.f32.mrb[0].mxu0
        %v961 = vadd.f32 0.0, %v960
        %v962 = vpop.f32.mrb[0].mxu0
        %963 = vmatprep.mubr.f32.mxu0 0.0
        %964 = vmatmul.mubr.f32.gmra.mrb[0].mxu0 %v851
        %v965 = vpop.f32.mrb[0].mxu0
        %v966 = vadd.f32 0.0, %v965
        %v967 = vpop.f32.mrb[0].mxu0
        %968 = vmatprep.mubr.f32.mxu0 0.0
        %969 = vmatmul.mubr.f32.gmra.mrb[0].mxu0 %v852
        %v970 = vpop.f32.mrb[0].mxu0
        %v971 = vadd.f32 0.0, %v970
        %v972 = vpop.f32.mrb[0].mxu0
        %973 = vmatprep.mubr.f32.mxu0 0.0
        %974 = vmatmul.mubr.f32.gmra.mrb[0].mxu0 %v853
        %v975 = vpop.f32.mrb[0].mxu0
        %v976 = vadd.f32 0.0, %v975
        %v977 = vpop.f32.mrb[0].mxu0
        %978 = vmatprep.mubr.f32.mxu0 0.0
        %979 = vmatmul.mubr.f32.gmra.mrb[0].mxu0 %v854
        %v980 = vpop.f32.mrb[0].mxu0
        %v981 = vadd.f32 0.0, %v980
        %v982 = vpop.f32.mrb[0].mxu0
        %983 = vmatprep.mubr.f32.mxu0 0.0
        %984 = vmatmul.mubr.f32.gmra.mrb[0].mxu0 %v855
        %v985 = vpop.f32.mrb[0].mxu0
        %v986 = vadd.f32 0.0, %v985
        %v987 = vpop.f32.mrb[0].mxu0
        %988 = vmatprep.mubr.f32.mxu0 0.0
        %989 = vmatmul.mubr.f32.gmra.mrb[0].mxu0 %v856
        %v990 = vpop.f32.mrb[0].mxu0
        %v991 = vadd.f32 0.0, %v990
        %v992 = vpop.f32.mrb[0].mxu0
        %993 = vmatprep.mubr.f32.mxu0 0.0
        %994 = vmatmul.mubr.f32.gmra.mrb[0].mxu0 %v857
        %v995 = vpop.f32.mrb[0].mxu0
        %v996 = vadd.f32 0.0, %v995
        %v997 = vpop.f32.mrb[0].mxu0
        %998 = vmatprep.mubr.f32.mxu0 0.0
        %999 = vmatmul.mubr.f32.gmra.mrb[0].mxu0 %v858
        %v1000 = vpop.f32.mrb[0].mxu0
        %v1001 = vadd.f32 0.0, %v1000
        %v1002 = vpop.f32.mrb[0].mxu0
        %1003 = vmatprep.mubr.f32.mxu0 0.0
        %1004 = vmatmul.mubr.f32.gmra.mrb[0].mxu0 %v859
        %v1005 = vpop.f32.mrb[0].mxu0
        %v1006 = vadd.f32 0.0, %v1005
        %v1007 = vpop.f32.mrb[0].mxu0
        %1008 = vmatprep.mubr.f32.mxu0 0.0
        %1009 = vmatmul.mubr.f32.gmra.mrb[0].mxu0 %v860
        %v1010 = vpop.f32.mrb[0].mxu0
        %v1011 = vadd.f32 0.0, %v1010
        %v1012 = vpop.f32.mrb[0].mxu0
        %1013 = vmatprep.mubr.f32.mxu0 0.0
        %1014 = vmatmul.mubr.f32.gmra.mrb[0].mxu0 %v861
        %v1015 = vpop.f32.mrb[0].mxu0
        %v1016 = vadd.f32 0.0, %v1015
        %v1017 = vpop.f32.mrb[0].mxu0
        %1018 = vmatprep.mubr.f32.mxu0 0.0
        %1019 = vmatmul.mubr.f32.gmra.mrb[0].mxu0 %v862
        %v1020 = vpop.f32.mrb[0].mxu0
        %v1021 = vadd.f32 0.0, %v1020
        %v1022 = vpop.f32.mrb[0].mxu0
        %1023 = vdwg.mxu0
        %v1024 = vadd.f32 %v946, %v951
        %v1025 = vadd.f32 %v1024, %v956
        %v1026 = vadd.f32 %v1025, %v961
        %v1027 = vadd.f32 %v1026, %v966
        %v1028 = vadd.f32 %v1027, %v971
        %v1029 = vadd.f32 %v1028, %v976
        %v1030 = vadd.f32 %v1029, %v981
        %v1031 = vadd.f32 %v1030, %v986
        %v1032 = vadd.f32 %v1031, %v991
        %v1033 = vadd.f32 %v1032, %v996
        %v1034 = vadd.f32 %v1033, %v1001
        %v1035 = vadd.f32 %v1034, %v1006
        %v1036 = vadd.f32 %v1035, %v1011
        %v1037 = vadd.f32 %v1036, %v1016
        %v1038 = vadd.f32 %v1037, %v1021
        %v1039 = vrot.slane %v1038, 4
        %v1040 = vadd.f32 %v1038, %v1039
        %v1041 = vrot.slane %v1040, 2
        %v1042 = vadd.f32 %v1040, %v1041
        %v1043 = vrot.slane %v1042, 1
        %v1044 = vadd.f32 %v1042, %v1043
        %v1045 = vmul.f32 %v1044, 0.0078125
        %v1046 = vmul.f32 %v946, %v946
        %v1047 = vmul.f32 %v951, %v951
        %v1048 = vmul.f32 %v956, %v956
        %v1049 = vmul.f32 %v961, %v961
        %v1050 = vmul.f32 %v966, %v966
        %v1051 = vmul.f32 %v971, %v971
        %v1052 = vmul.f32 %v976, %v976
        %v1053 = vmul.f32 %v981, %v981
        %v1054 = vmul.f32 %v986, %v986
        %v1055 = vmul.f32 %v991, %v991
        %v1056 = vmul.f32 %v996, %v996
        %v1057 = vmul.f32 %v1001, %v1001
        %v1058 = vmul.f32 %v1006, %v1006
        %v1059 = vmul.f32 %v1011, %v1011
        %v1060 = vmul.f32 %v1016, %v1016
        %v1061 = vmul.f32 %v1021, %v1021
        %v1062 = vadd.f32 %v1046, %v1047
        %v1063 = vadd.f32 %v1062, %v1048
        %v1064 = vadd.f32 %v1063, %v1049
        %v1065 = vadd.f32 %v1064, %v1050
        %v1066 = vadd.f32 %v1065, %v1051
        %v1067 = vadd.f32 %v1066, %v1052
        %v1068 = vadd.f32 %v1067, %v1053
        %v1069 = vadd.f32 %v1068, %v1054
        %v1070 = vadd.f32 %v1069, %v1055
        %v1071 = vadd.f32 %v1070, %v1056
        %v1072 = vadd.f32 %v1071, %v1057
        %v1073 = vadd.f32 %v1072, %v1058
        %v1074 = vadd.f32 %v1073, %v1059
        %v1075 = vadd.f32 %v1074, %v1060
        %v1076 = vadd.f32 %v1075, %v1061
        %v1077 = vrot.slane %v1076, 4
        %v1078 = vadd.f32 %v1076, %v1077
        %v1079 = vrot.slane %v1078, 2
        %v1080 = vadd.f32 %v1078, %v1079
        %v1081 = vrot.slane %v1080, 1
        %v1082 = vadd.f32 %v1080, %v1081
        %v1083 = vmul.f32 %v1082, 0.0078125
        %v1084 = vmul.f32 %v1045, %v1045
        %v1085 = vsub.f32 %v1083, %v1084
        %v1086 = vmax.f32 %v1085, 0.0
        %v1087 = vld [vmem:[#allocation8] sm:$0x1]
        %v1088 = vld [vmem:[#allocation8 + $0x1] sm:$0x1]
        %v1089 = vadd.f32 %v1086, 1e-05
        %v1090 = vrsqrt.pop %v1089
        %v1091 = vmul.f32 %v1087, %v1090
        %v1092 = vmul.f32 %v1045, %v1091
        %v1093 = vsub.f32 %v1088, %v1092
        %v1094 = vlaneseq
        %v1095 = vshrl.u32 %v1094, 7
        %v1096 = vsub.s32 0, %v1095
        %v1097 = vrot.slane %v1091, %v1096
        %v1098 = vmul.f32 %v946, %v1097
        %v1099 = vmul.f32 %v951, %v1097
        %v1100 = vmul.f32 %v956, %v1097
        %v1101 = vmul.f32 %v961, %v1097
        %v1102 = vmul.f32 %v966, %v1097
        %v1103 = vmul.f32 %v971, %v1097
        %v1104 = vmul.f32 %v976, %v1097
        %v1105 = vmul.f32 %v981, %v1097
        %v1106 = vmul.f32 %v986, %v1097
        %v1107 = vmul.f32 %v991, %v1097
        %v1108 = vmul.f32 %v996, %v1097
        %v1109 = vmul.f32 %v1001, %v1097
        %v1110 = vmul.f32 %v1006, %v1097
        %v1111 = vmul.f32 %v1011, %v1097
        %v1112 = vmul.f32 %v1016, %v1097
        %v1113 = vmul.f32 %v1021, %v1097
        %v1114 = vlaneseq
        %v1115 = vshrl.u32 %v1114, 7
        %v1116 = vsub.s32 0, %v1115
        %v1117 = vrot.slane %v1093, %v1116
        %v1118 = vadd.f32 %v1098, %v1117
        %v1119 = vadd.f32 %v1099, %v1117
        %v1120 = vadd.f32 %v1100, %v1117
        %v1121 = vadd.f32 %v1101, %v1117
        %v1122 = vadd.f32 %v1102, %v1117
        %v1123 = vadd.f32 %v1103, %v1117
        %v1124 = vadd.f32 %v1104, %v1117
        %v1125 = vadd.f32 %v1105, %v1117
        %v1126 = vadd.f32 %v1106, %v1117
        %v1127 = vadd.f32 %v1107, %v1117
        %v1128 = vadd.f32 %v1108, %v1117
        %v1129 = vadd.f32 %v1109, %v1117
        %v1130 = vadd.f32 %v1110, %v1117
        %v1131 = vadd.f32 %v1111, %v1117
        %v1132 = vadd.f32 %v1112, %v1117
        %v1133 = vadd.f32 %v1113, %v1117
        %v1134 = vmax.f32 %v1118, 0.0
        %v1135 = vmax.f32 %v1119, 0.0
        %v1136 = vmax.f32 %v1120, 0.0
        %v1137 = vmax.f32 %v1121, 0.0
        %v1138 = vmax.f32 %v1122, 0.0
        %v1139 = vmax.f32 %v1123, 0.0
        %v1140 = vmax.f32 %v1124, 0.0
        %v1141 = vmax.f32 %v1125, 0.0
        %v1142 = vmax.f32 %v1126, 0.0
        %v1143 = vmax.f32 %v1127, 0.0
        %v1144 = vmax.f32 %v1128, 0.0
        %v1145 = vmax.f32 %v1129, 0.0
        %v1146 = vmax.f32 %v1130, 0.0
        %v1147 = vmax.f32 %v1131, 0.0
        %v1148 = vmax.f32 %v1132, 0.0
        %v1149 = vmax.f32 %v1133, 0.0
        %v1150 = vld [vmem:[#allocation10] sm:$0xff]
        %v1151 = vld [vmem:[#allocation10 + $0x8] sm:$0xff]
        %v1152 = vld [vmem:[#allocation10 + $0x10] sm:$0xff]
        %v1153 = vld [vmem:[#allocation10 + $0x18] sm:$0xff]
        %v1154 = vld [vmem:[#allocation10 + $0x20] sm:$0xff]
        %v1155 = vld [vmem:[#allocation10 + $0x28] sm:$0xff]
        %v1156 = vld [vmem:[#allocation10 + $0x30] sm:$0xff]
        %v1157 = vld [vmem:[#allocation10 + $0x38] sm:$0xff]
        %v1158 = vld [vmem:[#allocation10 + $0x40] sm:$0xff]
        %v1159 = vld [vmem:[#allocation10 + $0x48] sm:$0xff]
        %v1160 = vld [vmem:[#allocation10 + $0x50] sm:$0xff]
        %v1161 = vld [vmem:[#allocation10 + $0x58] sm:$0xff]
        %v1162 = vld [vmem:[#allocation10 + $0x60] sm:$0xff]
        %v1163 = vld [vmem:[#allocation10 + $0x68] sm:$0xff]
        %v1164 = vld [vmem:[#allocation10 + $0x70] sm:$0xff]
        %v1165 = vld [vmem:[#allocation10 + $0x78] sm:$0xff]
        %v1166 = vld [vmem:[#allocation10 + $0x80] sm:$0xff]
        %v1167 = vld [vmem:[#allocation10 + $0x88] sm:$0xff]
        %v1168 = vld [vmem:[#allocation10 + $0x90] sm:$0xff]
        %v1169 = vld [vmem:[#allocation10 + $0x98] sm:$0xff]
        %v1170 = vld [vmem:[#allocation10 + $0xa0] sm:$0xff]
        %v1171 = vld [vmem:[#allocation10 + $0xa8] sm:$0xff]
        %v1172 = vld [vmem:[#allocation10 + $0xb0] sm:$0xff]
        %v1173 = vld [vmem:[#allocation10 + $0xb8] sm:$0xff]
        %v1174 = vld [vmem:[#allocation10 + $0xc0] sm:$0xff]
        %v1175 = vld [vmem:[#allocation10 + $0xc8] sm:$0xff]
        %v1176 = vld [vmem:[#allocation10 + $0xd0] sm:$0xff]
        %v1177 = vld [vmem:[#allocation10 + $0xd8] sm:$0xff]
        %v1178 = vld [vmem:[#allocation10 + $0xe0] sm:$0xff]
        %v1179 = vld [vmem:[#allocation10 + $0xe8] sm:$0xff]
        %v1180 = vld [vmem:[#allocation10 + $0xf0] sm:$0xff]
        %v1181 = vld [vmem:[#allocation10 + $0xf8] sm:$0xff]
        %1182 = vmatprep.subr.mxu0 %v1151
        %1183 = vmatpush1.msra.mxu0 %v1150
        %1184 = vmatprep.subr.mxu0 %v1153
        %1185 = vmatpush1.msra.mxu0 %v1152
        %1186 = vmatprep.subr.mxu0 %v1155
        %1187 = vmatpush1.msra.mxu0 %v1154
        %1188 = vmatprep.subr.mxu0 %v1157
        %1189 = vmatpush1.msra.mxu0 %v1156
        %1190 = vmatprep.subr.mxu0 %v1159
        %1191 = vmatpush1.msra.mxu0 %v1158
        %1192 = vmatprep.subr.mxu0 %v1161
        %1193 = vmatpush1.msra.mxu0 %v1160
        %1194 = vmatprep.subr.mxu0 %v1163
        %1195 = vmatpush1.msra.mxu0 %v1162
        %1196 = vmatprep.subr.mxu0 %v1165
        %1197 = vmatpush1.msra.mxu0 %v1164
        %1198 = vmatprep.subr.mxu0 %v1167
        %1199 = vmatpush1.msra.mxu0 %v1166
        %1200 = vmatprep.subr.mxu0 %v1169
        %1201 = vmatpush1.msra.mxu0 %v1168
        %1202 = vmatprep.subr.mxu0 %v1171
        %1203 = vmatpush1.msra.mxu0 %v1170
        %1204 = vmatprep.subr.mxu0 %v1173
        %1205 = vmatpush1.msra.mxu0 %v1172
        %1206 = vmatprep.subr.mxu0 %v1175
        %1207 = vmatpush1.msra.mxu0 %v1174
        %1208 = vmatprep.subr.mxu0 %v1177
        %1209 = vmatpush1.msra.mxu0 %v1176
        %1210 = vmatprep.subr.mxu0 %v1179
        %1211 = vmatpush1.msra.mxu0 %v1178
        %1212 = vmatprep.subr.mxu0 %v1181
        %1213 = vmatpush1.msra.mxu0 %v1180
        %1214 = vmatprep.subr.mxu0 0.0
        %1215 = vmatpush1.msra.mxu0 0.0
        %1216 = vmatprep.subr.mxu0 0.0
        %1217 = vmatpush1.msra.mxu0 0.0
        %1218 = vmatprep.subr.mxu0 0.0
        %1219 = vmatpush1.msra.mxu0 0.0
        %1220 = vmatprep.subr.mxu0 0.0
        %1221 = vmatpush1.msra.mxu0 0.0
        %1222 = vmatprep.subr.mxu0 0.0
        %1223 = vmatpush1.msra.mxu0 0.0
        %1224 = vmatprep.subr.mxu0 0.0
        %1225 = vmatpush1.msra.mxu0 0.0
        %1226 = vmatprep.subr.mxu0 0.0
        %1227 = vmatpush1.msra.mxu0 0.0
        %1228 = vmatprep.subr.mxu0 0.0
        %1229 = vmatpush1.msra.mxu0 0.0
        %1230 = vmatprep.subr.mxu0 0.0
        %1231 = vmatpush1.msra.mxu0 0.0
        %1232 = vmatprep.subr.mxu0 0.0
        %1233 = vmatpush1.msra.mxu0 0.0
        %1234 = vmatprep.subr.mxu0 0.0
        %1235 = vmatpush1.msra.mxu0 0.0
        %1236 = vmatprep.subr.mxu0 0.0
        %1237 = vmatpush1.msra.mxu0 0.0
        %1238 = vmatprep.subr.mxu0 0.0
        %1239 = vmatpush1.msra.mxu0 0.0
        %1240 = vmatprep.subr.mxu0 0.0
        %1241 = vmatpush1.msra.mxu0 0.0
        %1242 = vmatprep.subr.mxu0 0.0
        %1243 = vmatpush1.msra.mxu0 0.0
        %1244 = vmatprep.subr.mxu0 0.0
        %1245 = vmatpush1.msra.mxu0 0.0
        %1246 = vmatprep.mubr.f32.mxu0 0.0
        %1247 = vmatmul.mubr.f32.gmra.mrb[0].mxu0 %v1134
        %v1248 = vpop.f32.mrb[0].mxu0
        %v1249 = vadd.f32 0.0, %v1248
        %v1250 = vpop.f32.mrb[0].mxu0
        %v1251 = vadd.f32 0.0, %v1250
        %1252 = vmatprep.mubr.f32.mxu0 0.0
        %1253 = vmatmul.mubr.f32.gmra.mrb[0].mxu0 %v1135
        %v1254 = vpop.f32.mrb[0].mxu0
        %v1255 = vadd.f32 0.0, %v1254
        %v1256 = vpop.f32.mrb[0].mxu0
        %v1257 = vadd.f32 0.0, %v1256
        %1258 = vmatprep.mubr.f32.mxu0 0.0
        %1259 = vmatmul.mubr.f32.gmra.mrb[0].mxu0 %v1136
        %v1260 = vpop.f32.mrb[0].mxu0
        %v1261 = vadd.f32 0.0, %v1260
        %v1262 = vpop.f32.mrb[0].mxu0
        %v1263 = vadd.f32 0.0, %v1262
        %1264 = vmatprep.mubr.f32.mxu0 0.0
        %1265 = vmatmul.mubr.f32.gmra.mrb[0].mxu0 %v1137
        %v1266 = vpop.f32.mrb[0].mxu0
        %v1267 = vadd.f32 0.0, %v1266
        %v1268 = vpop.f32.mrb[0].mxu0
        %v1269 = vadd.f32 0.0, %v1268
        %1270 = vmatprep.mubr.f32.mxu0 0.0
        %1271 = vmatmul.mubr.f32.gmra.mrb[0].mxu0 %v1138
        %v1272 = vpop.f32.mrb[0].mxu0
        %v1273 = vadd.f32 0.0, %v1272
        %v1274 = vpop.f32.mrb[0].mxu0
        %v1275 = vadd.f32 0.0, %v1274
        %1276 = vmatprep.mubr.f32.mxu0 0.0
        %1277 = vmatmul.mubr.f32.gmra.mrb[0].mxu0 %v1139
        %v1278 = vpop.f32.mrb[0].mxu0
        %v1279 = vadd.f32 0.0, %v1278
        %v1280 = vpop.f32.mrb[0].mxu0
        %v1281 = vadd.f32 0.0, %v1280
        %1282 = vmatprep.mubr.f32.mxu0 0.0
        %1283 = vmatmul.mubr.f32.gmra.mrb[0].mxu0 %v1140
        %v1284 = vpop.f32.mrb[0].mxu0
        %v1285 = vadd.f32 0.0, %v1284
        %v1286 = vpop.f32.mrb[0].mxu0
        %v1287 = vadd.f32 0.0, %v1286
        %1288 = vmatprep.mubr.f32.mxu0 0.0
        %1289 = vmatmul.mubr.f32.gmra.mrb[0].mxu0 %v1141
        %v1290 = vpop.f32.mrb[0].mxu0
        %v1291 = vadd.f32 0.0, %v1290
        %v1292 = vpop.f32.mrb[0].mxu0
        %v1293 = vadd.f32 0.0, %v1292
        %1294 = vmatprep.mubr.f32.mxu0 0.0
        %1295 = vmatmul.mubr.f32.gmra.mrb[0].mxu0 %v1142
        %v1296 = vpop.f32.mrb[0].mxu0
        %v1297 = vadd.f32 0.0, %v1296
        %v1298 = vpop.f32.mrb[0].mxu0
        %v1299 = vadd.f32 0.0, %v1298
        %1300 = vmatprep.mubr.f32.mxu0 0.0
        %1301 = vmatmul.mubr.f32.gmra.mrb[0].mxu0 %v1143
        %v1302 = vpop.f32.mrb[0].mxu0
        %v1303 = vadd.f32 0.0, %v1302
        %v1304 = vpop.f32.mrb[0].mxu0
        %v1305 = vadd.f32 0.0, %v1304
        %1306 = vmatprep.mubr.f32.mxu0 0.0
        %1307 = vmatmul.mubr.f32.gmra.mrb[0].mxu0 %v1144
        %v1308 = vpop.f32.mrb[0].mxu0
        %v1309 = vadd.f32 0.0, %v1308
        %v1310 = vpop.f32.mrb[0].mxu0
        %v1311 = vadd.f32 0.0, %v1310
        %1312 = vmatprep.mubr.f32.mxu0 0.0
        %1313 = vmatmul.mubr.f32.gmra.mrb[0].mxu0 %v1145
        %v1314 = vpop.f32.mrb[0].mxu0
        %v1315 = vadd.f32 0.0, %v1314
        %v1316 = vpop.f32.mrb[0].mxu0
        %v1317 = vadd.f32 0.0, %v1316
        %1318 = vmatprep.mubr.f32.mxu0 0.0
        %1319 = vmatmul.mubr.f32.gmra.mrb[0].mxu0 %v1146
        %v1320 = vpop.f32.mrb[0].mxu0
        %v1321 = vadd.f32 0.0, %v1320
        %v1322 = vpop.f32.mrb[0].mxu0
        %v1323 = vadd.f32 0.0, %v1322
        %1324 = vmatprep.mubr.f32.mxu0 0.0
        %1325 = vmatmul.mubr.f32.gmra.mrb[0].mxu0 %v1147
        %v1326 = vpop.f32.mrb[0].mxu0
        %v1327 = vadd.f32 0.0, %v1326
        %v1328 = vpop.f32.mrb[0].mxu0
        %v1329 = vadd.f32 0.0, %v1328
        %1330 = vmatprep.mubr.f32.mxu0 0.0
        %1331 = vmatmul.mubr.f32.gmra.mrb[0].mxu0 %v1148
        %v1332 = vpop.f32.mrb[0].mxu0
        %v1333 = vadd.f32 0.0, %v1332
        %v1334 = vpop.f32.mrb[0].mxu0
        %v1335 = vadd.f32 0.0, %v1334
        %1336 = vmatprep.mubr.f32.mxu0 0.0
        %1337 = vmatmul.mubr.f32.gmra.mrb[0].mxu0 %v1149
        %v1338 = vpop.f32.mrb[0].mxu0
        %v1339 = vadd.f32 0.0, %v1338
        %v1340 = vpop.f32.mrb[0].mxu0
        %v1341 = vadd.f32 0.0, %v1340
        %1342 = vdwg.mxu0
        %v1343 = vadd.f32 %v1249, %v1255
        %v1344 = vadd.f32 %v1343, %v1261
        %v1345 = vadd.f32 %v1344, %v1267
        %v1346 = vadd.f32 %v1345, %v1273
        %v1347 = vadd.f32 %v1346, %v1279
        %v1348 = vadd.f32 %v1347, %v1285
        %v1349 = vadd.f32 %v1348, %v1291
        %v1350 = vadd.f32 %v1349, %v1297
        %v1351 = vadd.f32 %v1350, %v1303
        %v1352 = vadd.f32 %v1351, %v1309
        %v1353 = vadd.f32 %v1352, %v1315
        %v1354 = vadd.f32 %v1353, %v1321
        %v1355 = vadd.f32 %v1354, %v1327
        %v1356 = vadd.f32 %v1355, %v1333
        %v1357 = vadd.f32 %v1356, %v1339
        %v1358 = vrot.slane %v1357, 4
        %v1359 = vadd.f32 %v1357, %v1358
        %v1360 = vrot.slane %v1359, 2
        %v1361 = vadd.f32 %v1359, %v1360
        %v1362 = vrot.slane %v1361, 1
        %v1363 = vadd.f32 %v1361, %v1362
        %v1364 = vadd.f32 %v1251, %v1257
        %v1365 = vadd.f32 %v1364, %v1263
        %v1366 = vadd.f32 %v1365, %v1269
        %v1367 = vadd.f32 %v1366, %v1275
        %v1368 = vadd.f32 %v1367, %v1281
        %v1369 = vadd.f32 %v1368, %v1287
        %v1370 = vadd.f32 %v1369, %v1293
        %v1371 = vadd.f32 %v1370, %v1299
        %v1372 = vadd.f32 %v1371, %v1305
        %v1373 = vadd.f32 %v1372, %v1311
        %v1374 = vadd.f32 %v1373, %v1317
        %v1375 = vadd.f32 %v1374, %v1323
        %v1376 = vadd.f32 %v1375, %v1329
        %v1377 = vadd.f32 %v1376, %v1335
        %v1378 = vadd.f32 %v1377, %v1341
        %v1379 = vrot.slane %v1378, 4
        %v1380 = vadd.f32 %v1378, %v1379
        %v1381 = vrot.slane %v1380, 2
        %v1382 = vadd.f32 %v1380, %v1381
        %v1383 = vrot.slane %v1382, 1
        %v1384 = vadd.f32 %v1382, %v1383
        %v1385 = vmul.f32 %v1363, 0.0078125
        %v1386 = vmul.f32 %v1384, 0.0078125
        %v1387 = vmul.f32 %v1249, %v1249
        %v1388 = vmul.f32 %v1251, %v1251
        %v1389 = vmul.f32 %v1255, %v1255
        %v1390 = vmul.f32 %v1257, %v1257
        %v1391 = vmul.f32 %v1261, %v1261
        %v1392 = vmul.f32 %v1263, %v1263
        %v1393 = vmul.f32 %v1267, %v1267
        %v1394 = vmul.f32 %v1269, %v1269
        %v1395 = vmul.f32 %v1273, %v1273
        %v1396 = vmul.f32 %v1275, %v1275
        %v1397 = vmul.f32 %v1279, %v1279
        %v1398 = vmul.f32 %v1281, %v1281
        %v1399 = vmul.f32 %v1285, %v1285
        %v1400 = vmul.f32 %v1287, %v1287
        %v1401 = vmul.f32 %v1291, %v1291
        %v1402 = vmul.f32 %v1293, %v1293
        %v1403 = vmul.f32 %v1297, %v1297
        %v1404 = vmul.f32 %v1299, %v1299
        %v1405 = vmul.f32 %v1303, %v1303
        %v1406 = vmul.f32 %v1305, %v1305
        %v1407 = vmul.f32 %v1309, %v1309
        %v1408 = vmul.f32 %v1311, %v1311
        %v1409 = vmul.f32 %v1315, %v1315
        %v1410 = vmul.f32 %v1317, %v1317
        %v1411 = vmul.f32 %v1321, %v1321
        %v1412 = vmul.f32 %v1323, %v1323
        %v1413 = vmul.f32 %v1327, %v1327
        %v1414 = vmul.f32 %v1329, %v1329
        %v1415 = vmul.f32 %v1333, %v1333
        %v1416 = vmul.f32 %v1335, %v1335
        %v1417 = vmul.f32 %v1339, %v1339
        %v1418 = vmul.f32 %v1341, %v1341
        %v1419 = vadd.f32 %v1387, %v1389
        %v1420 = vadd.f32 %v1419, %v1391
        %v1421 = vadd.f32 %v1420, %v1393
        %v1422 = vadd.f32 %v1421, %v1395
        %v1423 = vadd.f32 %v1422, %v1397
        %v1424 = vadd.f32 %v1423, %v1399
        %v1425 = vadd.f32 %v1424, %v1401
        %v1426 = vadd.f32 %v1425, %v1403
        %v1427 = vadd.f32 %v1426, %v1405
        %v1428 = vadd.f32 %v1427, %v1407
        %v1429 = vadd.f32 %v1428, %v1409
        %v1430 = vadd.f32 %v1429, %v1411
        %v1431 = vadd.f32 %v1430, %v1413
        %v1432 = vadd.f32 %v1431, %v1415
        %v1433 = vadd.f32 %v1432, %v1417
        %v1434 = vrot.slane %v1433, 4
        %v1435 = vadd.f32 %v1433, %v1434
        %v1436 = vrot.slane %v1435, 2
        %v1437 = vadd.f32 %v1435, %v1436
        %v1438 = vrot.slane %v1437, 1
        %v1439 = vadd.f32 %v1437, %v1438
        %v1440 = vadd.f32 %v1388, %v1390
        %v1441 = vadd.f32 %v1440, %v1392
        %v1442 = vadd.f32 %v1441, %v1394
        %v1443 = vadd.f32 %v1442, %v1396
        %v1444 = vadd.f32 %v1443, %v1398
        %v1445 = vadd.f32 %v1444, %v1400
        %v1446 = vadd.f32 %v1445, %v1402
        %v1447 = vadd.f32 %v1446, %v1404
        %v1448 = vadd.f32 %v1447, %v1406
        %v1449 = vadd.f32 %v1448, %v1408
        %v1450 = vadd.f32 %v1449, %v1410
        %v1451 = vadd.f32 %v1450, %v1412
        %v1452 = vadd.f32 %v1451, %v1414
        %v1453 = vadd.f32 %v1452, %v1416
        %v1454 = vadd.f32 %v1453, %v1418
        %v1455 = vrot.slane %v1454, 4
        %v1456 = vadd.f32 %v1454, %v1455
        %v1457 = vrot.slane %v1456, 2
        %v1458 = vadd.f32 %v1456, %v1457
        %v1459 = vrot.slane %v1458, 1
        %v1460 = vadd.f32 %v1458, %v1459
        %v1461 = vmul.f32 %v1439, 0.0078125
        %v1462 = vmul.f32 %v1460, 0.0078125
        %v1463 = vmul.f32 %v1385, %v1385
        %v1464 = vmul.f32 %v1386, %v1386
        %v1465 = vsub.f32 %v1461, %v1463
        %v1466 = vsub.f32 %v1462, %v1464
        %v1467 = vmax.f32 %v1465, 0.0
        %v1468 = vmax.f32 %v1466, 0.0
        %v1469 = vld [vmem:[#allocation11] ss:$2 sm:$0x3]
        %s1470 = scalar_lea.vmem [#allocation11], 1
        %v1471 = vld [vmem:[%s1470] ss:$2 sm:$0x3]
        %v1472 = vadd.f32 %v1467, 1e-05
        %v1473 = vadd.f32 %v1468, 1e-05
        %v1474 = vrsqrt.pop %v1472
        %v1475 = vrsqrt.pop %v1473
        %v1478 = vcombine.low %v1474, %v1475
        %v1480 = vunpack.c.l.s4 1966171168
        %v1481 = vunpack.c.0.s8 %v1480
        %v1482 = vlaneseq
        %v1483 = vshrl.u32 %v1482, 7
        %v1484 = vsub.s32 %v1481, %v1483
        %v1485 = vrot.slane %v1478, %v1484
        %v1487 = vunpack.c.l.s4 1966171168
        %v1488 = vunpack.c.0.s8 %v1487
        %v1489 = vlaneseq
        %v1490 = vshrl.u32 %v1489, 7
        %v1491 = vsub.s32 %v1488, %v1490
        %v1492 = vrot.slane %v1485, %v1491
        %v1494 = vmul.f32 %v1469, %v1492
        %v1496 = vlaneseq
        %v1497 = vshrl.u32 %v1496, 7
        %v1498 = vsub.s32 0, %v1497
        %v1499 = vrot.slane %v1494, %v1498
        %v1500 = vlaneseq
        %v1501 = vshrl.u32 %v1500, 7
        %v1502 = vsub.s32 1, %v1501
        %v1503 = vrot.slane %v1494, %v1502
        %v1506 = vmul.f32 %v1385, %v1499
        %v1507 = vmul.f32 %v1386, %v1503
        %v1510 = vcombine.low %v1506, %v1507
        %v1512 = vunpack.c.l.s4 1966171168
        %v1513 = vunpack.c.0.s8 %v1512
        %v1514 = vlaneseq
        %v1515 = vshrl.u32 %v1514, 7
        %v1516 = vsub.s32 %v1513, %v1515
        %v1517 = vrot.slane %v1510, %v1516
        %v1519 = vunpack.c.l.s4 1966171168
        %v1520 = vunpack.c.0.s8 %v1519
        %v1521 = vlaneseq
        %v1522 = vshrl.u32 %v1521, 7
        %v1523 = vsub.s32 %v1520, %v1522
        %v1524 = vrot.slane %v1517, %v1523
        %v1526 = vsub.f32 %v1471, %v1524
        %v1527 = vmul.f32 %v1249, %v1499
        %v1528 = vmul.f32 %v1251, %v1503
        %v1529 = vmul.f32 %v1255, %v1499
        %v1530 = vmul.f32 %v1257, %v1503
        %v1531 = vmul.f32 %v1261, %v1499
        %v1532 = vmul.f32 %v1263, %v1503
        %v1533 = vmul.f32 %v1267, %v1499
        %v1534 = vmul.f32 %v1269, %v1503
        %v1535 = vmul.f32 %v1273, %v1499
        %v1536 = vmul.f32 %v1275, %v1503
        %v1537 = vmul.f32 %v1279, %v1499
        %v1538 = vmul.f32 %v1281, %v1503
        %v1539 = vmul.f32 %v1285, %v1499
        %v1540 = vmul.f32 %v1287, %v1503
        %v1541 = vmul.f32 %v1291, %v1499
        %v1542 = vmul.f32 %v1293, %v1503
        %v1543 = vmul.f32 %v1297, %v1499
        %v1544 = vmul.f32 %v1299, %v1503
        %v1545 = vmul.f32 %v1303, %v1499
        %v1546 = vmul.f32 %v1305, %v1503
        %v1547 = vmul.f32 %v1309, %v1499
        %v1548 = vmul.f32 %v1311, %v1503
        %v1549 = vmul.f32 %v1315, %v1499
        %v1550 = vmul.f32 %v1317, %v1503
        %v1551 = vmul.f32 %v1321, %v1499
        %v1552 = vmul.f32 %v1323, %v1503
        %v1553 = vmul.f32 %v1327, %v1499
        %v1554 = vmul.f32 %v1329, %v1503
        %v1555 = vmul.f32 %v1333, %v1499
        %v1556 = vmul.f32 %v1335, %v1503
        %v1557 = vmul.f32 %v1339, %v1499
        %v1558 = vmul.f32 %v1341, %v1503
        %v1560 = vlaneseq
        %v1561 = vshrl.u32 %v1560, 7
        %v1562 = vsub.s32 0, %v1561
        %v1563 = vrot.slane %v1526, %v1562
        %v1564 = vlaneseq
        %v1565 = vshrl.u32 %v1564, 7
        %v1566 = vsub.s32 1, %v1565
        %v1567 = vrot.slane %v1526, %v1566
        %v1570 = vadd.f32 %v1527, %v1563
        %v1571 = vadd.f32 %v1528, %v1567
        %v1572 = vadd.f32 %v1529, %v1563
        %v1573 = vadd.f32 %v1530, %v1567
        %v1574 = vadd.f32 %v1531, %v1563
        %v1575 = vadd.f32 %v1532, %v1567
        %v1576 = vadd.f32 %v1533, %v1563
        %v1577 = vadd.f32 %v1534, %v1567
        %v1578 = vadd.f32 %v1535, %v1563
        %v1579 = vadd.f32 %v1536, %v1567
        %v1580 = vadd.f32 %v1537, %v1563
        %v1581 = vadd.f32 %v1538, %v1567
        %v1582 = vadd.f32 %v1539, %v1563
        %v1583 = vadd.f32 %v1540, %v1567
        %v1584 = vadd.f32 %v1541, %v1563
        %v1585 = vadd.f32 %v1542, %v1567
        %v1586 = vadd.f32 %v1543, %v1563
        %v1587 = vadd.f32 %v1544, %v1567
        %v1588 = vadd.f32 %v1545, %v1563
        %v1589 = vadd.f32 %v1546, %v1567
        %v1590 = vadd.f32 %v1547, %v1563
        %v1591 = vadd.f32 %v1548, %v1567
        %v1592 = vadd.f32 %v1549, %v1563
        %v1593 = vadd.f32 %v1550, %v1567
        %v1594 = vadd.f32 %v1551, %v1563
        %v1595 = vadd.f32 %v1552, %v1567
        %v1596 = vadd.f32 %v1553, %v1563
        %v1597 = vadd.f32 %v1554, %v1567
        %v1598 = vadd.f32 %v1555, %v1563
        %v1599 = vadd.f32 %v1556, %v1567
        %v1600 = vadd.f32 %v1557, %v1563
        %v1601 = vadd.f32 %v1558, %v1567
        %v1602 = vmax.f32 %v1570, 0.0
        %v1603 = vmax.f32 %v1571, 0.0
        %v1604 = vmax.f32 %v1572, 0.0
        %v1605 = vmax.f32 %v1573, 0.0
        %v1606 = vmax.f32 %v1574, 0.0
        %v1607 = vmax.f32 %v1575, 0.0
        %v1608 = vmax.f32 %v1576, 0.0
        %v1609 = vmax.f32 %v1577, 0.0
        %v1610 = vmax.f32 %v1578, 0.0
        %v1611 = vmax.f32 %v1579, 0.0
        %v1612 = vmax.f32 %v1580, 0.0
        %v1613 = vmax.f32 %v1581, 0.0
        %v1614 = vmax.f32 %v1582, 0.0
        %v1615 = vmax.f32 %v1583, 0.0
        %v1616 = vmax.f32 %v1584, 0.0
        %v1617 = vmax.f32 %v1585, 0.0
        %v1618 = vmax.f32 %v1586, 0.0
        %v1619 = vmax.f32 %v1587, 0.0
        %v1620 = vmax.f32 %v1588, 0.0
        %v1621 = vmax.f32 %v1589, 0.0
        %v1622 = vmax.f32 %v1590, 0.0
        %v1623 = vmax.f32 %v1591, 0.0
        %v1624 = vmax.f32 %v1592, 0.0
        %v1625 = vmax.f32 %v1593, 0.0
        %v1626 = vmax.f32 %v1594, 0.0
        %v1627 = vmax.f32 %v1595, 0.0
        %v1628 = vmax.f32 %v1596, 0.0
        %v1629 = vmax.f32 %v1597, 0.0
        %v1630 = vmax.f32 %v1598, 0.0
        %v1631 = vmax.f32 %v1599, 0.0
        %v1632 = vmax.f32 %v1600, 0.0
        %v1633 = vmax.f32 %v1601, 0.0
        %v1634 = vld [vmem:[#allocation13] sm:$0xff]
        %v1635 = vld [vmem:[#allocation13 + $0x8] sm:$0xff]
        %v1636 = vld [vmem:[#allocation13 + $0x10] sm:$0xff]
        %v1637 = vld [vmem:[#allocation13 + $0x18] sm:$0xff]
        %v1638 = vld [vmem:[#allocation13 + $0x20] sm:$0xff]
        %v1639 = vld [vmem:[#allocation13 + $0x28] sm:$0xff]
        %v1640 = vld [vmem:[#allocation13 + $0x30] sm:$0xff]
        %v1641 = vld [vmem:[#allocation13 + $0x38] sm:$0xff]
        %v1642 = vld [vmem:[#allocation13 + $0x40] sm:$0xff]
        %v1643 = vld [vmem:[#allocation13 + $0x48] sm:$0xff]
        %v1644 = vld [vmem:[#allocation13 + $0x50] sm:$0xff]
        %v1645 = vld [vmem:[#allocation13 + $0x58] sm:$0xff]
        %v1646 = vld [vmem:[#allocation13 + $0x60] sm:$0xff]
        %v1647 = vld [vmem:[#allocation13 + $0x68] sm:$0xff]
        %v1648 = vld [vmem:[#allocation13 + $0x70] sm:$0xff]
        %v1649 = vld [vmem:[#allocation13 + $0x78] sm:$0xff]
        %v1650 = vld [vmem:[#allocation13 + $0x80] sm:$0xff]
        %v1651 = vld [vmem:[#allocation13 + $0x88] sm:$0xff]
        %v1652 = vld [vmem:[#allocation13 + $0x90] sm:$0xff]
        %v1653 = vld [vmem:[#allocation13 + $0x98] sm:$0xff]
        %v1654 = vld [vmem:[#allocation13 + $0xa0] sm:$0xff]
        %v1655 = vld [vmem:[#allocation13 + $0xa8] sm:$0xff]
        %v1656 = vld [vmem:[#allocation13 + $0xb0] sm:$0xff]
        %v1657 = vld [vmem:[#allocation13 + $0xb8] sm:$0xff]
        %v1658 = vld [vmem:[#allocation13 + $0xc0] sm:$0xff]
        %v1659 = vld [vmem:[#allocation13 + $0xc8] sm:$0xff]
        %v1660 = vld [vmem:[#allocation13 + $0xd0] sm:$0xff]
        %v1661 = vld [vmem:[#allocation13 + $0xd8] sm:$0xff]
        %v1662 = vld [vmem:[#allocation13 + $0xe0] sm:$0xff]
        %v1663 = vld [vmem:[#allocation13 + $0xe8] sm:$0xff]
        %v1664 = vld [vmem:[#allocation13 + $0xf0] sm:$0xff]
        %v1665 = vld [vmem:[#allocation13 + $0xf8] sm:$0xff]
        %v1666 = vld [vmem:[#allocation13 + $0x100] sm:$0xff]
        %v1667 = vld [vmem:[#allocation13 + $0x108] sm:$0xff]
        %v1668 = vld [vmem:[#allocation13 + $0x110] sm:$0xff]
        %v1669 = vld [vmem:[#allocation13 + $0x118] sm:$0xff]
        %v1670 = vld [vmem:[#allocation13 + $0x120] sm:$0xff]
        %v1671 = vld [vmem:[#allocation13 + $0x128] sm:$0xff]
        %v1672 = vld [vmem:[#allocation13 + $0x130] sm:$0xff]
        %v1673 = vld [vmem:[#allocation13 + $0x138] sm:$0xff]
        %v1674 = vld [vmem:[#allocation13 + $0x140] sm:$0xff]
        %v1675 = vld [vmem:[#allocation13 + $0x148] sm:$0xff]
        %v1676 = vld [vmem:[#allocation13 + $0x150] sm:$0xff]
        %v1677 = vld [vmem:[#allocation13 + $0x158] sm:$0xff]
        %v1678 = vld [vmem:[#allocation13 + $0x160] sm:$0xff]
        %v1679 = vld [vmem:[#allocation13 + $0x168] sm:$0xff]
        %v1680 = vld [vmem:[#allocation13 + $0x170] sm:$0xff]
        %v1681 = vld [vmem:[#allocation13 + $0x178] sm:$0xff]
        %v1682 = vld [vmem:[#allocation13 + $0x180] sm:$0xff]
        %v1683 = vld [vmem:[#allocation13 + $0x188] sm:$0xff]
        %v1684 = vld [vmem:[#allocation13 + $0x190] sm:$0xff]
        %v1685 = vld [vmem:[#allocation13 + $0x198] sm:$0xff]
        %v1686 = vld [vmem:[#allocation13 + $0x1a0] sm:$0xff]
        %v1687 = vld [vmem:[#allocation13 + $0x1a8] sm:$0xff]
        %v1688 = vld [vmem:[#allocation13 + $0x1b0] sm:$0xff]
        %v1689 = vld [vmem:[#allocation13 + $0x1b8] sm:$0xff]
        %v1690 = vld [vmem:[#allocation13 + $0x1c0] sm:$0xff]
        %v1691 = vld [vmem:[#allocation13 + $0x1c8] sm:$0xff]
        %v1692 = vld [vmem:[#allocation13 + $0x1d0] sm:$0xff]
        %v1693 = vld [vmem:[#allocation13 + $0x1d8] sm:$0xff]
        %v1694 = vld [vmem:[#allocation13 + $0x1e0] sm:$0xff]
        %v1695 = vld [vmem:[#allocation13 + $0x1e8] sm:$0xff]
        %v1696 = vld [vmem:[#allocation13 + $0x1f0] sm:$0xff]
        %v1697 = vld [vmem:[#allocation13 + $0x1f8] sm:$0xff]
        %v1698 = vld [vmem:[#allocation13 + $0x200] sm:$0xff]
        %v1699 = vld [vmem:[#allocation13 + $0x208] sm:$0xff]
        %v1700 = vld [vmem:[#allocation13 + $0x210] sm:$0xff]
        %v1701 = vld [vmem:[#allocation13 + $0x218] sm:$0xff]
        %v1702 = vld [vmem:[#allocation13 + $0x220] sm:$0xff]
        %v1703 = vld [vmem:[#allocation13 + $0x228] sm:$0xff]
        %v1704 = vld [vmem:[#allocation13 + $0x230] sm:$0xff]
        %v1705 = vld [vmem:[#allocation13 + $0x238] sm:$0xff]
        %v1706 = vld [vmem:[#allocation13 + $0x240] sm:$0xff]
        %v1707 = vld [vmem:[#allocation13 + $0x248] sm:$0xff]
        %v1708 = vld [vmem:[#allocation13 + $0x250] sm:$0xff]
        %v1709 = vld [vmem:[#allocation13 + $0x258] sm:$0xff]
        %v1710 = vld [vmem:[#allocation13 + $0x260] sm:$0xff]
        %v1711 = vld [vmem:[#allocation13 + $0x268] sm:$0xff]
        %v1712 = vld [vmem:[#allocation13 + $0x270] sm:$0xff]
        %v1713 = vld [vmem:[#allocation13 + $0x278] sm:$0xff]
        %v1714 = vld [vmem:[#allocation13 + $0x280] sm:$0xff]
        %v1715 = vld [vmem:[#allocation13 + $0x288] sm:$0xff]
        %v1716 = vld [vmem:[#allocation13 + $0x290] sm:$0xff]
        %v1717 = vld [vmem:[#allocation13 + $0x298] sm:$0xff]
        %v1718 = vld [vmem:[#allocation13 + $0x2a0] sm:$0xff]
        %v1719 = vld [vmem:[#allocation13 + $0x2a8] sm:$0xff]
        %v1720 = vld [vmem:[#allocation13 + $0x2b0] sm:$0xff]
        %v1721 = vld [vmem:[#allocation13 + $0x2b8] sm:$0xff]
        %v1722 = vld [vmem:[#allocation13 + $0x2c0] sm:$0xff]
        %v1723 = vld [vmem:[#allocation13 + $0x2c8] sm:$0xff]
        %v1724 = vld [vmem:[#allocation13 + $0x2d0] sm:$0xff]
        %v1725 = vld [vmem:[#allocation13 + $0x2d8] sm:$0xff]
        %v1726 = vld [vmem:[#allocation13 + $0x2e0] sm:$0xff]
        %v1727 = vld [vmem:[#allocation13 + $0x2e8] sm:$0xff]
        %v1728 = vld [vmem:[#allocation13 + $0x2f0] sm:$0xff]
        %v1729 = vld [vmem:[#allocation13 + $0x2f8] sm:$0xff]
        %v1730 = vld [vmem:[#allocation13 + $0x300] sm:$0xff]
        %v1731 = vld [vmem:[#allocation13 + $0x308] sm:$0xff]
        %v1732 = vld [vmem:[#allocation13 + $0x310] sm:$0xff]
        %v1733 = vld [vmem:[#allocation13 + $0x318] sm:$0xff]
        %v1734 = vld [vmem:[#allocation13 + $0x320] sm:$0xff]
        %v1735 = vld [vmem:[#allocation13 + $0x328] sm:$0xff]
        %v1736 = vld [vmem:[#allocation13 + $0x330] sm:$0xff]
        %v1737 = vld [vmem:[#allocation13 + $0x338] sm:$0xff]
        %v1738 = vld [vmem:[#allocation13 + $0x340] sm:$0xff]
        %v1739 = vld [vmem:[#allocation13 + $0x348] sm:$0xff]
        %v1740 = vld [vmem:[#allocation13 + $0x350] sm:$0xff]
        %v1741 = vld [vmem:[#allocation13 + $0x358] sm:$0xff]
        %v1742 = vld [vmem:[#allocation13 + $0x360] sm:$0xff]
        %v1743 = vld [vmem:[#allocation13 + $0x368] sm:$0xff]
        %v1744 = vld [vmem:[#allocation13 + $0x370] sm:$0xff]
        %v1745 = vld [vmem:[#allocation13 + $0x378] sm:$0xff]
        %v1746 = vld [vmem:[#allocation13 + $0x380] sm:$0xff]
        %v1747 = vld [vmem:[#allocation13 + $0x388] sm:$0xff]
        %v1748 = vld [vmem:[#allocation13 + $0x390] sm:$0xff]
        %v1749 = vld [vmem:[#allocation13 + $0x398] sm:$0xff]
        %v1750 = vld [vmem:[#allocation13 + $0x3a0] sm:$0xff]
        %v1751 = vld [vmem:[#allocation13 + $0x3a8] sm:$0xff]
        %v1752 = vld [vmem:[#allocation13 + $0x3b0] sm:$0xff]
        %v1753 = vld [vmem:[#allocation13 + $0x3b8] sm:$0xff]
        %v1754 = vld [vmem:[#allocation13 + $0x3c0] sm:$0xff]
        %v1755 = vld [vmem:[#allocation13 + $0x3c8] sm:$0xff]
        %v1756 = vld [vmem:[#allocation13 + $0x3d0] sm:$0xff]
        %v1757 = vld [vmem:[#allocation13 + $0x3d8] sm:$0xff]
        %v1758 = vld [vmem:[#allocation13 + $0x3e0] sm:$0xff]
        %v1759 = vld [vmem:[#allocation13 + $0x3e8] sm:$0xff]
        %v1760 = vld [vmem:[#allocation13 + $0x3f0] sm:$0xff]
        %v1761 = vld [vmem:[#allocation13 + $0x3f8] sm:$0xff]
        %1762 = vmatprep.subr.mxu0 %v1635
        %1763 = vmatpush1.msra.mxu0 %v1634
        %1764 = vmatprep.subr.mxu0 %v1639
        %1765 = vmatpush1.msra.mxu0 %v1638
        %1766 = vmatprep.subr.mxu0 %v1643
        %1767 = vmatpush1.msra.mxu0 %v1642
        %1768 = vmatprep.subr.mxu0 %v1647
        %1769 = vmatpush1.msra.mxu0 %v1646
        %1770 = vmatprep.subr.mxu0 %v1651
        %1771 = vmatpush1.msra.mxu0 %v1650
        %1772 = vmatprep.subr.mxu0 %v1655
        %1773 = vmatpush1.msra.mxu0 %v1654
        %1774 = vmatprep.subr.mxu0 %v1659
        %1775 = vmatpush1.msra.mxu0 %v1658
        %1776 = vmatprep.subr.mxu0 %v1663
        %1777 = vmatpush1.msra.mxu0 %v1662
        %1778 = vmatprep.subr.mxu0 %v1667
        %1779 = vmatpush1.msra.mxu0 %v1666
        %1780 = vmatprep.subr.mxu0 %v1671
        %1781 = vmatpush1.msra.mxu0 %v1670
        %1782 = vmatprep.subr.mxu0 %v1675
        %1783 = vmatpush1.msra.mxu0 %v1674
        %1784 = vmatprep.subr.mxu0 %v1679
        %1785 = vmatpush1.msra.mxu0 %v1678
        %1786 = vmatprep.subr.mxu0 %v1683
        %1787 = vmatpush1.msra.mxu0 %v1682
        %1788 = vmatprep.subr.mxu0 %v1687
        %1789 = vmatpush1.msra.mxu0 %v1686
        %1790 = vmatprep.subr.mxu0 %v1691
        %1791 = vmatpush1.msra.mxu0 %v1690
        %1792 = vmatprep.subr.mxu0 %v1695
        %1793 = vmatpush1.msra.mxu0 %v1694
        %1794 = vmatprep.subr.mxu0 %v1699
        %1795 = vmatpush1.msra.mxu0 %v1698
        %1796 = vmatprep.subr.mxu0 %v1703
        %1797 = vmatpush1.msra.mxu0 %v1702
        %1798 = vmatprep.subr.mxu0 %v1707
        %1799 = vmatpush1.msra.mxu0 %v1706
        %1800 = vmatprep.subr.mxu0 %v1711
        %1801 = vmatpush1.msra.mxu0 %v1710
        %1802 = vmatprep.subr.mxu0 %v1715
        %1803 = vmatpush1.msra.mxu0 %v1714
        %1804 = vmatprep.subr.mxu0 %v1719
        %1805 = vmatpush1.msra.mxu0 %v1718
        %1806 = vmatprep.subr.mxu0 %v1723
        %1807 = vmatpush1.msra.mxu0 %v1722
        %1808 = vmatprep.subr.mxu0 %v1727
        %1809 = vmatpush1.msra.mxu0 %v1726
        %1810 = vmatprep.subr.mxu0 %v1731
        %1811 = vmatpush1.msra.mxu0 %v1730
        %1812 = vmatprep.subr.mxu0 %v1735
        %1813 = vmatpush1.msra.mxu0 %v1734
        %1814 = vmatprep.subr.mxu0 %v1739
        %1815 = vmatpush1.msra.mxu0 %v1738
        %1816 = vmatprep.subr.mxu0 %v1743
        %1817 = vmatpush1.msra.mxu0 %v1742
        %1818 = vmatprep.subr.mxu0 %v1747
        %1819 = vmatpush1.msra.mxu0 %v1746
        %1820 = vmatprep.subr.mxu0 %v1751
        %1821 = vmatpush1.msra.mxu0 %v1750
        %1822 = vmatprep.subr.mxu0 %v1755
        %1823 = vmatpush1.msra.mxu0 %v1754
        %1824 = vmatprep.subr.mxu0 %v1759
        %1825 = vmatpush1.msra.mxu0 %v1758
        %1826 = vmatprep.mubr.f32.mxu0 %v1603
        %1827 = vmatmul.mubr.f32.gmra.mrb[0].mxu0 %v1602
        %v1828 = vpop.f32.mrb[0].mxu0
        %v1829 = vadd.f32 0.0, %v1828
        %v1830 = vpop.f32.mrb[0].mxu0
        %v1831 = vadd.f32 0.0, %v1830
        %1832 = vmatprep.mubr.f32.mxu0 %v1605
        %1833 = vmatmul.mubr.f32.gmra.mrb[0].mxu0 %v1604
        %v1834 = vpop.f32.mrb[0].mxu0
        %v1835 = vadd.f32 0.0, %v1834
        %v1836 = vpop.f32.mrb[0].mxu0
        %v1837 = vadd.f32 0.0, %v1836
        %1838 = vmatprep.mubr.f32.mxu0 %v1607
        %1839 = vmatmul.mubr.f32.gmra.mrb[0].mxu0 %v1606
        %v1840 = vpop.f32.mrb[0].mxu0
        %v1841 = vadd.f32 0.0, %v1840
        %v1842 = vpop.f32.mrb[0].mxu0
        %v1843 = vadd.f32 0.0, %v1842
        %1844 = vmatprep.mubr.f32.mxu0 %v1609
        %1845 = vmatmul.mubr.f32.gmra.mrb[0].mxu0 %v1608
        %v1846 = vpop.f32.mrb[0].mxu0
        %v1847 = vadd.f32 0.0, %v1846
        %v1848 = vpop.f32.mrb[0].mxu0
        %v1849 = vadd.f32 0.0, %v1848
        %1850 = vmatprep.mubr.f32.mxu0 %v1611
        %1851 = vmatmul.mubr.f32.gmra.mrb[0].mxu0 %v1610
        %v1852 = vpop.f32.mrb[0].mxu0
        %v1853 = vadd.f32 0.0, %v1852
        %v1854 = vpop.f32.mrb[0].mxu0
        %v1855 = vadd.f32 0.0, %v1854
        %1856 = vmatprep.mubr.f32.mxu0 %v1613
        %1857 = vmatmul.mubr.f32.gmra.mrb[0].mxu0 %v1612
        %v1858 = vpop.f32.mrb[0].mxu0
        %v1859 = vadd.f32 0.0, %v1858
        %v1860 = vpop.f32.mrb[0].mxu0
        %v1861 = vadd.f32 0.0, %v1860
        %1862 = vmatprep.mubr.f32.mxu0 %v1615
        %1863 = vmatmul.mubr.f32.gmra.mrb[0].mxu0 %v1614
        %v1864 = vpop.f32.mrb[0].mxu0
        %v1865 = vadd.f32 0.0, %v1864
        %v1866 = vpop.f32.mrb[0].mxu0
        %v1867 = vadd.f32 0.0, %v1866
        %1868 = vmatprep.mubr.f32.mxu0 %v1617
        %1869 = vmatmul.mubr.f32.gmra.mrb[0].mxu0 %v1616
        %v1870 = vpop.f32.mrb[0].mxu0
        %v1871 = vadd.f32 0.0, %v1870
        %v1872 = vpop.f32.mrb[0].mxu0
        %v1873 = vadd.f32 0.0, %v1872
        %1874 = vmatprep.mubr.f32.mxu0 %v1619
        %1875 = vmatmul.mubr.f32.gmra.mrb[0].mxu0 %v1618
        %v1876 = vpop.f32.mrb[0].mxu0
        %v1877 = vadd.f32 0.0, %v1876
        %v1878 = vpop.f32.mrb[0].mxu0
        %v1879 = vadd.f32 0.0, %v1878
        %1880 = vmatprep.mubr.f32.mxu0 %v1621
        %1881 = vmatmul.mubr.f32.gmra.mrb[0].mxu0 %v1620
        %v1882 = vpop.f32.mrb[0].mxu0
        %v1883 = vadd.f32 0.0, %v1882
        %v1884 = vpop.f32.mrb[0].mxu0
        %v1885 = vadd.f32 0.0, %v1884
        %1886 = vmatprep.mubr.f32.mxu0 %v1623
        %1887 = vmatmul.mubr.f32.gmra.mrb[0].mxu0 %v1622
        %v1888 = vpop.f32.mrb[0].mxu0
        %v1889 = vadd.f32 0.0, %v1888
        %v1890 = vpop.f32.mrb[0].mxu0
        %v1891 = vadd.f32 0.0, %v1890
        %1892 = vmatprep.mubr.f32.mxu0 %v1625
        %1893 = vmatmul.mubr.f32.gmra.mrb[0].mxu0 %v1624
        %v1894 = vpop.f32.mrb[0].mxu0
        %v1895 = vadd.f32 0.0, %v1894
        %v1896 = vpop.f32.mrb[0].mxu0
        %v1897 = vadd.f32 0.0, %v1896
        %1898 = vmatprep.mubr.f32.mxu0 %v1627
        %1899 = vmatmul.mubr.f32.gmra.mrb[0].mxu0 %v1626
        %v1900 = vpop.f32.mrb[0].mxu0
        %v1901 = vadd.f32 0.0, %v1900
        %v1902 = vpop.f32.mrb[0].mxu0
        %v1903 = vadd.f32 0.0, %v1902
        %1904 = vmatprep.mubr.f32.mxu0 %v1629
        %1905 = vmatmul.mubr.f32.gmra.mrb[0].mxu0 %v1628
        %v1906 = vpop.f32.mrb[0].mxu0
        %v1907 = vadd.f32 0.0, %v1906
        %v1908 = vpop.f32.mrb[0].mxu0
        %v1909 = vadd.f32 0.0, %v1908
        %1910 = vmatprep.mubr.f32.mxu0 %v1631
        %1911 = vmatmul.mubr.f32.gmra.mrb[0].mxu0 %v1630
        %v1912 = vpop.f32.mrb[0].mxu0
        %v1913 = vadd.f32 0.0, %v1912
        %v1914 = vpop.f32.mrb[0].mxu0
        %v1915 = vadd.f32 0.0, %v1914
        %1916 = vmatprep.mubr.f32.mxu0 %v1633
        %1917 = vmatmul.mubr.f32.gmra.mrb[0].mxu0 %v1632
        %v1918 = vpop.f32.mrb[0].mxu0
        %v1919 = vadd.f32 0.0, %v1918
        %v1920 = vpop.f32.mrb[0].mxu0
        %v1921 = vadd.f32 0.0, %v1920
        %1922 = vdwg.mxu0
        %1923 = vmatprep.subr.mxu0 %v1637
        %1924 = vmatpush1.msra.mxu0 %v1636
        %1925 = vmatprep.subr.mxu0 %v1641
        %1926 = vmatpush1.msra.mxu0 %v1640
        %1927 = vmatprep.subr.mxu0 %v1645
        %1928 = vmatpush1.msra.mxu0 %v1644
        %1929 = vmatprep.subr.mxu0 %v1649
        %1930 = vmatpush1.msra.mxu0 %v1648
        %1931 = vmatprep.subr.mxu0 %v1653
        %1932 = vmatpush1.msra.mxu0 %v1652
        %1933 = vmatprep.subr.mxu0 %v1657
        %1934 = vmatpush1.msra.mxu0 %v1656
        %1935 = vmatprep.subr.mxu0 %v1661
        %1936 = vmatpush1.msra.mxu0 %v1660
        %1937 = vmatprep.subr.mxu0 %v1665
        %1938 = vmatpush1.msra.mxu0 %v1664
        %1939 = vmatprep.subr.mxu0 %v1669
        %1940 = vmatpush1.msra.mxu0 %v1668
        %1941 = vmatprep.subr.mxu0 %v1673
        %1942 = vmatpush1.msra.mxu0 %v1672
        %1943 = vmatprep.subr.mxu0 %v1677
        %1944 = vmatpush1.msra.mxu0 %v1676
        %1945 = vmatprep.subr.mxu0 %v1681
        %1946 = vmatpush1.msra.mxu0 %v1680
        %1947 = vmatprep.subr.mxu0 %v1685
        %1948 = vmatpush1.msra.mxu0 %v1684
        %1949 = vmatprep.subr.mxu0 %v1689
        %1950 = vmatpush1.msra.mxu0 %v1688
        %1951 = vmatprep.subr.mxu0 %v1693
        %1952 = vmatpush1.msra.mxu0 %v1692
        %1953 = vmatprep.subr.mxu0 %v1697
        %1954 = vmatpush1.msra.mxu0 %v1696
        %1955 = vmatprep.subr.mxu0 %v1701
        %1956 = vmatpush1.msra.mxu0 %v1700
        %1957 = vmatprep.subr.mxu0 %v1705
        %1958 = vmatpush1.msra.mxu0 %v1704
        %1959 = vmatprep.subr.mxu0 %v1709
        %1960 = vmatpush1.msra.mxu0 %v1708
        %1961 = vmatprep.subr.mxu0 %v1713
        %1962 = vmatpush1.msra.mxu0 %v1712
        %1963 = vmatprep.subr.mxu0 %v1717
        %1964 = vmatpush1.msra.mxu0 %v1716
        %1965 = vmatprep.subr.mxu0 %v1721
        %1966 = vmatpush1.msra.mxu0 %v1720
        %1967 = vmatprep.subr.mxu0 %v1725
        %1968 = vmatpush1.msra.mxu0 %v1724
        %1969 = vmatprep.subr.mxu0 %v1729
        %1970 = vmatpush1.msra.mxu0 %v1728
        %1971 = vmatprep.subr.mxu0 %v1733
        %1972 = vmatpush1.msra.mxu0 %v1732
        %1973 = vmatprep.subr.mxu0 %v1737
        %1974 = vmatpush1.msra.mxu0 %v1736
        %1975 = vmatprep.subr.mxu0 %v1741
        %1976 = vmatpush1.msra.mxu0 %v1740
        %1977 = vmatprep.subr.mxu0 %v1745
        %1978 = vmatpush1.msra.mxu0 %v1744
        %1979 = vmatprep.subr.mxu0 %v1749
        %1980 = vmatpush1.msra.mxu0 %v1748
        %1981 = vmatprep.subr.mxu0 %v1753
        %1982 = vmatpush1.msra.mxu0 %v1752
        %1983 = vmatprep.subr.mxu0 %v1757
        %1984 = vmatpush1.msra.mxu0 %v1756
        %1985 = vmatprep.subr.mxu0 %v1761
        %1986 = vmatpush1.msra.mxu0 %v1760
        %1987 = vmatprep.mubr.f32.mxu0 %v1603
        %1988 = vmatmul.mubr.f32.gmra.mrb[0].mxu0 %v1602
        %v1989 = vpop.f32.mrb[0].mxu0
        %v1990 = vadd.f32 0.0, %v1989
        %v1991 = vpop.f32.mrb[0].mxu0
        %v1992 = vadd.f32 0.0, %v1991
        %1993 = vmatprep.mubr.f32.mxu0 %v1605
        %1994 = vmatmul.mubr.f32.gmra.mrb[0].mxu0 %v1604
        %v1995 = vpop.f32.mrb[0].mxu0
        %v1996 = vadd.f32 0.0, %v1995
        %v1997 = vpop.f32.mrb[0].mxu0
        %v1998 = vadd.f32 0.0, %v1997
        %1999 = vmatprep.mubr.f32.mxu0 %v1607
        %2000 = vmatmul.mubr.f32.gmra.mrb[0].mxu0 %v1606
        %v2001 = vpop.f32.mrb[0].mxu0
        %v2002 = vadd.f32 0.0, %v2001
        %v2003 = vpop.f32.mrb[0].mxu0
        %v2004 = vadd.f32 0.0, %v2003
        %2005 = vmatprep.mubr.f32.mxu0 %v1609
        %2006 = vmatmul.mubr.f32.gmra.mrb[0].mxu0 %v1608
        %v2007 = vpop.f32.mrb[0].mxu0
        %v2008 = vadd.f32 0.0, %v2007
        %v2009 = vpop.f32.mrb[0].mxu0
        %v2010 = vadd.f32 0.0, %v2009
        %2011 = vmatprep.mubr.f32.mxu0 %v1611
        %2012 = vmatmul.mubr.f32.gmra.mrb[0].mxu0 %v1610
        %v2013 = vpop.f32.mrb[0].mxu0
        %v2014 = vadd.f32 0.0, %v2013
        %v2015 = vpop.f32.mrb[0].mxu0
        %v2016 = vadd.f32 0.0, %v2015
        %2017 = vmatprep.mubr.f32.mxu0 %v1613
        %2018 = vmatmul.mubr.f32.gmra.mrb[0].mxu0 %v1612
        %v2019 = vpop.f32.mrb[0].mxu0
        %v2020 = vadd.f32 0.0, %v2019
        %v2021 = vpop.f32.mrb[0].mxu0
        %v2022 = vadd.f32 0.0, %v2021
        %2023 = vmatprep.mubr.f32.mxu0 %v1615
        %2024 = vmatmul.mubr.f32.gmra.mrb[0].mxu0 %v1614
        %v2025 = vpop.f32.mrb[0].mxu0
        %v2026 = vadd.f32 0.0, %v2025
        %v2027 = vpop.f32.mrb[0].mxu0
        %v2028 = vadd.f32 0.0, %v2027
        %2029 = vmatprep.mubr.f32.mxu0 %v1617
        %2030 = vmatmul.mubr.f32.gmra.mrb[0].mxu0 %v1616
        %v2031 = vpop.f32.mrb[0].mxu0
        %v2032 = vadd.f32 0.0, %v2031
        %v2033 = vpop.f32.mrb[0].mxu0
        %v2034 = vadd.f32 0.0, %v2033
        %2035 = vmatprep.mubr.f32.mxu0 %v1619
        %2036 = vmatmul.mubr.f32.gmra.mrb[0].mxu0 %v1618
        %v2037 = vpop.f32.mrb[0].mxu0
        %v2038 = vadd.f32 0.0, %v2037
        %v2039 = vpop.f32.mrb[0].mxu0
        %v2040 = vadd.f32 0.0, %v2039
        %2041 = vmatprep.mubr.f32.mxu0 %v1621
        %2042 = vmatmul.mubr.f32.gmra.mrb[0].mxu0 %v1620
        %v2043 = vpop.f32.mrb[0].mxu0
        %v2044 = vadd.f32 0.0, %v2043
        %v2045 = vpop.f32.mrb[0].mxu0
        %v2046 = vadd.f32 0.0, %v2045
        %2047 = vmatprep.mubr.f32.mxu0 %v1623
        %2048 = vmatmul.mubr.f32.gmra.mrb[0].mxu0 %v1622
        %v2049 = vpop.f32.mrb[0].mxu0
        %v2050 = vadd.f32 0.0, %v2049
        %v2051 = vpop.f32.mrb[0].mxu0
        %v2052 = vadd.f32 0.0, %v2051
        %2053 = vmatprep.mubr.f32.mxu0 %v1625
        %2054 = vmatmul.mubr.f32.gmra.mrb[0].mxu0 %v1624
        %v2055 = vpop.f32.mrb[0].mxu0
        %v2056 = vadd.f32 0.0, %v2055
        %v2057 = vpop.f32.mrb[0].mxu0
        %v2058 = vadd.f32 0.0, %v2057
        %2059 = vmatprep.mubr.f32.mxu0 %v1627
        %2060 = vmatmul.mubr.f32.gmra.mrb[0].mxu0 %v1626
        %v2061 = vpop.f32.mrb[0].mxu0
        %v2062 = vadd.f32 0.0, %v2061
        %v2063 = vpop.f32.mrb[0].mxu0
        %v2064 = vadd.f32 0.0, %v2063
        %2065 = vmatprep.mubr.f32.mxu0 %v1629
        %2066 = vmatmul.mubr.f32.gmra.mrb[0].mxu0 %v1628
        %v2067 = vpop.f32.mrb[0].mxu0
        %v2068 = vadd.f32 0.0, %v2067
        %v2069 = vpop.f32.mrb[0].mxu0
        %v2070 = vadd.f32 0.0, %v2069
        %2071 = vmatprep.mubr.f32.mxu0 %v1631
        %2072 = vmatmul.mubr.f32.gmra.mrb[0].mxu0 %v1630
        %v2073 = vpop.f32.mrb[0].mxu0
        %v2074 = vadd.f32 0.0, %v2073
        %v2075 = vpop.f32.mrb[0].mxu0
        %v2076 = vadd.f32 0.0, %v2075
        %2077 = vmatprep.mubr.f32.mxu0 %v1633
        %2078 = vmatmul.mubr.f32.gmra.mrb[0].mxu0 %v1632
        %v2079 = vpop.f32.mrb[0].mxu0
        %v2080 = vadd.f32 0.0, %v2079
        %v2081 = vpop.f32.mrb[0].mxu0
        %v2082 = vadd.f32 0.0, %v2081
        %2083 = vdwg.mxu0
        %v2084 = vadd.f32 %v1829, %v1835
        %v2085 = vadd.f32 %v2084, %v1841
        %v2086 = vadd.f32 %v2085, %v1847
        %v2087 = vadd.f32 %v2086, %v1853
        %v2088 = vadd.f32 %v2087, %v1859
        %v2089 = vadd.f32 %v2088, %v1865
        %v2090 = vadd.f32 %v2089, %v1871
        %v2091 = vadd.f32 %v2090, %v1877
        %v2092 = vadd.f32 %v2091, %v1883
        %v2093 = vadd.f32 %v2092, %v1889
        %v2094 = vadd.f32 %v2093, %v1895
        %v2095 = vadd.f32 %v2094, %v1901
        %v2096 = vadd.f32 %v2095, %v1907
        %v2097 = vadd.f32 %v2096, %v1913
        %v2098 = vadd.f32 %v2097, %v1919
        %v2099 = vrot.slane %v2098, 4
        %v2100 = vadd.f32 %v2098, %v2099
        %v2101 = vrot.slane %v2100, 2
        %v2102 = vadd.f32 %v2100, %v2101
        %v2103 = vrot.slane %v2102, 1
        %v2104 = vadd.f32 %v2102, %v2103
        %v2105 = vadd.f32 %v1831, %v1837
        %v2106 = vadd.f32 %v2105, %v1843
        %v2107 = vadd.f32 %v2106, %v1849
        %v2108 = vadd.f32 %v2107, %v1855
        %v2109 = vadd.f32 %v2108, %v1861
        %v2110 = vadd.f32 %v2109, %v1867
        %v2111 = vadd.f32 %v2110, %v1873
        %v2112 = vadd.f32 %v2111, %v1879
        %v2113 = vadd.f32 %v2112, %v1885
        %v2114 = vadd.f32 %v2113, %v1891
        %v2115 = vadd.f32 %v2114, %v1897
        %v2116 = vadd.f32 %v2115, %v1903
        %v2117 = vadd.f32 %v2116, %v1909
        %v2118 = vadd.f32 %v2117, %v1915
        %v2119 = vadd.f32 %v2118, %v1921
        %v2120 = vrot.slane %v2119, 4
        %v2121 = vadd.f32 %v2119, %v2120
        %v2122 = vrot.slane %v2121, 2
        %v2123 = vadd.f32 %v2121, %v2122
        %v2124 = vrot.slane %v2123, 1
        %v2125 = vadd.f32 %v2123, %v2124
        %v2126 = vadd.f32 %v1990, %v1996
        %v2127 = vadd.f32 %v2126, %v2002
        %v2128 = vadd.f32 %v2127, %v2008
        %v2129 = vadd.f32 %v2128, %v2014
        %v2130 = vadd.f32 %v2129, %v2020
        %v2131 = vadd.f32 %v2130, %v2026
        %v2132 = vadd.f32 %v2131, %v2032
        %v2133 = vadd.f32 %v2132, %v2038
        %v2134 = vadd.f32 %v2133, %v2044
        %v2135 = vadd.f32 %v2134, %v2050
        %v2136 = vadd.f32 %v2135, %v2056
        %v2137 = vadd.f32 %v2136, %v2062
        %v2138 = vadd.f32 %v2137, %v2068
        %v2139 = vadd.f32 %v2138, %v2074
        %v2140 = vadd.f32 %v2139, %v2080
        %v2141 = vrot.slane %v2140, 4
        %v2142 = vadd.f32 %v2140, %v2141
        %v2143 = vrot.slane %v2142, 2
        %v2144 = vadd.f32 %v2142, %v2143
        %v2145 = vrot.slane %v2144, 1
        %v2146 = vadd.f32 %v2144, %v2145
        %v2147 = vadd.f32 %v1992, %v1998
        %v2148 = vadd.f32 %v2147, %v2004
        %v2149 = vadd.f32 %v2148, %v2010
        %v2150 = vadd.f32 %v2149, %v2016
        %v2151 = vadd.f32 %v2150, %v2022
        %v2152 = vadd.f32 %v2151, %v2028
        %v2153 = vadd.f32 %v2152, %v2034
        %v2154 = vadd.f32 %v2153, %v2040
        %v2155 = vadd.f32 %v2154, %v2046
        %v2156 = vadd.f32 %v2155, %v2052
        %v2157 = vadd.f32 %v2156, %v2058
        %v2158 = vadd.f32 %v2157, %v2064
        %v2159 = vadd.f32 %v2158, %v2070
        %v2160 = vadd.f32 %v2159, %v2076
        %v2161 = vadd.f32 %v2160, %v2082
        %v2162 = vrot.slane %v2161, 4
        %v2163 = vadd.f32 %v2161, %v2162
        %v2164 = vrot.slane %v2163, 2
        %v2165 = vadd.f32 %v2163, %v2164
        %v2166 = vrot.slane %v2165, 1
        %v2167 = vadd.f32 %v2165, %v2166
        %v2168 = vmul.f32 %v2104, 0.0078125
        %v2169 = vmul.f32 %v2125, 0.0078125
        %v2170 = vmul.f32 %v2146, 0.0078125
        %v2171 = vmul.f32 %v2167, 0.0078125
        %v2172 = vmul.f32 %v1829, %v1829
        %v2173 = vmul.f32 %v1831, %v1831
        %v2174 = vmul.f32 %v1990, %v1990
        %v2175 = vmul.f32 %v1992, %v1992
        %v2176 = vmul.f32 %v1835, %v1835
        %v2177 = vmul.f32 %v1837, %v1837
        %v2178 = vmul.f32 %v1996, %v1996
        %v2179 = vmul.f32 %v1998, %v1998
        %v2180 = vmul.f32 %v1841, %v1841
        %v2181 = vmul.f32 %v1843, %v1843
        %v2182 = vmul.f32 %v2002, %v2002
        %v2183 = vmul.f32 %v2004, %v2004
        %v2184 = vmul.f32 %v1847, %v1847
        %v2185 = vmul.f32 %v1849, %v1849
        %v2186 = vmul.f32 %v2008, %v2008
        %v2187 = vmul.f32 %v2010, %v2010
        %v2188 = vmul.f32 %v1853, %v1853
        %v2189 = vmul.f32 %v1855, %v1855
        %v2190 = vmul.f32 %v2014, %v2014
        %v2191 = vmul.f32 %v2016, %v2016
        %v2192 = vmul.f32 %v1859, %v1859
        %v2193 = vmul.f32 %v1861, %v1861
        %v2194 = vmul.f32 %v2020, %v2020
        %v2195 = vmul.f32 %v2022, %v2022
        %v2196 = vmul.f32 %v1865, %v1865
        %v2197 = vmul.f32 %v1867, %v1867
        %v2198 = vmul.f32 %v2026, %v2026
        %v2199 = vmul.f32 %v2028, %v2028
        %v2200 = vmul.f32 %v1871, %v1871
        %v2201 = vmul.f32 %v1873, %v1873
        %v2202 = vmul.f32 %v2032, %v2032
        %v2203 = vmul.f32 %v2034, %v2034
        %v2204 = vmul.f32 %v1877, %v1877
        %v2205 = vmul.f32 %v1879, %v1879
        %v2206 = vmul.f32 %v2038, %v2038
        %v2207 = vmul.f32 %v2040, %v2040
        %v2208 = vmul.f32 %v1883, %v1883
        %v2209 = vmul.f32 %v1885, %v1885
        %v2210 = vmul.f32 %v2044, %v2044
        %v2211 = vmul.f32 %v2046, %v2046
        %v2212 = vmul.f32 %v1889, %v1889
        %v2213 = vmul.f32 %v1891, %v1891
        %v2214 = vmul.f32 %v2050, %v2050
        %v2215 = vmul.f32 %v2052, %v2052
        %v2216 = vmul.f32 %v1895, %v1895
        %v2217 = vmul.f32 %v1897, %v1897
        %v2218 = vmul.f32 %v2056, %v2056
        %v2219 = vmul.f32 %v2058, %v2058
        %v2220 = vmul.f32 %v1901, %v1901
        %v2221 = vmul.f32 %v1903, %v1903
        %v2222 = vmul.f32 %v2062, %v2062
        %v2223 = vmul.f32 %v2064, %v2064
        %v2224 = vmul.f32 %v1907, %v1907
        %v2225 = vmul.f32 %v1909, %v1909
        %v2226 = vmul.f32 %v2068, %v2068
        %v2227 = vmul.f32 %v2070, %v2070
        %v2228 = vmul.f32 %v1913, %v1913
        %v2229 = vmul.f32 %v1915, %v1915
        %v2230 = vmul.f32 %v2074, %v2074
        %v2231 = vmul.f32 %v2076, %v2076
        %v2232 = vmul.f32 %v1919, %v1919
        %v2233 = vmul.f32 %v1921, %v1921
        %v2234 = vmul.f32 %v2080, %v2080
        %v2235 = vmul.f32 %v2082, %v2082
        %v2236 = vadd.f32 %v2172, %v2176
        %v2237 = vadd.f32 %v2236, %v2180
        %v2238 = vadd.f32 %v2237, %v2184
        %v2239 = vadd.f32 %v2238, %v2188
        %v2240 = vadd.f32 %v2239, %v2192
        %v2241 = vadd.f32 %v2240, %v2196
        %v2242 = vadd.f32 %v2241, %v2200
        %v2243 = vadd.f32 %v2242, %v2204
        %v2244 = vadd.f32 %v2243, %v2208
        %v2245 = vadd.f32 %v2244, %v2212
        %v2246 = vadd.f32 %v2245, %v2216
        %v2247 = vadd.f32 %v2246, %v2220
        %v2248 = vadd.f32 %v2247, %v2224
        %v2249 = vadd.f32 %v2248, %v2228
        %v2250 = vadd.f32 %v2249, %v2232
        %v2251 = vrot.slane %v2250, 4
        %v2252 = vadd.f32 %v2250, %v2251
        %v2253 = vrot.slane %v2252, 2
        %v2254 = vadd.f32 %v2252, %v2253
        %v2255 = vrot.slane %v2254, 1
        %v2256 = vadd.f32 %v2254, %v2255
        %v2257 = vadd.f32 %v2173, %v2177
        %v2258 = vadd.f32 %v2257, %v2181
        %v2259 = vadd.f32 %v2258, %v2185
        %v2260 = vadd.f32 %v2259, %v2189
        %v2261 = vadd.f32 %v2260, %v2193
        %v2262 = vadd.f32 %v2261, %v2197
        %v2263 = vadd.f32 %v2262, %v2201
        %v2264 = vadd.f32 %v2263, %v2205
        %v2265 = vadd.f32 %v2264, %v2209
        %v2266 = vadd.f32 %v2265, %v2213
        %v2267 = vadd.f32 %v2266, %v2217
        %v2268 = vadd.f32 %v2267, %v2221
        %v2269 = vadd.f32 %v2268, %v2225
        %v2270 = vadd.f32 %v2269, %v2229
        %v2271 = vadd.f32 %v2270, %v2233
        %v2272 = vrot.slane %v2271, 4
        %v2273 = vadd.f32 %v2271, %v2272
        %v2274 = vrot.slane %v2273, 2
        %v2275 = vadd.f32 %v2273, %v2274
        %v2276 = vrot.slane %v2275, 1
        %v2277 = vadd.f32 %v2275, %v2276
        %v2278 = vadd.f32 %v2174, %v2178
        %v2279 = vadd.f32 %v2278, %v2182
        %v2280 = vadd.f32 %v2279, %v2186
        %v2281 = vadd.f32 %v2280, %v2190
        %v2282 = vadd.f32 %v2281, %v2194
        %v2283 = vadd.f32 %v2282, %v2198
        %v2284 = vadd.f32 %v2283, %v2202
        %v2285 = vadd.f32 %v2284, %v2206
        %v2286 = vadd.f32 %v2285, %v2210
        %v2287 = vadd.f32 %v2286, %v2214
        %v2288 = vadd.f32 %v2287, %v2218
        %v2289 = vadd.f32 %v2288, %v2222
        %v2290 = vadd.f32 %v2289, %v2226
        %v2291 = vadd.f32 %v2290, %v2230
        %v2292 = vadd.f32 %v2291, %v2234
        %v2293 = vrot.slane %v2292, 4
        %v2294 = vadd.f32 %v2292, %v2293
        %v2295 = vrot.slane %v2294, 2
        %v2296 = vadd.f32 %v2294, %v2295
        %v2297 = vrot.slane %v2296, 1
        %v2298 = vadd.f32 %v2296, %v2297
        %v2299 = vadd.f32 %v2175, %v2179
        %v2300 = vadd.f32 %v2299, %v2183
        %v2301 = vadd.f32 %v2300, %v2187
        %v2302 = vadd.f32 %v2301, %v2191
        %v2303 = vadd.f32 %v2302, %v2195
        %v2304 = vadd.f32 %v2303, %v2199
        %v2305 = vadd.f32 %v2304, %v2203
        %v2306 = vadd.f32 %v2305, %v2207
        %v2307 = vadd.f32 %v2306, %v2211
        %v2308 = vadd.f32 %v2307, %v2215
        %v2309 = vadd.f32 %v2308, %v2219
        %v2310 = vadd.f32 %v2309, %v2223
        %v2311 = vadd.f32 %v2310, %v2227
        %v2312 = vadd.f32 %v2311, %v2231
        %v2313 = vadd.f32 %v2312, %v2235
        %v2314 = vrot.slane %v2313, 4
        %v2315 = vadd.f32 %v2313, %v2314
        %v2316 = vrot.slane %v2315, 2
        %v2317 = vadd.f32 %v2315, %v2316
        %v2318 = vrot.slane %v2317, 1
        %v2319 = vadd.f32 %v2317, %v2318
        %v2320 = vmul.f32 %v2256, 0.0078125
        %v2321 = vmul.f32 %v2277, 0.0078125
        %v2322 = vmul.f32 %v2298, 0.0078125
        %v2323 = vmul.f32 %v2319, 0.0078125
        %v2324 = vmul.f32 %v2168, %v2168
        %v2325 = vmul.f32 %v2169, %v2169
        %v2326 = vmul.f32 %v2170, %v2170
        %v2327 = vmul.f32 %v2171, %v2171
        %v2328 = vsub.f32 %v2320, %v2324
        %v2329 = vsub.f32 %v2321, %v2325
        %v2330 = vsub.f32 %v2322, %v2326
        %v2331 = vsub.f32 %v2323, %v2327
        %v2332 = vmax.f32 %v2328, 0.0
        %v2333 = vmax.f32 %v2329, 0.0
        %v2334 = vmax.f32 %v2330, 0.0
        %v2335 = vmax.f32 %v2331, 0.0
        %v2336 = vld [vmem:[#allocation14] ss:$2 sm:$0xf]
        %s2337 = scalar_lea.vmem [#allocation14], 1
        %v2338 = vld [vmem:[%s2337] ss:$2 sm:$0xf]
        %v2339 = vadd.f32 %v2332, 1e-05
        %v2340 = vadd.f32 %v2333, 1e-05
        %v2341 = vadd.f32 %v2334, 1e-05
        %v2342 = vadd.f32 %v2335, 1e-05
        %v2343 = vrsqrt.pop %v2339
        %v2344 = vrsqrt.pop %v2340
        %v2345 = vrsqrt.pop %v2341
        %v2346 = vrsqrt.pop %v2342
        %v2351 = vcombine.low %v2343, %v2344
        %v2352 = vcombine.low %v2345, %v2346
        %v2354 = vunpack.c.l.s4 1966171168
        %v2355 = vunpack.c.0.s8 %v2354
        %v2356 = vlaneseq
        %v2357 = vshrl.u32 %v2356, 7
        %v2358 = vsub.s32 %v2355, %v2357
        %v2359 = vrot.slane %v2351, %v2358
        %v2361 = vunpack.c.l.s4 1966171168
        %v2362 = vunpack.c.0.s8 %v2361
        %v2363 = vlaneseq
        %v2364 = vshrl.u32 %v2363, 7
        %v2365 = vsub.s32 %v2362, %v2364
        %v2366 = vrot.slane %v2352, %v2365
        %v2367 = vcombine.low %v2359, %v2366
        %v2369 = vunpack.c.l.s4 1966171168
        %v2370 = vunpack.c.0.s8 %v2369
        %v2371 = vlaneseq
        %v2372 = vshrl.u32 %v2371, 7
        %v2373 = vsub.s32 %v2370, %v2372
        %v2374 = vrot.slane %v2367, %v2373
        %v2376 = vmul.f32 %v2336, %v2374
        %v2378 = vlaneseq
        %v2379 = vshrl.u32 %v2378, 7
        %v2380 = vsub.s32 0, %v2379
        %v2381 = vrot.slane %v2376, %v2380
        %v2382 = vlaneseq
        %v2383 = vshrl.u32 %v2382, 7
        %v2384 = vsub.s32 1, %v2383
        %v2385 = vrot.slane %v2376, %v2384
        %v2386 = vlaneseq
        %v2387 = vshrl.u32 %v2386, 7
        %v2388 = vsub.s32 2, %v2387
        %v2389 = vrot.slane %v2376, %v2388
        %v2390 = vlaneseq
        %v2391 = vshrl.u32 %v2390, 7
        %v2392 = vsub.s32 3, %v2391
        %v2393 = vrot.slane %v2376, %v2392
        %v2398 = vmul.f32 %v2168, %v2381
        %v2399 = vmul.f32 %v2169, %v2385
        %v2400 = vmul.f32 %v2170, %v2389
        %v2401 = vmul.f32 %v2171, %v2393
        %v2406 = vcombine.low %v2398, %v2399
        %v2407 = vcombine.low %v2400, %v2401
        %v2409 = vunpack.c.l.s4 1966171168
        %v2410 = vunpack.c.0.s8 %v2409
        %v2411 = vlaneseq
        %v2412 = vshrl.u32 %v2411, 7
        %v2413 = vsub.s32 %v2410, %v2412
        %v2414 = vrot.slane %v2406, %v2413
        %v2416 = vunpack.c.l.s4 1966171168
        %v2417 = vunpack.c.0.s8 %v2416
        %v2418 = vlaneseq
        %v2419 = vshrl.u32 %v2418, 7
        %v2420 = vsub.s32 %v2417, %v2419
        %v2421 = vrot.slane %v2407, %v2420
        %v2422 = vcombine.low %v2414, %v2421
        %v2424 = vunpack.c.l.s4 1966171168
        %v2425 = vunpack.c.0.s8 %v2424
        %v2426 = vlaneseq
        %v2427 = vshrl.u32 %v2426, 7
        %v2428 = vsub.s32 %v2425, %v2427
        %v2429 = vrot.slane %v2422, %v2428
        %v2431 = vsub.f32 %v2338, %v2429
        %v2432 = vmul.f32 %v1829, %v2381
        %v2433 = vmul.f32 %v1831, %v2385
        %v2434 = vmul.f32 %v1990, %v2389
        %v2435 = vmul.f32 %v1992, %v2393
        %v2436 = vmul.f32 %v1835, %v2381
        %v2437 = vmul.f32 %v1837, %v2385
        %v2438 = vmul.f32 %v1996, %v2389
        %v2439 = vmul.f32 %v1998, %v2393
        %v2440 = vmul.f32 %v1841, %v2381
        %v2441 = vmul.f32 %v1843, %v2385
        %v2442 = vmul.f32 %v2002, %v2389
        %v2443 = vmul.f32 %v2004, %v2393
        %v2444 = vmul.f32 %v1847, %v2381
        %v2445 = vmul.f32 %v1849, %v2385
        %v2446 = vmul.f32 %v2008, %v2389
        %v2447 = vmul.f32 %v2010, %v2393
        %v2448 = vmul.f32 %v1853, %v2381
        %v2449 = vmul.f32 %v1855, %v2385
        %v2450 = vmul.f32 %v2014, %v2389
        %v2451 = vmul.f32 %v2016, %v2393
        %v2452 = vmul.f32 %v1859, %v2381
        %v2453 = vmul.f32 %v1861, %v2385
        %v2454 = vmul.f32 %v2020, %v2389
        %v2455 = vmul.f32 %v2022, %v2393
        %v2456 = vmul.f32 %v1865, %v2381
        %v2457 = vmul.f32 %v1867, %v2385
        %v2458 = vmul.f32 %v2026, %v2389
        %v2459 = vmul.f32 %v2028, %v2393
        %v2460 = vmul.f32 %v1871, %v2381
        %v2461 = vmul.f32 %v1873, %v2385
        %v2462 = vmul.f32 %v2032, %v2389
        %v2463 = vmul.f32 %v2034, %v2393
        %v2464 = vmul.f32 %v1877, %v2381
        %v2465 = vmul.f32 %v1879, %v2385
        %v2466 = vmul.f32 %v2038, %v2389
        %v2467 = vmul.f32 %v2040, %v2393
        %v2468 = vmul.f32 %v1883, %v2381
        %v2469 = vmul.f32 %v1885, %v2385
        %v2470 = vmul.f32 %v2044, %v2389
        %v2471 = vmul.f32 %v2046, %v2393
        %v2472 = vmul.f32 %v1889, %v2381
        %v2473 = vmul.f32 %v1891, %v2385
        %v2474 = vmul.f32 %v2050, %v2389
        %v2475 = vmul.f32 %v2052, %v2393
        %v2476 = vmul.f32 %v1895, %v2381
        %v2477 = vmul.f32 %v1897, %v2385
        %v2478 = vmul.f32 %v2056, %v2389
        %v2479 = vmul.f32 %v2058, %v2393
        %v2480 = vmul.f32 %v1901, %v2381
        %v2481 = vmul.f32 %v1903, %v2385
        %v2482 = vmul.f32 %v2062, %v2389
        %v2483 = vmul.f32 %v2064, %v2393
        %v2484 = vmul.f32 %v1907, %v2381
        %v2485 = vmul.f32 %v1909, %v2385
        %v2486 = vmul.f32 %v2068, %v2389
        %v2487 = vmul.f32 %v2070, %v2393
        %v2488 = vmul.f32 %v1913, %v2381
        %v2489 = vmul.f32 %v1915, %v2385
        %v2490 = vmul.f32 %v2074, %v2389
        %v2491 = vmul.f32 %v2076, %v2393
        %v2492 = vmul.f32 %v1919, %v2381
        %v2493 = vmul.f32 %v1921, %v2385
        %v2494 = vmul.f32 %v2080, %v2389
        %v2495 = vmul.f32 %v2082, %v2393
        %v2497 = vlaneseq
        %v2498 = vshrl.u32 %v2497, 7
        %v2499 = vsub.s32 0, %v2498
        %v2500 = vrot.slane %v2431, %v2499
        %v2501 = vlaneseq
        %v2502 = vshrl.u32 %v2501, 7
        %v2503 = vsub.s32 1, %v2502
        %v2504 = vrot.slane %v2431, %v2503
        %v2505 = vlaneseq
        %v2506 = vshrl.u32 %v2505, 7
        %v2507 = vsub.s32 2, %v2506
        %v2508 = vrot.slane %v2431, %v2507
        %v2509 = vlaneseq
        %v2510 = vshrl.u32 %v2509, 7
        %v2511 = vsub.s32 3, %v2510
        %v2512 = vrot.slane %v2431, %v2511
        %v2517 = vadd.f32 %v2432, %v2500
        %v2518 = vadd.f32 %v2433, %v2504
        %v2519 = vadd.f32 %v2434, %v2508
        %v2520 = vadd.f32 %v2435, %v2512
        %v2521 = vadd.f32 %v2436, %v2500
        %v2522 = vadd.f32 %v2437, %v2504
        %v2523 = vadd.f32 %v2438, %v2508
        %v2524 = vadd.f32 %v2439, %v2512
        %v2525 = vadd.f32 %v2440, %v2500
        %v2526 = vadd.f32 %v2441, %v2504
        %v2527 = vadd.f32 %v2442, %v2508
        %v2528 = vadd.f32 %v2443, %v2512
        %v2529 = vadd.f32 %v2444, %v2500
        %v2530 = vadd.f32 %v2445, %v2504
        %v2531 = vadd.f32 %v2446, %v2508
        %v2532 = vadd.f32 %v2447, %v2512
        %v2533 = vadd.f32 %v2448, %v2500
        %v2534 = vadd.f32 %v2449, %v2504
        %v2535 = vadd.f32 %v2450, %v2508
        %v2536 = vadd.f32 %v2451, %v2512
        %v2537 = vadd.f32 %v2452, %v2500
        %v2538 = vadd.f32 %v2453, %v2504
        %v2539 = vadd.f32 %v2454, %v2508
        %v2540 = vadd.f32 %v2455, %v2512
        %v2541 = vadd.f32 %v2456, %v2500
        %v2542 = vadd.f32 %v2457, %v2504
        %v2543 = vadd.f32 %v2458, %v2508
        %v2544 = vadd.f32 %v2459, %v2512
        %v2545 = vadd.f32 %v2460, %v2500
        %v2546 = vadd.f32 %v2461, %v2504
        %v2547 = vadd.f32 %v2462, %v2508
        %v2548 = vadd.f32 %v2463, %v2512
        %v2549 = vadd.f32 %v2464, %v2500
        %v2550 = vadd.f32 %v2465, %v2504
        %v2551 = vadd.f32 %v2466, %v2508
        %v2552 = vadd.f32 %v2467, %v2512
        %v2553 = vadd.f32 %v2468, %v2500
        %v2554 = vadd.f32 %v2469, %v2504
        %v2555 = vadd.f32 %v2470, %v2508
        %v2556 = vadd.f32 %v2471, %v2512
        %v2557 = vadd.f32 %v2472, %v2500
        %v2558 = vadd.f32 %v2473, %v2504
        %v2559 = vadd.f32 %v2474, %v2508
        %v2560 = vadd.f32 %v2475, %v2512
        %v2561 = vadd.f32 %v2476, %v2500
        %v2562 = vadd.f32 %v2477, %v2504
        %v2563 = vadd.f32 %v2478, %v2508
        %v2564 = vadd.f32 %v2479, %v2512
        %v2565 = vadd.f32 %v2480, %v2500
        %v2566 = vadd.f32 %v2481, %v2504
        %v2567 = vadd.f32 %v2482, %v2508
        %v2568 = vadd.f32 %v2483, %v2512
        %v2569 = vadd.f32 %v2484, %v2500
        %v2570 = vadd.f32 %v2485, %v2504
        %v2571 = vadd.f32 %v2486, %v2508
        %v2572 = vadd.f32 %v2487, %v2512
        %v2573 = vadd.f32 %v2488, %v2500
        %v2574 = vadd.f32 %v2489, %v2504
        %v2575 = vadd.f32 %v2490, %v2508
        %v2576 = vadd.f32 %v2491, %v2512
        %v2577 = vadd.f32 %v2492, %v2500
        %v2578 = vadd.f32 %v2493, %v2504
        %v2579 = vadd.f32 %v2494, %v2508
        %v2580 = vadd.f32 %v2495, %v2512
        %v2581 = vmax.f32 %v2517, 0.0
        %v2582 = vmax.f32 %v2518, 0.0
        %v2583 = vmax.f32 %v2519, 0.0
        %v2584 = vmax.f32 %v2520, 0.0
        %v2585 = vmax.f32 %v2521, 0.0
        %v2586 = vmax.f32 %v2522, 0.0
        %v2587 = vmax.f32 %v2523, 0.0
        %v2588 = vmax.f32 %v2524, 0.0
        %v2589 = vmax.f32 %v2525, 0.0
        %v2590 = vmax.f32 %v2526, 0.0
        %v2591 = vmax.f32 %v2527, 0.0
        %v2592 = vmax.f32 %v2528, 0.0
        %v2593 = vmax.f32 %v2529, 0.0
        %v2594 = vmax.f32 %v2530, 0.0
        %v2595 = vmax.f32 %v2531, 0.0
        %v2596 = vmax.f32 %v2532, 0.0
        %v2597 = vmax.f32 %v2533, 0.0
        %v2598 = vmax.f32 %v2534, 0.0
        %v2599 = vmax.f32 %v2535, 0.0
        %v2600 = vmax.f32 %v2536, 0.0
        %v2601 = vmax.f32 %v2537, 0.0
        %v2602 = vmax.f32 %v2538, 0.0
        %v2603 = vmax.f32 %v2539, 0.0
        %v2604 = vmax.f32 %v2540, 0.0
        %v2605 = vmax.f32 %v2541, 0.0
        %v2606 = vmax.f32 %v2542, 0.0
        %v2607 = vmax.f32 %v2543, 0.0
        %v2608 = vmax.f32 %v2544, 0.0
        %v2609 = vmax.f32 %v2545, 0.0
        %v2610 = vmax.f32 %v2546, 0.0
        %v2611 = vmax.f32 %v2547, 0.0
        %v2612 = vmax.f32 %v2548, 0.0
        %v2613 = vmax.f32 %v2549, 0.0
        %v2614 = vmax.f32 %v2550, 0.0
        %v2615 = vmax.f32 %v2551, 0.0
        %v2616 = vmax.f32 %v2552, 0.0
        %v2617 = vmax.f32 %v2553, 0.0
        %v2618 = vmax.f32 %v2554, 0.0
        %v2619 = vmax.f32 %v2555, 0.0
        %v2620 = vmax.f32 %v2556, 0.0
        %v2621 = vmax.f32 %v2557, 0.0
        %v2622 = vmax.f32 %v2558, 0.0
        %v2623 = vmax.f32 %v2559, 0.0
        %v2624 = vmax.f32 %v2560, 0.0
        %v2625 = vmax.f32 %v2561, 0.0
        %v2626 = vmax.f32 %v2562, 0.0
        %v2627 = vmax.f32 %v2563, 0.0
        %v2628 = vmax.f32 %v2564, 0.0
        %v2629 = vmax.f32 %v2565, 0.0
        %v2630 = vmax.f32 %v2566, 0.0
        %v2631 = vmax.f32 %v2567, 0.0
        %v2632 = vmax.f32 %v2568, 0.0
        %v2633 = vmax.f32 %v2569, 0.0
        %v2634 = vmax.f32 %v2570, 0.0
        %v2635 = vmax.f32 %v2571, 0.0
        %v2636 = vmax.f32 %v2572, 0.0
        %v2637 = vmax.f32 %v2573, 0.0
        %v2638 = vmax.f32 %v2574, 0.0
        %v2639 = vmax.f32 %v2575, 0.0
        %v2640 = vmax.f32 %v2576, 0.0
        %v2641 = vmax.f32 %v2577, 0.0
        %v2642 = vmax.f32 %v2578, 0.0
        %v2643 = vmax.f32 %v2579, 0.0
        %v2644 = vmax.f32 %v2580, 0.0
        %v2645 = vld [vmem:[#allocation16] sm:$0xff]
        %v2646 = vld [vmem:[#allocation16 + $0x8] sm:$0xff]
        %v2647 = vld [vmem:[#allocation16 + $0x10] sm:$0xff]
        %v2648 = vld [vmem:[#allocation16 + $0x18] sm:$0xff]
        %v2649 = vld [vmem:[#allocation16 + $0x20] sm:$0xff]
        %v2650 = vld [vmem:[#allocation16 + $0x28] sm:$0xff]
        %v2651 = vld [vmem:[#allocation16 + $0x30] sm:$0xff]
        %v2652 = vld [vmem:[#allocation16 + $0x38] sm:$0xff]
        %v2653 = vld [vmem:[#allocation16 + $0x40] sm:$0xff]
        %v2654 = vld [vmem:[#allocation16 + $0x48] sm:$0xff]
        %v2655 = vld [vmem:[#allocation16 + $0x50] sm:$0xff]
        %v2656 = vld [vmem:[#allocation16 + $0x58] sm:$0xff]
        %v2657 = vld [vmem:[#allocation16 + $0x60] sm:$0xff]
        %v2658 = vld [vmem:[#allocation16 + $0x68] sm:$0xff]
        %v2659 = vld [vmem:[#allocation16 + $0x70] sm:$0xff]
        %v2660 = vld [vmem:[#allocation16 + $0x78] sm:$0xff]
        %v2661 = vld [vmem:[#allocation16 + $0x80] sm:$0xff]
        %v2662 = vld [vmem:[#allocation16 + $0x88] sm:$0xff]
        %v2663 = vld [vmem:[#allocation16 + $0x90] sm:$0xff]
        %v2664 = vld [vmem:[#allocation16 + $0x98] sm:$0xff]
        %v2665 = vld [vmem:[#allocation16 + $0xa0] sm:$0xff]
        %v2666 = vld [vmem:[#allocation16 + $0xa8] sm:$0xff]
        %v2667 = vld [vmem:[#allocation16 + $0xb0] sm:$0xff]
        %v2668 = vld [vmem:[#allocation16 + $0xb8] sm:$0xff]
        %v2669 = vld [vmem:[#allocation16 + $0xc0] sm:$0xff]
        %v2670 = vld [vmem:[#allocation16 + $0xc8] sm:$0xff]
        %v2671 = vld [vmem:[#allocation16 + $0xd0] sm:$0xff]
        %v2672 = vld [vmem:[#allocation16 + $0xd8] sm:$0xff]
        %v2673 = vld [vmem:[#allocation16 + $0xe0] sm:$0xff]
        %v2674 = vld [vmem:[#allocation16 + $0xe8] sm:$0xff]
        %v2675 = vld [vmem:[#allocation16 + $0xf0] sm:$0xff]
        %v2676 = vld [vmem:[#allocation16 + $0xf8] sm:$0xff]
        %v2677 = vld [vmem:[#allocation16 + $0x100] sm:$0xff]
        %v2678 = vld [vmem:[#allocation16 + $0x108] sm:$0xff]
        %v2679 = vld [vmem:[#allocation16 + $0x110] sm:$0xff]
        %v2680 = vld [vmem:[#allocation16 + $0x118] sm:$0xff]
        %v2681 = vld [vmem:[#allocation16 + $0x120] sm:$0xff]
        %v2682 = vld [vmem:[#allocation16 + $0x128] sm:$0xff]
        %v2683 = vld [vmem:[#allocation16 + $0x130] sm:$0xff]
        %v2684 = vld [vmem:[#allocation16 + $0x138] sm:$0xff]
        %v2685 = vld [vmem:[#allocation16 + $0x140] sm:$0xff]
        %v2686 = vld [vmem:[#allocation16 + $0x148] sm:$0xff]
        %v2687 = vld [vmem:[#allocation16 + $0x150] sm:$0xff]
        %v2688 = vld [vmem:[#allocation16 + $0x158] sm:$0xff]
        %v2689 = vld [vmem:[#allocation16 + $0x160] sm:$0xff]
        %v2690 = vld [vmem:[#allocation16 + $0x168] sm:$0xff]
        %v2691 = vld [vmem:[#allocation16 + $0x170] sm:$0xff]
        %v2692 = vld [vmem:[#allocation16 + $0x178] sm:$0xff]
        %v2693 = vld [vmem:[#allocation16 + $0x180] sm:$0xff]
        %v2694 = vld [vmem:[#allocation16 + $0x188] sm:$0xff]
        %v2695 = vld [vmem:[#allocation16 + $0x190] sm:$0xff]
        %v2696 = vld [vmem:[#allocation16 + $0x198] sm:$0xff]
        %v2697 = vld [vmem:[#allocation16 + $0x1a0] sm:$0xff]
        %v2698 = vld [vmem:[#allocation16 + $0x1a8] sm:$0xff]
        %v2699 = vld [vmem:[#allocation16 + $0x1b0] sm:$0xff]
        %v2700 = vld [vmem:[#allocation16 + $0x1b8] sm:$0xff]
        %v2701 = vld [vmem:[#allocation16 + $0x1c0] sm:$0xff]
        %v2702 = vld [vmem:[#allocation16 + $0x1c8] sm:$0xff]
        %v2703 = vld [vmem:[#allocation16 + $0x1d0] sm:$0xff]
        %v2704 = vld [vmem:[#allocation16 + $0x1d8] sm:$0xff]
        %v2705 = vld [vmem:[#allocation16 + $0x1e0] sm:$0xff]
        %v2706 = vld [vmem:[#allocation16 + $0x1e8] sm:$0xff]
        %v2707 = vld [vmem:[#allocation16 + $0x1f0] sm:$0xff]
        %v2708 = vld [vmem:[#allocation16 + $0x1f8] sm:$0xff]
        %v2709 = vld [vmem:[#allocation16 + $0x200] sm:$0xff]
        %v2710 = vld [vmem:[#allocation16 + $0x208] sm:$0xff]
        %v2711 = vld [vmem:[#allocation16 + $0x210] sm:$0xff]
        %v2712 = vld [vmem:[#allocation16 + $0x218] sm:$0xff]
        %v2713 = vld [vmem:[#allocation16 + $0x220] sm:$0xff]
        %v2714 = vld [vmem:[#allocation16 + $0x228] sm:$0xff]
        %v2715 = vld [vmem:[#allocation16 + $0x230] sm:$0xff]
        %v2716 = vld [vmem:[#allocation16 + $0x238] sm:$0xff]
        %v2717 = vld [vmem:[#allocation16 + $0x240] sm:$0xff]
        %v2718 = vld [vmem:[#allocation16 + $0x248] sm:$0xff]
        %v2719 = vld [vmem:[#allocation16 + $0x250] sm:$0xff]
        %v2720 = vld [vmem:[#allocation16 + $0x258] sm:$0xff]
        %v2721 = vld [vmem:[#allocation16 + $0x260] sm:$0xff]
        %v2722 = vld [vmem:[#allocation16 + $0x268] sm:$0xff]
        %v2723 = vld [vmem:[#allocation16 + $0x270] sm:$0xff]
        %v2724 = vld [vmem:[#allocation16 + $0x278] sm:$0xff]
        %v2725 = vld [vmem:[#allocation16 + $0x280] sm:$0xff]
        %v2726 = vld [vmem:[#allocation16 + $0x288] sm:$0xff]
        %v2727 = vld [vmem:[#allocation16 + $0x290] sm:$0xff]
        %v2728 = vld [vmem:[#allocation16 + $0x298] sm:$0xff]
        %v2729 = vld [vmem:[#allocation16 + $0x2a0] sm:$0xff]
        %v2730 = vld [vmem:[#allocation16 + $0x2a8] sm:$0xff]
        %v2731 = vld [vmem:[#allocation16 + $0x2b0] sm:$0xff]
        %v2732 = vld [vmem:[#allocation16 + $0x2b8] sm:$0xff]
        %v2733 = vld [vmem:[#allocation16 + $0x2c0] sm:$0xff]
        %v2734 = vld [vmem:[#allocation16 + $0x2c8] sm:$0xff]
        %v2735 = vld [vmem:[#allocation16 + $0x2d0] sm:$0xff]
        %v2736 = vld [vmem:[#allocation16 + $0x2d8] sm:$0xff]
        %v2737 = vld [vmem:[#allocation16 + $0x2e0] sm:$0xff]
        %v2738 = vld [vmem:[#allocation16 + $0x2e8] sm:$0xff]
        %v2739 = vld [vmem:[#allocation16 + $0x2f0] sm:$0xff]
        %v2740 = vld [vmem:[#allocation16 + $0x2f8] sm:$0xff]
        %v2741 = vld [vmem:[#allocation16 + $0x300] sm:$0xff]
        %v2742 = vld [vmem:[#allocation16 + $0x308] sm:$0xff]
        %v2743 = vld [vmem:[#allocation16 + $0x310] sm:$0xff]
        %v2744 = vld [vmem:[#allocation16 + $0x318] sm:$0xff]
        %v2745 = vld [vmem:[#allocation16 + $0x320] sm:$0xff]
        %v2746 = vld [vmem:[#allocation16 + $0x328] sm:$0xff]
        %v2747 = vld [vmem:[#allocation16 + $0x330] sm:$0xff]
        %v2748 = vld [vmem:[#allocation16 + $0x338] sm:$0xff]
        %v2749 = vld [vmem:[#allocation16 + $0x340] sm:$0xff]
        %v2750 = vld [vmem:[#allocation16 + $0x348] sm:$0xff]
        %v2751 = vld [vmem:[#allocation16 + $0x350] sm:$0xff]
        %v2752 = vld [vmem:[#allocation16 + $0x358] sm:$0xff]
        %v2753 = vld [vmem:[#allocation16 + $0x360] sm:$0xff]
        %v2754 = vld [vmem:[#allocation16 + $0x368] sm:$0xff]
        %v2755 = vld [vmem:[#allocation16 + $0x370] sm:$0xff]
        %v2756 = vld [vmem:[#allocation16 + $0x378] sm:$0xff]
        %v2757 = vld [vmem:[#allocation16 + $0x380] sm:$0xff]
        %v2758 = vld [vmem:[#allocation16 + $0x388] sm:$0xff]
        %v2759 = vld [vmem:[#allocation16 + $0x390] sm:$0xff]
        %v2760 = vld [vmem:[#allocation16 + $0x398] sm:$0xff]
        %v2761 = vld [vmem:[#allocation16 + $0x3a0] sm:$0xff]
        %v2762 = vld [vmem:[#allocation16 + $0x3a8] sm:$0xff]
        %v2763 = vld [vmem:[#allocation16 + $0x3b0] sm:$0xff]
        %v2764 = vld [vmem:[#allocation16 + $0x3b8] sm:$0xff]
        %v2765 = vld [vmem:[#allocation16 + $0x3c0] sm:$0xff]
        %v2766 = vld [vmem:[#allocation16 + $0x3c8] sm:$0xff]
        %v2767 = vld [vmem:[#allocation16 + $0x3d0] sm:$0xff]
        %v2768 = vld [vmem:[#allocation16 + $0x3d8] sm:$0xff]
        %v2769 = vld [vmem:[#allocation16 + $0x3e0] sm:$0xff]
        %v2770 = vld [vmem:[#allocation16 + $0x3e8] sm:$0xff]
        %v2771 = vld [vmem:[#allocation16 + $0x3f0] sm:$0xff]
        %v2772 = vld [vmem:[#allocation16 + $0x3f8] sm:$0xff]
        %v2773 = vld [vmem:[#allocation16 + $0x400] sm:$0xff]
        %v2774 = vld [vmem:[#allocation16 + $0x408] sm:$0xff]
        %v2775 = vld [vmem:[#allocation16 + $0x410] sm:$0xff]
        %v2776 = vld [vmem:[#allocation16 + $0x418] sm:$0xff]
        %v2777 = vld [vmem:[#allocation16 + $0x420] sm:$0xff]
        %v2778 = vld [vmem:[#allocation16 + $0x428] sm:$0xff]
        %v2779 = vld [vmem:[#allocation16 + $0x430] sm:$0xff]
        %v2780 = vld [vmem:[#allocation16 + $0x438] sm:$0xff]
        %v2781 = vld [vmem:[#allocation16 + $0x440] sm:$0xff]
        %v2782 = vld [vmem:[#allocation16 + $0x448] sm:$0xff]
        %v2783 = vld [vmem:[#allocation16 + $0x450] sm:$0xff]
        %v2784 = vld [vmem:[#allocation16 + $0x458] sm:$0xff]
        %v2785 = vld [vmem:[#allocation16 + $0x460] sm:$0xff]
        %v2786 = vld [vmem:[#allocation16 + $0x468] sm:$0xff]
        %v2787 = vld [vmem:[#allocation16 + $0x470] sm:$0xff]
        %v2788 = vld [vmem:[#allocation16 + $0x478] sm:$0xff]
        %v2789 = vld [vmem:[#allocation16 + $0x480] sm:$0xff]
        %v2790 = vld [vmem:[#allocation16 + $0x488] sm:$0xff]
        %v2791 = vld [vmem:[#allocation16 + $0x490] sm:$0xff]
        %v2792 = vld [vmem:[#allocation16 + $0x498] sm:$0xff]
        %v2793 = vld [vmem:[#allocation16 + $0x4a0] sm:$0xff]
        %v2794 = vld [vmem:[#allocation16 + $0x4a8] sm:$0xff]
        %v2795 = vld [vmem:[#allocation16 + $0x4b0] sm:$0xff]
        %v2796 = vld [vmem:[#allocation16 + $0x4b8] sm:$0xff]
        %v2797 = vld [vmem:[#allocation16 + $0x4c0] sm:$0xff]
        %v2798 = vld [vmem:[#allocation16 + $0x4c8] sm:$0xff]
        %v2799 = vld [vmem:[#allocation16 + $0x4d0] sm:$0xff]
        %v2800 = vld [vmem:[#allocation16 + $0x4d8] sm:$0xff]
        %v2801 = vld [vmem:[#allocation16 + $0x4e0] sm:$0xff]
        %v2802 = vld [vmem:[#allocation16 + $0x4e8] sm:$0xff]
        %v2803 = vld [vmem:[#allocation16 + $0x4f0] sm:$0xff]
        %v2804 = vld [vmem:[#allocation16 + $0x4f8] sm:$0xff]
        %v2805 = vld [vmem:[#allocation16 + $0x500] sm:$0xff]
        %v2806 = vld [vmem:[#allocation16 + $0x508] sm:$0xff]
        %v2807 = vld [vmem:[#allocation16 + $0x510] sm:$0xff]
        %v2808 = vld [vmem:[#allocation16 + $0x518] sm:$0xff]
        %v2809 = vld [vmem:[#allocation16 + $0x520] sm:$0xff]
        %v2810 = vld [vmem:[#allocation16 + $0x528] sm:$0xff]
        %v2811 = vld [vmem:[#allocation16 + $0x530] sm:$0xff]
        %v2812 = vld [vmem:[#allocation16 + $0x538] sm:$0xff]
        %v2813 = vld [vmem:[#allocation16 + $0x540] sm:$0xff]
        %v2814 = vld [vmem:[#allocation16 + $0x548] sm:$0xff]
        %v2815 = vld [vmem:[#allocation16 + $0x550] sm:$0xff]
        %v2816 = vld [vmem:[#allocation16 + $0x558] sm:$0xff]
        %v2817 = vld [vmem:[#allocation16 + $0x560] sm:$0xff]
        %v2818 = vld [vmem:[#allocation16 + $0x568] sm:$0xff]
        %v2819 = vld [vmem:[#allocation16 + $0x570] sm:$0xff]
        %v2820 = vld [vmem:[#allocation16 + $0x578] sm:$0xff]
        %v2821 = vld [vmem:[#allocation16 + $0x580] sm:$0xff]
        %v2822 = vld [vmem:[#allocation16 + $0x588] sm:$0xff]
        %v2823 = vld [vmem:[#allocation16 + $0x590] sm:$0xff]
        %v2824 = vld [vmem:[#allocation16 + $0x598] sm:$0xff]
        %v2825 = vld [vmem:[#allocation16 + $0x5a0] sm:$0xff]
        %v2826 = vld [vmem:[#allocation16 + $0x5a8] sm:$0xff]
        %v2827 = vld [vmem:[#allocation16 + $0x5b0] sm:$0xff]
        %v2828 = vld [vmem:[#allocation16 + $0x5b8] sm:$0xff]
        %v2829 = vld [vmem:[#allocation16 + $0x5c0] sm:$0xff]
        %v2830 = vld [vmem:[#allocation16 + $0x5c8] sm:$0xff]
        %v2831 = vld [vmem:[#allocation16 + $0x5d0] sm:$0xff]
        %v2832 = vld [vmem:[#allocation16 + $0x5d8] sm:$0xff]
        %v2833 = vld [vmem:[#allocation16 + $0x5e0] sm:$0xff]
        %v2834 = vld [vmem:[#allocation16 + $0x5e8] sm:$0xff]
        %v2835 = vld [vmem:[#allocation16 + $0x5f0] sm:$0xff]
        %v2836 = vld [vmem:[#allocation16 + $0x5f8] sm:$0xff]
        %v2837 = vld [vmem:[#allocation16 + $0x600] sm:$0xff]
        %v2838 = vld [vmem:[#allocation16 + $0x608] sm:$0xff]
        %v2839 = vld [vmem:[#allocation16 + $0x610] sm:$0xff]
        %v2840 = vld [vmem:[#allocation16 + $0x618] sm:$0xff]
        %v2841 = vld [vmem:[#allocation16 + $0x620] sm:$0xff]
        %v2842 = vld [vmem:[#allocation16 + $0x628] sm:$0xff]
        %v2843 = vld [vmem:[#allocation16 + $0x630] sm:$0xff]
        %v2844 = vld [vmem:[#allocation16 + $0x638] sm:$0xff]
        %v2845 = vld [vmem:[#allocation16 + $0x640] sm:$0xff]
        %v2846 = vld [vmem:[#allocation16 + $0x648] sm:$0xff]
        %v2847 = vld [vmem:[#allocation16 + $0x650] sm:$0xff]
        %v2848 = vld [vmem:[#allocation16 + $0x658] sm:$0xff]
        %v2849 = vld [vmem:[#allocation16 + $0x660] sm:$0xff]
        %v2850 = vld [vmem:[#allocation16 + $0x668] sm:$0xff]
        %v2851 = vld [vmem:[#allocation16 + $0x670] sm:$0xff]
        %v2852 = vld [vmem:[#allocation16 + $0x678] sm:$0xff]
        %v2853 = vld [vmem:[#allocation16 + $0x680] sm:$0xff]
        %v2854 = vld [vmem:[#allocation16 + $0x688] sm:$0xff]
        %v2855 = vld [vmem:[#allocation16 + $0x690] sm:$0xff]
        %v2856 = vld [vmem:[#allocation16 + $0x698] sm:$0xff]
        %v2857 = vld [vmem:[#allocation16 + $0x6a0] sm:$0xff]
        %v2858 = vld [vmem:[#allocation16 + $0x6a8] sm:$0xff]
        %v2859 = vld [vmem:[#allocation16 + $0x6b0] sm:$0xff]
        %v2860 = vld [vmem:[#allocation16 + $0x6b8] sm:$0xff]
        %v2861 = vld [vmem:[#allocation16 + $0x6c0] sm:$0xff]
        %v2862 = vld [vmem:[#allocation16 + $0x6c8] sm:$0xff]
        %v2863 = vld [vmem:[#allocation16 + $0x6d0] sm:$0xff]
        %v2864 = vld [vmem:[#allocation16 + $0x6d8] sm:$0xff]
        %v2865 = vld [vmem:[#allocation16 + $0x6e0] sm:$0xff]
        %v2866 = vld [vmem:[#allocation16 + $0x6e8] sm:$0xff]
        %v2867 = vld [vmem:[#allocation16 + $0x6f0] sm:$0xff]
        %v2868 = vld [vmem:[#allocation16 + $0x6f8] sm:$0xff]
        %v2869 = vld [vmem:[#allocation16 + $0x700] sm:$0xff]
        %v2870 = vld [vmem:[#allocation16 + $0x708] sm:$0xff]
        %v2871 = vld [vmem:[#allocation16 + $0x710] sm:$0xff]
        %v2872 = vld [vmem:[#allocation16 + $0x718] sm:$0xff]
        %v2873 = vld [vmem:[#allocation16 + $0x720] sm:$0xff]
        %v2874 = vld [vmem:[#allocation16 + $0x728] sm:$0xff]
        %v2875 = vld [vmem:[#allocation16 + $0x730] sm:$0xff]
        %v2876 = vld [vmem:[#allocation16 + $0x738] sm:$0xff]
        %v2877 = vld [vmem:[#allocation16 + $0x740] sm:$0xff]
        %v2878 = vld [vmem:[#allocation16 + $0x748] sm:$0xff]
        %v2879 = vld [vmem:[#allocation16 + $0x750] sm:$0xff]
        %v2880 = vld [vmem:[#allocation16 + $0x758] sm:$0xff]
        %v2881 = vld [vmem:[#allocation16 + $0x760] sm:$0xff]
        %v2882 = vld [vmem:[#allocation16 + $0x768] sm:$0xff]
        %v2883 = vld [vmem:[#allocation16 + $0x770] sm:$0xff]
        %v2884 = vld [vmem:[#allocation16 + $0x778] sm:$0xff]
        %v2885 = vld [vmem:[#allocation16 + $0x780] sm:$0xff]
        %v2886 = vld [vmem:[#allocation16 + $0x788] sm:$0xff]
        %v2887 = vld [vmem:[#allocation16 + $0x790] sm:$0xff]
        %v2888 = vld [vmem:[#allocation16 + $0x798] sm:$0xff]
        %v2889 = vld [vmem:[#allocation16 + $0x7a0] sm:$0xff]
        %v2890 = vld [vmem:[#allocation16 + $0x7a8] sm:$0xff]
        %v2891 = vld [vmem:[#allocation16 + $0x7b0] sm:$0xff]
        %v2892 = vld [vmem:[#allocation16 + $0x7b8] sm:$0xff]
        %v2893 = vld [vmem:[#allocation16 + $0x7c0] sm:$0xff]
        %v2894 = vld [vmem:[#allocation16 + $0x7c8] sm:$0xff]
        %v2895 = vld [vmem:[#allocation16 + $0x7d0] sm:$0xff]
        %v2896 = vld [vmem:[#allocation16 + $0x7d8] sm:$0xff]
        %v2897 = vld [vmem:[#allocation16 + $0x7e0] sm:$0xff]
        %v2898 = vld [vmem:[#allocation16 + $0x7e8] sm:$0xff]
        %v2899 = vld [vmem:[#allocation16 + $0x7f0] sm:$0xff]
        %v2900 = vld [vmem:[#allocation16 + $0x7f8] sm:$0xff]
        %v2901 = vld [vmem:[#allocation16 + $0x800] sm:$0xff]
        %v2902 = vld [vmem:[#allocation16 + $0x808] sm:$0xff]
        %v2903 = vld [vmem:[#allocation16 + $0x810] sm:$0xff]
        %v2904 = vld [vmem:[#allocation16 + $0x818] sm:$0xff]
        %v2905 = vld [vmem:[#allocation16 + $0x820] sm:$0xff]
        %v2906 = vld [vmem:[#allocation16 + $0x828] sm:$0xff]
        %v2907 = vld [vmem:[#allocation16 + $0x830] sm:$0xff]
        %v2908 = vld [vmem:[#allocation16 + $0x838] sm:$0xff]
        %v2909 = vld [vmem:[#allocation16 + $0x840] sm:$0xff]
        %v2910 = vld [vmem:[#allocation16 + $0x848] sm:$0xff]
        %v2911 = vld [vmem:[#allocation16 + $0x850] sm:$0xff]
        %v2912 = vld [vmem:[#allocation16 + $0x858] sm:$0xff]
        %v2913 = vld [vmem:[#allocation16 + $0x860] sm:$0xff]
        %v2914 = vld [vmem:[#allocation16 + $0x868] sm:$0xff]
        %v2915 = vld [vmem:[#allocation16 + $0x870] sm:$0xff]
        %v2916 = vld [vmem:[#allocation16 + $0x878] sm:$0xff]
        %v2917 = vld [vmem:[#allocation16 + $0x880] sm:$0xff]
        %v2918 = vld [vmem:[#allocation16 + $0x888] sm:$0xff]
        %v2919 = vld [vmem:[#allocation16 + $0x890] sm:$0xff]
        %v2920 = vld [vmem:[#allocation16 + $0x898] sm:$0xff]
        %v2921 = vld [vmem:[#allocation16 + $0x8a0] sm:$0xff]
        %v2922 = vld [vmem:[#allocation16 + $0x8a8] sm:$0xff]
        %v2923 = vld [vmem:[#allocation16 + $0x8b0] sm:$0xff]
        %v2924 = vld [vmem:[#allocation16 + $0x8b8] sm:$0xff]
        %v2925 = vld [vmem:[#allocation16 + $0x8c0] sm:$0xff]
        %v2926 = vld [vmem:[#allocation16 + $0x8c8] sm:$0xff]
        %v2927 = vld [vmem:[#allocation16 + $0x8d0] sm:$0xff]
        %v2928 = vld [vmem:[#allocation16 + $0x8d8] sm:$0xff]
        %v2929 = vld [vmem:[#allocation16 + $0x8e0] sm:$0xff]
        %v2930 = vld [vmem:[#allocation16 + $0x8e8] sm:$0xff]
        %v2931 = vld [vmem:[#allocation16 + $0x8f0] sm:$0xff]
        %v2932 = vld [vmem:[#allocation16 + $0x8f8] sm:$0xff]
        %v2933 = vld [vmem:[#allocation16 + $0x900] sm:$0xff]
        %v2934 = vld [vmem:[#allocation16 + $0x908] sm:$0xff]
        %v2935 = vld [vmem:[#allocation16 + $0x910] sm:$0xff]
        %v2936 = vld [vmem:[#allocation16 + $0x918] sm:$0xff]
        %v2937 = vld [vmem:[#allocation16 + $0x920] sm:$0xff]
        %v2938 = vld [vmem:[#allocation16 + $0x928] sm:$0xff]
        %v2939 = vld [vmem:[#allocation16 + $0x930] sm:$0xff]
        %v2940 = vld [vmem:[#allocation16 + $0x938] sm:$0xff]
        %v2941 = vld [vmem:[#allocation16 + $0x940] sm:$0xff]
        %v2942 = vld [vmem:[#allocation16 + $0x948] sm:$0xff]
        %v2943 = vld [vmem:[#allocation16 + $0x950] sm:$0xff]
        %v2944 = vld [vmem:[#allocation16 + $0x958] sm:$0xff]
        %v2945 = vld [vmem:[#allocation16 + $0x960] sm:$0xff]
        %v2946 = vld [vmem:[#allocation16 + $0x968] sm:$0xff]
        %v2947 = vld [vmem:[#allocation16 + $0x970] sm:$0xff]
        %v2948 = vld [vmem:[#allocation16 + $0x978] sm:$0xff]
        %v2949 = vld [vmem:[#allocation16 + $0x980] sm:$0xff]
        %v2950 = vld [vmem:[#allocation16 + $0x988] sm:$0xff]
        %v2951 = vld [vmem:[#allocation16 + $0x990] sm:$0xff]
        %v2952 = vld [vmem:[#allocation16 + $0x998] sm:$0xff]
        %v2953 = vld [vmem:[#allocation16 + $0x9a0] sm:$0xff]
        %v2954 = vld [vmem:[#allocation16 + $0x9a8] sm:$0xff]
        %v2955 = vld [vmem:[#allocation16 + $0x9b0] sm:$0xff]
        %v2956 = vld [vmem:[#allocation16 + $0x9b8] sm:$0xff]
        %v2957 = vld [vmem:[#allocation16 + $0x9c0] sm:$0xff]
        %v2958 = vld [vmem:[#allocation16 + $0x9c8] sm:$0xff]
        %v2959 = vld [vmem:[#allocation16 + $0x9d0] sm:$0xff]
        %v2960 = vld [vmem:[#allocation16 + $0x9d8] sm:$0xff]
        %v2961 = vld [vmem:[#allocation16 + $0x9e0] sm:$0xff]
        %v2962 = vld [vmem:[#allocation16 + $0x9e8] sm:$0xff]
        %v2963 = vld [vmem:[#allocation16 + $0x9f0] sm:$0xff]
        %v2964 = vld [vmem:[#allocation16 + $0x9f8] sm:$0xff]
        %v2965 = vld [vmem:[#allocation16 + $0xa00] sm:$0xff]
        %v2966 = vld [vmem:[#allocation16 + $0xa08] sm:$0xff]
        %v2967 = vld [vmem:[#allocation16 + $0xa10] sm:$0xff]
        %v2968 = vld [vmem:[#allocation16 + $0xa18] sm:$0xff]
        %v2969 = vld [vmem:[#allocation16 + $0xa20] sm:$0xff]
        %v2970 = vld [vmem:[#allocation16 + $0xa28] sm:$0xff]
        %v2971 = vld [vmem:[#allocation16 + $0xa30] sm:$0xff]
        %v2972 = vld [vmem:[#allocation16 + $0xa38] sm:$0xff]
        %v2973 = vld [vmem:[#allocation16 + $0xa40] sm:$0xff]
        %v2974 = vld [vmem:[#allocation16 + $0xa48] sm:$0xff]
        %v2975 = vld [vmem:[#allocation16 + $0xa50] sm:$0xff]
        %v2976 = vld [vmem:[#allocation16 + $0xa58] sm:$0xff]
        %v2977 = vld [vmem:[#allocation16 + $0xa60] sm:$0xff]
        %v2978 = vld [vmem:[#allocation16 + $0xa68] sm:$0xff]
        %v2979 = vld [vmem:[#allocation16 + $0xa70] sm:$0xff]
        %v2980 = vld [vmem:[#allocation16 + $0xa78] sm:$0xff]
        %v2981 = vld [vmem:[#allocation16 + $0xa80] sm:$0xff]
        %v2982 = vld [vmem:[#allocation16 + $0xa88] sm:$0xff]
        %v2983 = vld [vmem:[#allocation16 + $0xa90] sm:$0xff]
        %v2984 = vld [vmem:[#allocation16 + $0xa98] sm:$0xff]
        %v2985 = vld [vmem:[#allocation16 + $0xaa0] sm:$0xff]
        %v2986 = vld [vmem:[#allocation16 + $0xaa8] sm:$0xff]
        %v2987 = vld [vmem:[#allocation16 + $0xab0] sm:$0xff]
        %v2988 = vld [vmem:[#allocation16 + $0xab8] sm:$0xff]
        %v2989 = vld [vmem:[#allocation16 + $0xac0] sm:$0xff]
        %v2990 = vld [vmem:[#allocation16 + $0xac8] sm:$0xff]
        %v2991 = vld [vmem:[#allocation16 + $0xad0] sm:$0xff]
        %v2992 = vld [vmem:[#allocation16 + $0xad8] sm:$0xff]
        %v2993 = vld [vmem:[#allocation16 + $0xae0] sm:$0xff]
        %v2994 = vld [vmem:[#allocation16 + $0xae8] sm:$0xff]
        %v2995 = vld [vmem:[#allocation16 + $0xaf0] sm:$0xff]
        %v2996 = vld [vmem:[#allocation16 + $0xaf8] sm:$0xff]
        %v2997 = vld [vmem:[#allocation16 + $0xb00] sm:$0xff]
        %v2998 = vld [vmem:[#allocation16 + $0xb08] sm:$0xff]
        %v2999 = vld [vmem:[#allocation16 + $0xb10] sm:$0xff]
        %v3000 = vld [vmem:[#allocation16 + $0xb18] sm:$0xff]
        %v3001 = vld [vmem:[#allocation16 + $0xb20] sm:$0xff]
        %v3002 = vld [vmem:[#allocation16 + $0xb28] sm:$0xff]
        %v3003 = vld [vmem:[#allocation16 + $0xb30] sm:$0xff]
        %v3004 = vld [vmem:[#allocation16 + $0xb38] sm:$0xff]
        %v3005 = vld [vmem:[#allocation16 + $0xb40] sm:$0xff]
        %v3006 = vld [vmem:[#allocation16 + $0xb48] sm:$0xff]
        %v3007 = vld [vmem:[#allocation16 + $0xb50] sm:$0xff]
        %v3008 = vld [vmem:[#allocation16 + $0xb58] sm:$0xff]
        %v3009 = vld [vmem:[#allocation16 + $0xb60] sm:$0xff]
        %v3010 = vld [vmem:[#allocation16 + $0xb68] sm:$0xff]
        %v3011 = vld [vmem:[#allocation16 + $0xb70] sm:$0xff]
        %v3012 = vld [vmem:[#allocation16 + $0xb78] sm:$0xff]
        %v3013 = vld [vmem:[#allocation16 + $0xb80] sm:$0xff]
        %v3014 = vld [vmem:[#allocation16 + $0xb88] sm:$0xff]
        %v3015 = vld [vmem:[#allocation16 + $0xb90] sm:$0xff]
        %v3016 = vld [vmem:[#allocation16 + $0xb98] sm:$0xff]
        %v3017 = vld [vmem:[#allocation16 + $0xba0] sm:$0xff]
        %v3018 = vld [vmem:[#allocation16 + $0xba8] sm:$0xff]
        %v3019 = vld [vmem:[#allocation16 + $0xbb0] sm:$0xff]
        %v3020 = vld [vmem:[#allocation16 + $0xbb8] sm:$0xff]
        %v3021 = vld [vmem:[#allocation16 + $0xbc0] sm:$0xff]
        %v3022 = vld [vmem:[#allocation16 + $0xbc8] sm:$0xff]
        %v3023 = vld [vmem:[#allocation16 + $0xbd0] sm:$0xff]
        %v3024 = vld [vmem:[#allocation16 + $0xbd8] sm:$0xff]
        %v3025 = vld [vmem:[#allocation16 + $0xbe0] sm:$0xff]
        %v3026 = vld [vmem:[#allocation16 + $0xbe8] sm:$0xff]
        %v3027 = vld [vmem:[#allocation16 + $0xbf0] sm:$0xff]
        %v3028 = vld [vmem:[#allocation16 + $0xbf8] sm:$0xff]
        %v3029 = vld [vmem:[#allocation16 + $0xc00] sm:$0xff]
        %v3030 = vld [vmem:[#allocation16 + $0xc08] sm:$0xff]
        %v3031 = vld [vmem:[#allocation16 + $0xc10] sm:$0xff]
        %v3032 = vld [vmem:[#allocation16 + $0xc18] sm:$0xff]
        %v3033 = vld [vmem:[#allocation16 + $0xc20] sm:$0xff]
        %v3034 = vld [vmem:[#allocation16 + $0xc28] sm:$0xff]
        %v3035 = vld [vmem:[#allocation16 + $0xc30] sm:$0xff]
        %v3036 = vld [vmem:[#allocation16 + $0xc38] sm:$0xff]
        %v3037 = vld [vmem:[#allocation16 + $0xc40] sm:$0xff]
        %v3038 = vld [vmem:[#allocation16 + $0xc48] sm:$0xff]
        %v3039 = vld [vmem:[#allocation16 + $0xc50] sm:$0xff]
        %v3040 = vld [vmem:[#allocation16 + $0xc58] sm:$0xff]
        %v3041 = vld [vmem:[#allocation16 + $0xc60] sm:$0xff]
        %v3042 = vld [vmem:[#allocation16 + $0xc68] sm:$0xff]
        %v3043 = vld [vmem:[#allocation16 + $0xc70] sm:$0xff]
        %v3044 = vld [vmem:[#allocation16 + $0xc78] sm:$0xff]
        %v3045 = vld [vmem:[#allocation16 + $0xc80] sm:$0xff]
        %v3046 = vld [vmem:[#allocation16 + $0xc88] sm:$0xff]
        %v3047 = vld [vmem:[#allocation16 + $0xc90] sm:$0xff]
        %v3048 = vld [vmem:[#allocation16 + $0xc98] sm:$0xff]
        %v3049 = vld [vmem:[#allocation16 + $0xca0] sm:$0xff]
        %v3050 = vld [vmem:[#allocation16 + $0xca8] sm:$0xff]
        %v3051 = vld [vmem:[#allocation16 + $0xcb0] sm:$0xff]
        %v3052 = vld [vmem:[#allocation16 + $0xcb8] sm:$0xff]
        %v3053 = vld [vmem:[#allocation16 + $0xcc0] sm:$0xff]
        %v3054 = vld [vmem:[#allocation16 + $0xcc8] sm:$0xff]
        %v3055 = vld [vmem:[#allocation16 + $0xcd0] sm:$0xff]
        %v3056 = vld [vmem:[#allocation16 + $0xcd8] sm:$0xff]
        %v3057 = vld [vmem:[#allocation16 + $0xce0] sm:$0xff]
        %v3058 = vld [vmem:[#allocation16 + $0xce8] sm:$0xff]
        %v3059 = vld [vmem:[#allocation16 + $0xcf0] sm:$0xff]
        %v3060 = vld [vmem:[#allocation16 + $0xcf8] sm:$0xff]
        %v3061 = vld [vmem:[#allocation16 + $0xd00] sm:$0xff]
        %v3062 = vld [vmem:[#allocation16 + $0xd08] sm:$0xff]
        %v3063 = vld [vmem:[#allocation16 + $0xd10] sm:$0xff]
        %v3064 = vld [vmem:[#allocation16 + $0xd18] sm:$0xff]
        %v3065 = vld [vmem:[#allocation16 + $0xd20] sm:$0xff]
        %v3066 = vld [vmem:[#allocation16 + $0xd28] sm:$0xff]
        %v3067 = vld [vmem:[#allocation16 + $0xd30] sm:$0xff]
        %v3068 = vld [vmem:[#allocation16 + $0xd38] sm:$0xff]
        %v3069 = vld [vmem:[#allocation16 + $0xd40] sm:$0xff]
        %v3070 = vld [vmem:[#allocation16 + $0xd48] sm:$0xff]
        %v3071 = vld [vmem:[#allocation16 + $0xd50] sm:$0xff]
        %v3072 = vld [vmem:[#allocation16 + $0xd58] sm:$0xff]
        %v3073 = vld [vmem:[#allocation16 + $0xd60] sm:$0xff]
        %v3074 = vld [vmem:[#allocation16 + $0xd68] sm:$0xff]
        %v3075 = vld [vmem:[#allocation16 + $0xd70] sm:$0xff]
        %v3076 = vld [vmem:[#allocation16 + $0xd78] sm:$0xff]
        %v3077 = vld [vmem:[#allocation16 + $0xd80] sm:$0xff]
        %v3078 = vld [vmem:[#allocation16 + $0xd88] sm:$0xff]
        %v3079 = vld [vmem:[#allocation16 + $0xd90] sm:$0xff]
        %v3080 = vld [vmem:[#allocation16 + $0xd98] sm:$0xff]
        %v3081 = vld [vmem:[#allocation16 + $0xda0] sm:$0xff]
        %v3082 = vld [vmem:[#allocation16 + $0xda8] sm:$0xff]
        %v3083 = vld [vmem:[#allocation16 + $0xdb0] sm:$0xff]
        %v3084 = vld [vmem:[#allocation16 + $0xdb8] sm:$0xff]
        %v3085 = vld [vmem:[#allocation16 + $0xdc0] sm:$0xff]
        %v3086 = vld [vmem:[#allocation16 + $0xdc8] sm:$0xff]
        %v3087 = vld [vmem:[#allocation16 + $0xdd0] sm:$0xff]
        %v3088 = vld [vmem:[#allocation16 + $0xdd8] sm:$0xff]
        %v3089 = vld [vmem:[#allocation16 + $0xde0] sm:$0xff]
        %v3090 = vld [vmem:[#allocation16 + $0xde8] sm:$0xff]
        %v3091 = vld [vmem:[#allocation16 + $0xdf0] sm:$0xff]
        %v3092 = vld [vmem:[#allocation16 + $0xdf8] sm:$0xff]
        %v3093 = vld [vmem:[#allocation17] sm:$0xff]
        %v3095 = vlaneseq
        %v3096 = vshrl.u32 %v3095, 7
        %v3097 = vsub.s32 0, %v3096
        %v3098 = vrot.slane %v3093, %v3097
        %v3099 = vlaneseq
        %v3100 = vshrl.u32 %v3099, 7
        %v3101 = vsub.s32 1, %v3100
        %v3102 = vrot.slane %v3093, %v3101
        %v3103 = vlaneseq
        %v3104 = vshrl.u32 %v3103, 7
        %v3105 = vsub.s32 2, %v3104
        %v3106 = vrot.slane %v3093, %v3105
        %v3107 = vlaneseq
        %v3108 = vshrl.u32 %v3107, 7
        %v3109 = vsub.s32 3, %v3108
        %v3110 = vrot.slane %v3093, %v3109
        %v3111 = vlaneseq
        %v3112 = vshrl.u32 %v3111, 7
        %v3113 = vsub.s32 4, %v3112
        %v3114 = vrot.slane %v3093, %v3113
        %v3115 = vlaneseq
        %v3116 = vshrl.u32 %v3115, 7
        %v3117 = vsub.s32 5, %v3116
        %v3118 = vrot.slane %v3093, %v3117
        %v3119 = vlaneseq
        %v3120 = vshrl.u32 %v3119, 7
        %v3121 = vsub.s32 6, %v3120
        %v3122 = vrot.slane %v3093, %v3121
        %3130 = vmatprep.subr.mxu0 %v2646
        %3131 = vmatpush1.msra.mxu0 %v2645
        %3132 = vmatprep.subr.mxu0 %v2653
        %3133 = vmatpush1.msra.mxu0 %v2652
        %3134 = vmatprep.subr.mxu0 %v2660
        %3135 = vmatpush1.msra.mxu0 %v2659
        %3136 = vmatprep.subr.mxu0 %v2667
        %3137 = vmatpush1.msra.mxu0 %v2666
        %3138 = vmatprep.subr.mxu0 %v2674
        %3139 = vmatpush1.msra.mxu0 %v2673
        %3140 = vmatprep.subr.mxu0 %v2681
        %3141 = vmatpush1.msra.mxu0 %v2680
        %3142 = vmatprep.subr.mxu0 %v2688
        %3143 = vmatpush1.msra.mxu0 %v2687
        %3144 = vmatprep.subr.mxu0 %v2695
        %3145 = vmatpush1.msra.mxu0 %v2694
        %3146 = vmatprep.subr.mxu0 %v2702
        %3147 = vmatpush1.msra.mxu0 %v2701
        %3148 = vmatprep.subr.mxu0 %v2709
        %3149 = vmatpush1.msra.mxu0 %v2708
        %3150 = vmatprep.subr.mxu0 %v2716
        %3151 = vmatpush1.msra.mxu0 %v2715
        %3152 = vmatprep.subr.mxu0 %v2723
        %3153 = vmatpush1.msra.mxu0 %v2722
        %3154 = vmatprep.subr.mxu0 %v2730
        %3155 = vmatpush1.msra.mxu0 %v2729
        %3156 = vmatprep.subr.mxu0 %v2737
        %3157 = vmatpush1.msra.mxu0 %v2736
        %3158 = vmatprep.subr.mxu0 %v2744
        %3159 = vmatpush1.msra.mxu0 %v2743
        %3160 = vmatprep.subr.mxu0 %v2751
        %3161 = vmatpush1.msra.mxu0 %v2750
        %3162 = vmatprep.subr.mxu0 %v2758
        %3163 = vmatpush1.msra.mxu0 %v2757
        %3164 = vmatprep.subr.mxu0 %v2765
        %3165 = vmatpush1.msra.mxu0 %v2764
        %3166 = vmatprep.subr.mxu0 %v2772
        %3167 = vmatpush1.msra.mxu0 %v2771
        %3168 = vmatprep.subr.mxu0 %v2779
        %3169 = vmatpush1.msra.mxu0 %v2778
        %3170 = vmatprep.subr.mxu0 %v2786
        %3171 = vmatpush1.msra.mxu0 %v2785
        %3172 = vmatprep.subr.mxu0 %v2793
        %3173 = vmatpush1.msra.mxu0 %v2792
        %3174 = vmatprep.subr.mxu0 %v2800
        %3175 = vmatpush1.msra.mxu0 %v2799
        %3176 = vmatprep.subr.mxu0 %v2807
        %3177 = vmatpush1.msra.mxu0 %v2806
        %3178 = vmatprep.subr.mxu0 %v2814
        %3179 = vmatpush1.msra.mxu0 %v2813
        %3180 = vmatprep.subr.mxu0 %v2821
        %3181 = vmatpush1.msra.mxu0 %v2820
        %3182 = vmatprep.subr.mxu0 %v2828
        %3183 = vmatpush1.msra.mxu0 %v2827
        %3184 = vmatprep.subr.mxu0 %v2835
        %3185 = vmatpush1.msra.mxu0 %v2834
        %3186 = vmatprep.subr.mxu0 %v2842
        %3187 = vmatpush1.msra.mxu0 %v2841
        %3188 = vmatprep.subr.mxu0 %v2849
        %3189 = vmatpush1.msra.mxu0 %v2848
        %3190 = vmatprep.subr.mxu0 %v2856
        %3191 = vmatpush1.msra.mxu0 %v2855
        %3192 = vmatprep.subr.mxu0 %v2863
        %3193 = vmatpush1.msra.mxu0 %v2862
        %3194 = vmatprep.mubr.f32.mxu0 %v2582
        %3195 = vmatmul.mubr.f32.gmra.mrb[0].mxu0 %v2581
        %v3196 = vpop.f32.mrb[0].mxu0
        %v3197 = vadd.f32 %v3098, %v3196
        %v3198 = vpop.f32.mrb[0].mxu0
        %v3199 = vadd.f32 %v3102, %v3198
        %3200 = vmatprep.mubr.f32.mxu0 %v2586
        %3201 = vmatmul.mubr.f32.gmra.mrb[0].mxu0 %v2585
        %v3202 = vpop.f32.mrb[0].mxu0
        %v3203 = vadd.f32 %v3098, %v3202
        %v3204 = vpop.f32.mrb[0].mxu0
        %v3205 = vadd.f32 %v3102, %v3204
        %3206 = vmatprep.mubr.f32.mxu0 %v2590
        %3207 = vmatmul.mubr.f32.gmra.mrb[0].mxu0 %v2589
        %v3208 = vpop.f32.mrb[0].mxu0
        %v3209 = vadd.f32 %v3098, %v3208
        %v3210 = vpop.f32.mrb[0].mxu0
        %v3211 = vadd.f32 %v3102, %v3210
        %3212 = vmatprep.mubr.f32.mxu0 %v2594
        %3213 = vmatmul.mubr.f32.gmra.mrb[0].mxu0 %v2593
        %v3214 = vpop.f32.mrb[0].mxu0
        %v3215 = vadd.f32 %v3098, %v3214
        %v3216 = vpop.f32.mrb[0].mxu0
        %v3217 = vadd.f32 %v3102, %v3216
        %3218 = vmatprep.mubr.f32.mxu0 %v2598
        %3219 = vmatmul.mubr.f32.gmra.mrb[0].mxu0 %v2597
        %v3220 = vpop.f32.mrb[0].mxu0
        %v3221 = vadd.f32 %v3098, %v3220
        %v3222 = vpop.f32.mrb[0].mxu0
        %v3223 = vadd.f32 %v3102, %v3222
        %3224 = vmatprep.mubr.f32.mxu0 %v2602
        %3225 = vmatmul.mubr.f32.gmra.mrb[0].mxu0 %v2601
        %v3226 = vpop.f32.mrb[0].mxu0
        %v3227 = vadd.f32 %v3098, %v3226
        %v3228 = vpop.f32.mrb[0].mxu0
        %v3229 = vadd.f32 %v3102, %v3228
        %3230 = vmatprep.mubr.f32.mxu0 %v2606
        %3231 = vmatmul.mubr.f32.gmra.mrb[0].mxu0 %v2605
        %v3232 = vpop.f32.mrb[0].mxu0
        %v3233 = vadd.f32 %v3098, %v3232
        %v3234 = vpop.f32.mrb[0].mxu0
        %v3235 = vadd.f32 %v3102, %v3234
        %3236 = vmatprep.mubr.f32.mxu0 %v2610
        %3237 = vmatmul.mubr.f32.gmra.mrb[0].mxu0 %v2609
        %v3238 = vpop.f32.mrb[0].mxu0
        %v3239 = vadd.f32 %v3098, %v3238
        %v3240 = vpop.f32.mrb[0].mxu0
        %v3241 = vadd.f32 %v3102, %v3240
        %3242 = vmatprep.mubr.f32.mxu0 %v2614
        %3243 = vmatmul.mubr.f32.gmra.mrb[0].mxu0 %v2613
        %v3244 = vpop.f32.mrb[0].mxu0
        %v3245 = vadd.f32 %v3098, %v3244
        %v3246 = vpop.f32.mrb[0].mxu0
        %v3247 = vadd.f32 %v3102, %v3246
        %3248 = vmatprep.mubr.f32.mxu0 %v2618
        %3249 = vmatmul.mubr.f32.gmra.mrb[0].mxu0 %v2617
        %v3250 = vpop.f32.mrb[0].mxu0
        %v3251 = vadd.f32 %v3098, %v3250
        %v3252 = vpop.f32.mrb[0].mxu0
        %v3253 = vadd.f32 %v3102, %v3252
        %3254 = vmatprep.mubr.f32.mxu0 %v2622
        %3255 = vmatmul.mubr.f32.gmra.mrb[0].mxu0 %v2621
        %v3256 = vpop.f32.mrb[0].mxu0
        %v3257 = vadd.f32 %v3098, %v3256
        %v3258 = vpop.f32.mrb[0].mxu0
        %v3259 = vadd.f32 %v3102, %v3258
        %3260 = vmatprep.mubr.f32.mxu0 %v2626
        %3261 = vmatmul.mubr.f32.gmra.mrb[0].mxu0 %v2625
        %v3262 = vpop.f32.mrb[0].mxu0
        %v3263 = vadd.f32 %v3098, %v3262
        %v3264 = vpop.f32.mrb[0].mxu0
        %v3265 = vadd.f32 %v3102, %v3264
        %3266 = vmatprep.mubr.f32.mxu0 %v2630
        %3267 = vmatmul.mubr.f32.gmra.mrb[0].mxu0 %v2629
        %v3268 = vpop.f32.mrb[0].mxu0
        %v3269 = vadd.f32 %v3098, %v3268
        %v3270 = vpop.f32.mrb[0].mxu0
        %v3271 = vadd.f32 %v3102, %v3270
        %3272 = vmatprep.mubr.f32.mxu0 %v2634
        %3273 = vmatmul.mubr.f32.gmra.mrb[0].mxu0 %v2633
        %v3274 = vpop.f32.mrb[0].mxu0
        %v3275 = vadd.f32 %v3098, %v3274
        %v3276 = vpop.f32.mrb[0].mxu0
        %v3277 = vadd.f32 %v3102, %v3276
        %3278 = vmatprep.mubr.f32.mxu0 %v2638
        %3279 = vmatmul.mubr.f32.gmra.mrb[0].mxu0 %v2637
        %v3280 = vpop.f32.mrb[0].mxu0
        %v3281 = vadd.f32 %v3098, %v3280
        %v3282 = vpop.f32.mrb[0].mxu0
        %v3283 = vadd.f32 %v3102, %v3282
        %3284 = vmatprep.mubr.f32.mxu0 %v2642
        %3285 = vmatmul.mubr.f32.gmra.mrb[0].mxu0 %v2641
        %v3286 = vpop.f32.mrb[0].mxu0
        %v3287 = vadd.f32 %v3098, %v3286
        %v3288 = vpop.f32.mrb[0].mxu0
        %v3289 = vadd.f32 %v3102, %v3288
        %3290 = vdwg.mxu0
        %3291 = vmatprep.subr.mxu0 %v2870
        %3292 = vmatpush1.msra.mxu0 %v2869
        %3293 = vmatprep.subr.mxu0 %v2877
        %3294 = vmatpush1.msra.mxu0 %v2876
        %3295 = vmatprep.subr.mxu0 %v2884
        %3296 = vmatpush1.msra.mxu0 %v2883
        %3297 = vmatprep.subr.mxu0 %v2891
        %3298 = vmatpush1.msra.mxu0 %v2890
        %3299 = vmatprep.subr.mxu0 %v2898
        %3300 = vmatpush1.msra.mxu0 %v2897
        %3301 = vmatprep.subr.mxu0 %v2905
        %3302 = vmatpush1.msra.mxu0 %v2904
        %3303 = vmatprep.subr.mxu0 %v2912
        %3304 = vmatpush1.msra.mxu0 %v2911
        %3305 = vmatprep.subr.mxu0 %v2919
        %3306 = vmatpush1.msra.mxu0 %v2918
        %3307 = vmatprep.subr.mxu0 %v2926
        %3308 = vmatpush1.msra.mxu0 %v2925
        %3309 = vmatprep.subr.mxu0 %v2933
        %3310 = vmatpush1.msra.mxu0 %v2932
        %3311 = vmatprep.subr.mxu0 %v2940
        %3312 = vmatpush1.msra.mxu0 %v2939
        %3313 = vmatprep.subr.mxu0 %v2947
        %3314 = vmatpush1.msra.mxu0 %v2946
        %3315 = vmatprep.subr.mxu0 %v2954
        %3316 = vmatpush1.msra.mxu0 %v2953
        %3317 = vmatprep.subr.mxu0 %v2961
        %3318 = vmatpush1.msra.mxu0 %v2960
        %3319 = vmatprep.subr.mxu0 %v2968
        %3320 = vmatpush1.msra.mxu0 %v2967
        %3321 = vmatprep.subr.mxu0 %v2975
        %3322 = vmatpush1.msra.mxu0 %v2974
        %3323 = vmatprep.subr.mxu0 %v2982
        %3324 = vmatpush1.msra.mxu0 %v2981
        %3325 = vmatprep.subr.mxu0 %v2989
        %3326 = vmatpush1.msra.mxu0 %v2988
        %3327 = vmatprep.subr.mxu0 %v2996
        %3328 = vmatpush1.msra.mxu0 %v2995
        %3329 = vmatprep.subr.mxu0 %v3003
        %3330 = vmatpush1.msra.mxu0 %v3002
        %3331 = vmatprep.subr.mxu0 %v3010
        %3332 = vmatpush1.msra.mxu0 %v3009
        %3333 = vmatprep.subr.mxu0 %v3017
        %3334 = vmatpush1.msra.mxu0 %v3016
        %3335 = vmatprep.subr.mxu0 %v3024
        %3336 = vmatpush1.msra.mxu0 %v3023
        %3337 = vmatprep.subr.mxu0 %v3031
        %3338 = vmatpush1.msra.mxu0 %v3030
        %3339 = vmatprep.subr.mxu0 %v3038
        %3340 = vmatpush1.msra.mxu0 %v3037
        %3341 = vmatprep.subr.mxu0 %v3045
        %3342 = vmatpush1.msra.mxu0 %v3044
        %3343 = vmatprep.subr.mxu0 %v3052
        %3344 = vmatpush1.msra.mxu0 %v3051
        %3345 = vmatprep.subr.mxu0 %v3059
        %3346 = vmatpush1.msra.mxu0 %v3058
        %3347 = vmatprep.subr.mxu0 %v3066
        %3348 = vmatpush1.msra.mxu0 %v3065
        %3349 = vmatprep.subr.mxu0 %v3073
        %3350 = vmatpush1.msra.mxu0 %v3072
        %3351 = vmatprep.subr.mxu0 %v3080
        %3352 = vmatpush1.msra.mxu0 %v3079
        %3353 = vmatprep.subr.mxu0 %v3087
        %3354 = vmatpush1.msra.mxu0 %v3086
        %3355 = vmatprep.mubr.f32.mxu0 %v2584
        %3356 = vmatmul.mubr.f32.gmra.mrb[0].mxu0 %v2583
        %v3357 = vpop.f32.mrb[0].mxu0
        %v3358 = vadd.f32 %v3197, %v3357
        %v3359 = vpop.f32.mrb[0].mxu0
        %v3360 = vadd.f32 %v3199, %v3359
        %3361 = vmatprep.mubr.f32.mxu0 %v2588
        %3362 = vmatmul.mubr.f32.gmra.mrb[0].mxu0 %v2587
        %v3363 = vpop.f32.mrb[0].mxu0
        %v3364 = vadd.f32 %v3203, %v3363
        %v3365 = vpop.f32.mrb[0].mxu0
        %v3366 = vadd.f32 %v3205, %v3365
        %3367 = vmatprep.mubr.f32.mxu0 %v2592
        %3368 = vmatmul.mubr.f32.gmra.mrb[0].mxu0 %v2591
        %v3369 = vpop.f32.mrb[0].mxu0
        %v3370 = vadd.f32 %v3209, %v3369
        %v3371 = vpop.f32.mrb[0].mxu0
        %v3372 = vadd.f32 %v3211, %v3371
        %3373 = vmatprep.mubr.f32.mxu0 %v2596
        %3374 = vmatmul.mubr.f32.gmra.mrb[0].mxu0 %v2595
        %v3375 = vpop.f32.mrb[0].mxu0
        %v3376 = vadd.f32 %v3215, %v3375
        %v3377 = vpop.f32.mrb[0].mxu0
        %v3378 = vadd.f32 %v3217, %v3377
        %3379 = vmatprep.mubr.f32.mxu0 %v2600
        %3380 = vmatmul.mubr.f32.gmra.mrb[0].mxu0 %v2599
        %v3381 = vpop.f32.mrb[0].mxu0
        %v3382 = vadd.f32 %v3221, %v3381
        %v3383 = vpop.f32.mrb[0].mxu0
        %v3384 = vadd.f32 %v3223, %v3383
        %3385 = vmatprep.mubr.f32.mxu0 %v2604
        %3386 = vmatmul.mubr.f32.gmra.mrb[0].mxu0 %v2603
        %v3387 = vpop.f32.mrb[0].mxu0
        %v3388 = vadd.f32 %v3227, %v3387
        %v3389 = vpop.f32.mrb[0].mxu0
        %v3390 = vadd.f32 %v3229, %v3389
        %3391 = vmatprep.mubr.f32.mxu0 %v2608
        %3392 = vmatmul.mubr.f32.gmra.mrb[0].mxu0 %v2607
        %v3393 = vpop.f32.mrb[0].mxu0
        %v3394 = vadd.f32 %v3233, %v3393
        %v3395 = vpop.f32.mrb[0].mxu0
        %v3396 = vadd.f32 %v3235, %v3395
        %3397 = vmatprep.mubr.f32.mxu0 %v2612
        %3398 = vmatmul.mubr.f32.gmra.mrb[0].mxu0 %v2611
        %v3399 = vpop.f32.mrb[0].mxu0
        %v3400 = vadd.f32 %v3239, %v3399
        %v3401 = vpop.f32.mrb[0].mxu0
        %v3402 = vadd.f32 %v3241, %v3401
        %3403 = vmatprep.mubr.f32.mxu0 %v2616
        %3404 = vmatmul.mubr.f32.gmra.mrb[0].mxu0 %v2615
        %v3405 = vpop.f32.mrb[0].mxu0
        %v3406 = vadd.f32 %v3245, %v3405
        %v3407 = vpop.f32.mrb[0].mxu0
        %v3408 = vadd.f32 %v3247, %v3407
        %3409 = vmatprep.mubr.f32.mxu0 %v2620
        %3410 = vmatmul.mubr.f32.gmra.mrb[0].mxu0 %v2619
        %v3411 = vpop.f32.mrb[0].mxu0
        %v3412 = vadd.f32 %v3251, %v3411
        %v3413 = vpop.f32.mrb[0].mxu0
        %v3414 = vadd.f32 %v3253, %v3413
        %3415 = vmatprep.mubr.f32.mxu0 %v2624
        %3416 = vmatmul.mubr.f32.gmra.mrb[0].mxu0 %v2623
        %v3417 = vpop.f32.mrb[0].mxu0
        %v3418 = vadd.f32 %v3257, %v3417
        %v3419 = vpop.f32.mrb[0].mxu0
        %v3420 = vadd.f32 %v3259, %v3419
        %3421 = vmatprep.mubr.f32.mxu0 %v2628
        %3422 = vmatmul.mubr.f32.gmra.mrb[0].mxu0 %v2627
        %v3423 = vpop.f32.mrb[0].mxu0
        %v3424 = vadd.f32 %v3263, %v3423
        %v3425 = vpop.f32.mrb[0].mxu0
        %v3426 = vadd.f32 %v3265, %v3425
        %3427 = vmatprep.mubr.f32.mxu0 %v2632
        %3428 = vmatmul.mubr.f32.gmra.mrb[0].mxu0 %v2631
        %v3429 = vpop.f32.mrb[0].mxu0
        %v3430 = vadd.f32 %v3269, %v3429
        %v3431 = vpop.f32.mrb[0].mxu0
        %v3432 = vadd.f32 %v3271, %v3431
        %3433 = vmatprep.mubr.f32.mxu0 %v2636
        %3434 = vmatmul.mubr.f32.gmra.mrb[0].mxu0 %v2635
        %v3435 = vpop.f32.mrb[0].mxu0
        %v3436 = vadd.f32 %v3275, %v3435
        %v3437 = vpop.f32.mrb[0].mxu0
        %v3438 = vadd.f32 %v3277, %v3437
        %3439 = vmatprep.mubr.f32.mxu0 %v2640
        %3440 = vmatmul.mubr.f32.gmra.mrb[0].mxu0 %v2639
        %v3441 = vpop.f32.mrb[0].mxu0
        %v3442 = vadd.f32 %v3281, %v3441
        %v3443 = vpop.f32.mrb[0].mxu0
        %v3444 = vadd.f32 %v3283, %v3443
        %3445 = vmatprep.mubr.f32.mxu0 %v2644
        %3446 = vmatmul.mubr.f32.gmra.mrb[0].mxu0 %v2643
        %v3447 = vpop.f32.mrb[0].mxu0
        %v3448 = vadd.f32 %v3287, %v3447
        %v3449 = vpop.f32.mrb[0].mxu0
        %v3450 = vadd.f32 %v3289, %v3449
        %3451 = vdwg.mxu0
        %3452 = vmatprep.subr.mxu0 %v2648
        %3453 = vmatpush1.msra.mxu0 %v2647
        %3454 = vmatprep.subr.mxu0 %v2655
        %3455 = vmatpush1.msra.mxu0 %v2654
        %3456 = vmatprep.subr.mxu0 %v2662
        %3457 = vmatpush1.msra.mxu0 %v2661
        %3458 = vmatprep.subr.mxu0 %v2669
        %3459 = vmatpush1.msra.mxu0 %v2668
        %3460 = vmatprep.subr.mxu0 %v2676
        %3461 = vmatpush1.msra.mxu0 %v2675
        %3462 = vmatprep.subr.mxu0 %v2683
        %3463 = vmatpush1.msra.mxu0 %v2682
        %3464 = vmatprep.subr.mxu0 %v2690
        %3465 = vmatpush1.msra.mxu0 %v2689
        %3466 = vmatprep.subr.mxu0 %v2697
        %3467 = vmatpush1.msra.mxu0 %v2696
        %3468 = vmatprep.subr.mxu0 %v2704
        %3469 = vmatpush1.msra.mxu0 %v2703
        %3470 = vmatprep.subr.mxu0 %v2711
        %3471 = vmatpush1.msra.mxu0 %v2710
        %3472 = vmatprep.subr.mxu0 %v2718
        %3473 = vmatpush1.msra.mxu0 %v2717
        %3474 = vmatprep.subr.mxu0 %v2725
        %3475 = vmatpush1.msra.mxu0 %v2724
        %3476 = vmatprep.subr.mxu0 %v2732
        %3477 = vmatpush1.msra.mxu0 %v2731
        %3478 = vmatprep.subr.mxu0 %v2739
        %3479 = vmatpush1.msra.mxu0 %v2738
        %3480 = vmatprep.subr.mxu0 %v2746
        %3481 = vmatpush1.msra.mxu0 %v2745
        %3482 = vmatprep.subr.mxu0 %v2753
        %3483 = vmatpush1.msra.mxu0 %v2752
        %3484 = vmatprep.subr.mxu0 %v2760
        %3485 = vmatpush1.msra.mxu0 %v2759
        %3486 = vmatprep.subr.mxu0 %v2767
        %3487 = vmatpush1.msra.mxu0 %v2766
        %3488 = vmatprep.subr.mxu0 %v2774
        %3489 = vmatpush1.msra.mxu0 %v2773
        %3490 = vmatprep.subr.mxu0 %v2781
        %3491 = vmatpush1.msra.mxu0 %v2780
        %3492 = vmatprep.subr.mxu0 %v2788
        %3493 = vmatpush1.msra.mxu0 %v2787
        %3494 = vmatprep.subr.mxu0 %v2795
        %3495 = vmatpush1.msra.mxu0 %v2794
        %3496 = vmatprep.subr.mxu0 %v2802
        %3497 = vmatpush1.msra.mxu0 %v2801
        %3498 = vmatprep.subr.mxu0 %v2809
        %3499 = vmatpush1.msra.mxu0 %v2808
        %3500 = vmatprep.subr.mxu0 %v2816
        %3501 = vmatpush1.msra.mxu0 %v2815
        %3502 = vmatprep.subr.mxu0 %v2823
        %3503 = vmatpush1.msra.mxu0 %v2822
        %3504 = vmatprep.subr.mxu0 %v2830
        %3505 = vmatpush1.msra.mxu0 %v2829
        %3506 = vmatprep.subr.mxu0 %v2837
        %3507 = vmatpush1.msra.mxu0 %v2836
        %3508 = vmatprep.subr.mxu0 %v2844
        %3509 = vmatpush1.msra.mxu0 %v2843
        %3510 = vmatprep.subr.mxu0 %v2851
        %3511 = vmatpush1.msra.mxu0 %v2850
        %3512 = vmatprep.subr.mxu0 %v2858
        %3513 = vmatpush1.msra.mxu0 %v2857
        %3514 = vmatprep.subr.mxu0 %v2865
        %3515 = vmatpush1.msra.mxu0 %v2864
        %3516 = vmatprep.mubr.f32.mxu0 %v2582
        %3517 = vmatmul.mubr.f32.gmra.mrb[0].mxu0 %v2581
        %v3518 = vpop.f32.mrb[0].mxu0
        %v3519 = vadd.f32 %v3106, %v3518
        %v3520 = vpop.f32.mrb[0].mxu0
        %v3521 = vadd.f32 %v3110, %v3520
        %3522 = vmatprep.mubr.f32.mxu0 %v2586
        %3523 = vmatmul.mubr.f32.gmra.mrb[0].mxu0 %v2585
        %v3524 = vpop.f32.mrb[0].mxu0
        %v3525 = vadd.f32 %v3106, %v3524
        %v3526 = vpop.f32.mrb[0].mxu0
        %v3527 = vadd.f32 %v3110, %v3526
        %3528 = vmatprep.mubr.f32.mxu0 %v2590
        %3529 = vmatmul.mubr.f32.gmra.mrb[0].mxu0 %v2589
        %v3530 = vpop.f32.mrb[0].mxu0
        %v3531 = vadd.f32 %v3106, %v3530
        %v3532 = vpop.f32.mrb[0].mxu0
        %v3533 = vadd.f32 %v3110, %v3532
        %3534 = vmatprep.mubr.f32.mxu0 %v2594
        %3535 = vmatmul.mubr.f32.gmra.mrb[0].mxu0 %v2593
        %v3536 = vpop.f32.mrb[0].mxu0
        %v3537 = vadd.f32 %v3106, %v3536
        %v3538 = vpop.f32.mrb[0].mxu0
        %v3539 = vadd.f32 %v3110, %v3538
        %3540 = vmatprep.mubr.f32.mxu0 %v2598
        %3541 = vmatmul.mubr.f32.gmra.mrb[0].mxu0 %v2597
        %v3542 = vpop.f32.mrb[0].mxu0
        %v3543 = vadd.f32 %v3106, %v3542
        %v3544 = vpop.f32.mrb[0].mxu0
        %v3545 = vadd.f32 %v3110, %v3544
        %3546 = vmatprep.mubr.f32.mxu0 %v2602
        %3547 = vmatmul.mubr.f32.gmra.mrb[0].mxu0 %v2601
        %v3548 = vpop.f32.mrb[0].mxu0
        %v3549 = vadd.f32 %v3106, %v3548
        %v3550 = vpop.f32.mrb[0].mxu0
        %v3551 = vadd.f32 %v3110, %v3550
        %3552 = vmatprep.mubr.f32.mxu0 %v2606
        %3553 = vmatmul.mubr.f32.gmra.mrb[0].mxu0 %v2605
        %v3554 = vpop.f32.mrb[0].mxu0
        %v3555 = vadd.f32 %v3106, %v3554
        %v3556 = vpop.f32.mrb[0].mxu0
        %v3557 = vadd.f32 %v3110, %v3556
        %3558 = vmatprep.mubr.f32.mxu0 %v2610
        %3559 = vmatmul.mubr.f32.gmra.mrb[0].mxu0 %v2609
        %v3560 = vpop.f32.mrb[0].mxu0
        %v3561 = vadd.f32 %v3106, %v3560
        %v3562 = vpop.f32.mrb[0].mxu0
        %v3563 = vadd.f32 %v3110, %v3562
        %3564 = vmatprep.mubr.f32.mxu0 %v2614
        %3565 = vmatmul.mubr.f32.gmra.mrb[0].mxu0 %v2613
        %v3566 = vpop.f32.mrb[0].mxu0
        %v3567 = vadd.f32 %v3106, %v3566
        %v3568 = vpop.f32.mrb[0].mxu0
        %v3569 = vadd.f32 %v3110, %v3568
        %3570 = vmatprep.mubr.f32.mxu0 %v2618
        %3571 = vmatmul.mubr.f32.gmra.mrb[0].mxu0 %v2617
        %v3572 = vpop.f32.mrb[0].mxu0
        %v3573 = vadd.f32 %v3106, %v3572
        %v3574 = vpop.f32.mrb[0].mxu0
        %v3575 = vadd.f32 %v3110, %v3574
        %3576 = vmatprep.mubr.f32.mxu0 %v2622
        %3577 = vmatmul.mubr.f32.gmra.mrb[0].mxu0 %v2621
        %v3578 = vpop.f32.mrb[0].mxu0
        %v3579 = vadd.f32 %v3106, %v3578
        %v3580 = vpop.f32.mrb[0].mxu0
        %v3581 = vadd.f32 %v3110, %v3580
        %3582 = vmatprep.mubr.f32.mxu0 %v2626
        %3583 = vmatmul.mubr.f32.gmra.mrb[0].mxu0 %v2625
        %v3584 = vpop.f32.mrb[0].mxu0
        %v3585 = vadd.f32 %v3106, %v3584
        %v3586 = vpop.f32.mrb[0].mxu0
        %v3587 = vadd.f32 %v3110, %v3586
        %3588 = vmatprep.mubr.f32.mxu0 %v2630
        %3589 = vmatmul.mubr.f32.gmra.mrb[0].mxu0 %v2629
        %v3590 = vpop.f32.mrb[0].mxu0
        %v3591 = vadd.f32 %v3106, %v3590
        %v3592 = vpop.f32.mrb[0].mxu0
        %v3593 = vadd.f32 %v3110, %v3592
        %3594 = vmatprep.mubr.f32.mxu0 %v2634
        %3595 = vmatmul.mubr.f32.gmra.mrb[0].mxu0 %v2633
        %v3596 = vpop.f32.mrb[0].mxu0
        %v3597 = vadd.f32 %v3106, %v3596
        %v3598 = vpop.f32.mrb[0].mxu0
        %v3599 = vadd.f32 %v3110, %v3598
        %3600 = vmatprep.mubr.f32.mxu0 %v2638
        %3601 = vmatmul.mubr.f32.gmra.mrb[0].mxu0 %v2637
        %v3602 = vpop.f32.mrb[0].mxu0
        %v3603 = vadd.f32 %v3106, %v3602
        %v3604 = vpop.f32.mrb[0].mxu0
        %v3605 = vadd.f32 %v3110, %v3604
        %3606 = vmatprep.mubr.f32.mxu0 %v2642
        %3607 = vmatmul.mubr.f32.gmra.mrb[0].mxu0 %v2641
        %v3608 = vpop.f32.mrb[0].mxu0
        %v3609 = vadd.f32 %v3106, %v3608
        %v3610 = vpop.f32.mrb[0].mxu0
        %v3611 = vadd.f32 %v3110, %v3610
        %3612 = vdwg.mxu0
        %3613 = vmatprep.subr.mxu0 %v2872
        %3614 = vmatpush1.msra.mxu0 %v2871
        %3615 = vmatprep.subr.mxu0 %v2879
        %3616 = vmatpush1.msra.mxu0 %v2878
        %3617 = vmatprep.subr.mxu0 %v2886
        %3618 = vmatpush1.msra.mxu0 %v2885
        %3619 = vmatprep.subr.mxu0 %v2893
        %3620 = vmatpush1.msra.mxu0 %v2892
        %3621 = vmatprep.subr.mxu0 %v2900
        %3622 = vmatpush1.msra.mxu0 %v2899
        %3623 = vmatprep.subr.mxu0 %v2907
        %3624 = vmatpush1.msra.mxu0 %v2906
        %3625 = vmatprep.subr.mxu0 %v2914
        %3626 = vmatpush1.msra.mxu0 %v2913
        %3627 = vmatprep.subr.mxu0 %v2921
        %3628 = vmatpush1.msra.mxu0 %v2920
        %3629 = vmatprep.subr.mxu0 %v2928
        %3630 = vmatpush1.msra.mxu0 %v2927
        %3631 = vmatprep.subr.mxu0 %v2935
        %3632 = vmatpush1.msra.mxu0 %v2934
        %3633 = vmatprep.subr.mxu0 %v2942
        %3634 = vmatpush1.msra.mxu0 %v2941
        %3635 = vmatprep.subr.mxu0 %v2949
        %3636 = vmatpush1.msra.mxu0 %v2948
        %3637 = vmatprep.subr.mxu0 %v2956
        %3638 = vmatpush1.msra.mxu0 %v2955
        %3639 = vmatprep.subr.mxu0 %v2963
        %3640 = vmatpush1.msra.mxu0 %v2962
        %3641 = vmatprep.subr.mxu0 %v2970
        %3642 = vmatpush1.msra.mxu0 %v2969
        %3643 = vmatprep.subr.mxu0 %v2977
        %3644 = vmatpush1.msra.mxu0 %v2976
        %3645 = vmatprep.subr.mxu0 %v2984
        %3646 = vmatpush1.msra.mxu0 %v2983
        %3647 = vmatprep.subr.mxu0 %v2991
        %3648 = vmatpush1.msra.mxu0 %v2990
        %3649 = vmatprep.subr.mxu0 %v2998
        %3650 = vmatpush1.msra.mxu0 %v2997
        %3651 = vmatprep.subr.mxu0 %v3005
        %3652 = vmatpush1.msra.mxu0 %v3004
        %3653 = vmatprep.subr.mxu0 %v3012
        %3654 = vmatpush1.msra.mxu0 %v3011
        %3655 = vmatprep.subr.mxu0 %v3019
        %3656 = vmatpush1.msra.mxu0 %v3018
        %3657 = vmatprep.subr.mxu0 %v3026
        %3658 = vmatpush1.msra.mxu0 %v3025
        %3659 = vmatprep.subr.mxu0 %v3033
        %3660 = vmatpush1.msra.mxu0 %v3032
        %3661 = vmatprep.subr.mxu0 %v3040
        %3662 = vmatpush1.msra.mxu0 %v3039
        %3663 = vmatprep.subr.mxu0 %v3047
        %3664 = vmatpush1.msra.mxu0 %v3046
        %3665 = vmatprep.subr.mxu0 %v3054
        %3666 = vmatpush1.msra.mxu0 %v3053
        %3667 = vmatprep.subr.mxu0 %v3061
        %3668 = vmatpush1.msra.mxu0 %v3060
        %3669 = vmatprep.subr.mxu0 %v3068
        %3670 = vmatpush1.msra.mxu0 %v3067
        %3671 = vmatprep.subr.mxu0 %v3075
        %3672 = vmatpush1.msra.mxu0 %v3074
        %3673 = vmatprep.subr.mxu0 %v3082
        %3674 = vmatpush1.msra.mxu0 %v3081
        %3675 = vmatprep.subr.mxu0 %v3089
        %3676 = vmatpush1.msra.mxu0 %v3088
        %3677 = vmatprep.mubr.f32.mxu0 %v2584
        %3678 = vmatmul.mubr.f32.gmra.mrb[0].mxu0 %v2583
        %v3679 = vpop.f32.mrb[0].mxu0
        %v3680 = vadd.f32 %v3519, %v3679
        %v3681 = vpop.f32.mrb[0].mxu0
        %v3682 = vadd.f32 %v3521, %v3681
        %3683 = vmatprep.mubr.f32.mxu0 %v2588
        %3684 = vmatmul.mubr.f32.gmra.mrb[0].mxu0 %v2587
        %v3685 = vpop.f32.mrb[0].mxu0
        %v3686 = vadd.f32 %v3525, %v3685
        %v3687 = vpop.f32.mrb[0].mxu0
        %v3688 = vadd.f32 %v3527, %v3687
        %3689 = vmatprep.mubr.f32.mxu0 %v2592
        %3690 = vmatmul.mubr.f32.gmra.mrb[0].mxu0 %v2591
        %v3691 = vpop.f32.mrb[0].mxu0
        %v3692 = vadd.f32 %v3531, %v3691
        %v3693 = vpop.f32.mrb[0].mxu0
        %v3694 = vadd.f32 %v3533, %v3693
        %3695 = vmatprep.mubr.f32.mxu0 %v2596
        %3696 = vmatmul.mubr.f32.gmra.mrb[0].mxu0 %v2595
        %v3697 = vpop.f32.mrb[0].mxu0
        %v3698 = vadd.f32 %v3537, %v3697
        %v3699 = vpop.f32.mrb[0].mxu0
        %v3700 = vadd.f32 %v3539, %v3699
        %3701 = vmatprep.mubr.f32.mxu0 %v2600
        %3702 = vmatmul.mubr.f32.gmra.mrb[0].mxu0 %v2599
        %v3703 = vpop.f32.mrb[0].mxu0
        %v3704 = vadd.f32 %v3543, %v3703
        %v3705 = vpop.f32.mrb[0].mxu0
        %v3706 = vadd.f32 %v3545, %v3705
        %3707 = vmatprep.mubr.f32.mxu0 %v2604
        %3708 = vmatmul.mubr.f32.gmra.mrb[0].mxu0 %v2603
        %v3709 = vpop.f32.mrb[0].mxu0
        %v3710 = vadd.f32 %v3549, %v3709
        %v3711 = vpop.f32.mrb[0].mxu0
        %v3712 = vadd.f32 %v3551, %v3711
        %3713 = vmatprep.mubr.f32.mxu0 %v2608
        %3714 = vmatmul.mubr.f32.gmra.mrb[0].mxu0 %v2607
        %v3715 = vpop.f32.mrb[0].mxu0
        %v3716 = vadd.f32 %v3555, %v3715
        %v3717 = vpop.f32.mrb[0].mxu0
        %v3718 = vadd.f32 %v3557, %v3717
        %3719 = vmatprep.mubr.f32.mxu0 %v2612
        %3720 = vmatmul.mubr.f32.gmra.mrb[0].mxu0 %v2611
        %v3721 = vpop.f32.mrb[0].mxu0
        %v3722 = vadd.f32 %v3561, %v3721
        %v3723 = vpop.f32.mrb[0].mxu0
        %v3724 = vadd.f32 %v3563, %v3723
        %3725 = vmatprep.mubr.f32.mxu0 %v2616
        %3726 = vmatmul.mubr.f32.gmra.mrb[0].mxu0 %v2615
        %v3727 = vpop.f32.mrb[0].mxu0
        %v3728 = vadd.f32 %v3567, %v3727
        %v3729 = vpop.f32.mrb[0].mxu0
        %v3730 = vadd.f32 %v3569, %v3729
        %3731 = vmatprep.mubr.f32.mxu0 %v2620
        %3732 = vmatmul.mubr.f32.gmra.mrb[0].mxu0 %v2619
        %v3733 = vpop.f32.mrb[0].mxu0
        %v3734 = vadd.f32 %v3573, %v3733
        %v3735 = vpop.f32.mrb[0].mxu0
        %v3736 = vadd.f32 %v3575, %v3735
        %3737 = vmatprep.mubr.f32.mxu0 %v2624
        %3738 = vmatmul.mubr.f32.gmra.mrb[0].mxu0 %v2623
        %v3739 = vpop.f32.mrb[0].mxu0
        %v3740 = vadd.f32 %v3579, %v3739
        %v3741 = vpop.f32.mrb[0].mxu0
        %v3742 = vadd.f32 %v3581, %v3741
        %3743 = vmatprep.mubr.f32.mxu0 %v2628
        %3744 = vmatmul.mubr.f32.gmra.mrb[0].mxu0 %v2627
        %v3745 = vpop.f32.mrb[0].mxu0
        %v3746 = vadd.f32 %v3585, %v3745
        %v3747 = vpop.f32.mrb[0].mxu0
        %v3748 = vadd.f32 %v3587, %v3747
        %3749 = vmatprep.mubr.f32.mxu0 %v2632
        %3750 = vmatmul.mubr.f32.gmra.mrb[0].mxu0 %v2631
        %v3751 = vpop.f32.mrb[0].mxu0
        %v3752 = vadd.f32 %v3591, %v3751
        %v3753 = vpop.f32.mrb[0].mxu0
        %v3754 = vadd.f32 %v3593, %v3753
        %3755 = vmatprep.mubr.f32.mxu0 %v2636
        %3756 = vmatmul.mubr.f32.gmra.mrb[0].mxu0 %v2635
        %v3757 = vpop.f32.mrb[0].mxu0
        %v3758 = vadd.f32 %v3597, %v3757
        %v3759 = vpop.f32.mrb[0].mxu0
        %v3760 = vadd.f32 %v3599, %v3759
        %3761 = vmatprep.mubr.f32.mxu0 %v2640
        %3762 = vmatmul.mubr.f32.gmra.mrb[0].mxu0 %v2639
        %v3763 = vpop.f32.mrb[0].mxu0
        %v3764 = vadd.f32 %v3603, %v3763
        %v3765 = vpop.f32.mrb[0].mxu0
        %v3766 = vadd.f32 %v3605, %v3765
        %3767 = vmatprep.mubr.f32.mxu0 %v2644
        %3768 = vmatmul.mubr.f32.gmra.mrb[0].mxu0 %v2643
        %v3769 = vpop.f32.mrb[0].mxu0
        %v3770 = vadd.f32 %v3609, %v3769
        %v3771 = vpop.f32.mrb[0].mxu0
        %v3772 = vadd.f32 %v3611, %v3771
        %3773 = vdwg.mxu0
        %3774 = vmatprep.subr.mxu0 %v2650
        %3775 = vmatpush1.msra.mxu0 %v2649
        %3776 = vmatprep.subr.mxu0 %v2657
        %3777 = vmatpush1.msra.mxu0 %v2656
        %3778 = vmatprep.subr.mxu0 %v2664
        %3779 = vmatpush1.msra.mxu0 %v2663
        %3780 = vmatprep.subr.mxu0 %v2671
        %3781 = vmatpush1.msra.mxu0 %v2670
        %3782 = vmatprep.subr.mxu0 %v2678
        %3783 = vmatpush1.msra.mxu0 %v2677
        %3784 = vmatprep.subr.mxu0 %v2685
        %3785 = vmatpush1.msra.mxu0 %v2684
        %3786 = vmatprep.subr.mxu0 %v2692
        %3787 = vmatpush1.msra.mxu0 %v2691
        %3788 = vmatprep.subr.mxu0 %v2699
        %3789 = vmatpush1.msra.mxu0 %v2698
        %3790 = vmatprep.subr.mxu0 %v2706
        %3791 = vmatpush1.msra.mxu0 %v2705
        %3792 = vmatprep.subr.mxu0 %v2713
        %3793 = vmatpush1.msra.mxu0 %v2712
        %3794 = vmatprep.subr.mxu0 %v2720
        %3795 = vmatpush1.msra.mxu0 %v2719
        %3796 = vmatprep.subr.mxu0 %v2727
        %3797 = vmatpush1.msra.mxu0 %v2726
        %3798 = vmatprep.subr.mxu0 %v2734
        %3799 = vmatpush1.msra.mxu0 %v2733
        %3800 = vmatprep.subr.mxu0 %v2741
        %3801 = vmatpush1.msra.mxu0 %v2740
        %3802 = vmatprep.subr.mxu0 %v2748
        %3803 = vmatpush1.msra.mxu0 %v2747
        %3804 = vmatprep.subr.mxu0 %v2755
        %3805 = vmatpush1.msra.mxu0 %v2754
        %3806 = vmatprep.subr.mxu0 %v2762
        %3807 = vmatpush1.msra.mxu0 %v2761
        %3808 = vmatprep.subr.mxu0 %v2769
        %3809 = vmatpush1.msra.mxu0 %v2768
        %3810 = vmatprep.subr.mxu0 %v2776
        %3811 = vmatpush1.msra.mxu0 %v2775
        %3812 = vmatprep.subr.mxu0 %v2783
        %3813 = vmatpush1.msra.mxu0 %v2782
        %3814 = vmatprep.subr.mxu0 %v2790
        %3815 = vmatpush1.msra.mxu0 %v2789
        %3816 = vmatprep.subr.mxu0 %v2797
        %3817 = vmatpush1.msra.mxu0 %v2796
        %3818 = vmatprep.subr.mxu0 %v2804
        %3819 = vmatpush1.msra.mxu0 %v2803
        %3820 = vmatprep.subr.mxu0 %v2811
        %3821 = vmatpush1.msra.mxu0 %v2810
        %3822 = vmatprep.subr.mxu0 %v2818
        %3823 = vmatpush1.msra.mxu0 %v2817
        %3824 = vmatprep.subr.mxu0 %v2825
        %3825 = vmatpush1.msra.mxu0 %v2824
        %3826 = vmatprep.subr.mxu0 %v2832
        %3827 = vmatpush1.msra.mxu0 %v2831
        %3828 = vmatprep.subr.mxu0 %v2839
        %3829 = vmatpush1.msra.mxu0 %v2838
        %3830 = vmatprep.subr.mxu0 %v2846
        %3831 = vmatpush1.msra.mxu0 %v2845
        %3832 = vmatprep.subr.mxu0 %v2853
        %3833 = vmatpush1.msra.mxu0 %v2852
        %3834 = vmatprep.subr.mxu0 %v2860
        %3835 = vmatpush1.msra.mxu0 %v2859
        %3836 = vmatprep.subr.mxu0 %v2867
        %3837 = vmatpush1.msra.mxu0 %v2866
        %3838 = vmatprep.mubr.f32.mxu0 %v2582
        %3839 = vmatmul.mubr.f32.gmra.mrb[0].mxu0 %v2581
        %v3840 = vpop.f32.mrb[0].mxu0
        %v3841 = vadd.f32 %v3114, %v3840
        %v3842 = vpop.f32.mrb[0].mxu0
        %v3843 = vadd.f32 %v3118, %v3842
        %3844 = vmatprep.mubr.f32.mxu0 %v2586
        %3845 = vmatmul.mubr.f32.gmra.mrb[0].mxu0 %v2585
        %v3846 = vpop.f32.mrb[0].mxu0
        %v3847 = vadd.f32 %v3114, %v3846
        %v3848 = vpop.f32.mrb[0].mxu0
        %v3849 = vadd.f32 %v3118, %v3848
        %3850 = vmatprep.mubr.f32.mxu0 %v2590
        %3851 = vmatmul.mubr.f32.gmra.mrb[0].mxu0 %v2589
        %v3852 = vpop.f32.mrb[0].mxu0
        %v3853 = vadd.f32 %v3114, %v3852
        %v3854 = vpop.f32.mrb[0].mxu0
        %v3855 = vadd.f32 %v3118, %v3854
        %3856 = vmatprep.mubr.f32.mxu0 %v2594
        %3857 = vmatmul.mubr.f32.gmra.mrb[0].mxu0 %v2593
        %v3858 = vpop.f32.mrb[0].mxu0
        %v3859 = vadd.f32 %v3114, %v3858
        %v3860 = vpop.f32.mrb[0].mxu0
        %v3861 = vadd.f32 %v3118, %v3860
        %3862 = vmatprep.mubr.f32.mxu0 %v2598
        %3863 = vmatmul.mubr.f32.gmra.mrb[0].mxu0 %v2597
        %v3864 = vpop.f32.mrb[0].mxu0
        %v3865 = vadd.f32 %v3114, %v3864
        %v3866 = vpop.f32.mrb[0].mxu0
        %v3867 = vadd.f32 %v3118, %v3866
        %3868 = vmatprep.mubr.f32.mxu0 %v2602
        %3869 = vmatmul.mubr.f32.gmra.mrb[0].mxu0 %v2601
        %v3870 = vpop.f32.mrb[0].mxu0
        %v3871 = vadd.f32 %v3114, %v3870
        %v3872 = vpop.f32.mrb[0].mxu0
        %v3873 = vadd.f32 %v3118, %v3872
        %3874 = vmatprep.mubr.f32.mxu0 %v2606
        %3875 = vmatmul.mubr.f32.gmra.mrb[0].mxu0 %v2605
        %v3876 = vpop.f32.mrb[0].mxu0
        %v3877 = vadd.f32 %v3114, %v3876
        %v3878 = vpop.f32.mrb[0].mxu0
        %v3879 = vadd.f32 %v3118, %v3878
        %3880 = vmatprep.mubr.f32.mxu0 %v2610
        %3881 = vmatmul.mubr.f32.gmra.mrb[0].mxu0 %v2609
        %v3882 = vpop.f32.mrb[0].mxu0
        %v3883 = vadd.f32 %v3114, %v3882
        %v3884 = vpop.f32.mrb[0].mxu0
        %v3885 = vadd.f32 %v3118, %v3884
        %3886 = vmatprep.mubr.f32.mxu0 %v2614
        %3887 = vmatmul.mubr.f32.gmra.mrb[0].mxu0 %v2613
        %v3888 = vpop.f32.mrb[0].mxu0
        %v3889 = vadd.f32 %v3114, %v3888
        %v3890 = vpop.f32.mrb[0].mxu0
        %v3891 = vadd.f32 %v3118, %v3890
        %3892 = vmatprep.mubr.f32.mxu0 %v2618
        %3893 = vmatmul.mubr.f32.gmra.mrb[0].mxu0 %v2617
        %v3894 = vpop.f32.mrb[0].mxu0
        %v3895 = vadd.f32 %v3114, %v3894
        %v3896 = vpop.f32.mrb[0].mxu0
        %v3897 = vadd.f32 %v3118, %v3896
        %3898 = vmatprep.mubr.f32.mxu0 %v2622
        %3899 = vmatmul.mubr.f32.gmra.mrb[0].mxu0 %v2621
        %v3900 = vpop.f32.mrb[0].mxu0
        %v3901 = vadd.f32 %v3114, %v3900
        %v3902 = vpop.f32.mrb[0].mxu0
        %v3903 = vadd.f32 %v3118, %v3902
        %3904 = vmatprep.mubr.f32.mxu0 %v2626
        %3905 = vmatmul.mubr.f32.gmra.mrb[0].mxu0 %v2625
        %v3906 = vpop.f32.mrb[0].mxu0
        %v3907 = vadd.f32 %v3114, %v3906
        %v3908 = vpop.f32.mrb[0].mxu0
        %v3909 = vadd.f32 %v3118, %v3908
        %3910 = vmatprep.mubr.f32.mxu0 %v2630
        %3911 = vmatmul.mubr.f32.gmra.mrb[0].mxu0 %v2629
        %v3912 = vpop.f32.mrb[0].mxu0
        %v3913 = vadd.f32 %v3114, %v3912
        %v3914 = vpop.f32.mrb[0].mxu0
        %v3915 = vadd.f32 %v3118, %v3914
        %3916 = vmatprep.mubr.f32.mxu0 %v2634
        %3917 = vmatmul.mubr.f32.gmra.mrb[0].mxu0 %v2633
        %v3918 = vpop.f32.mrb[0].mxu0
        %v3919 = vadd.f32 %v3114, %v3918
        %v3920 = vpop.f32.mrb[0].mxu0
        %v3921 = vadd.f32 %v3118, %v3920
        %3922 = vmatprep.mubr.f32.mxu0 %v2638
        %3923 = vmatmul.mubr.f32.gmra.mrb[0].mxu0 %v2637
        %v3924 = vpop.f32.mrb[0].mxu0
        %v3925 = vadd.f32 %v3114, %v3924
        %v3926 = vpop.f32.mrb[0].mxu0
        %v3927 = vadd.f32 %v3118, %v3926
        %3928 = vmatprep.mubr.f32.mxu0 %v2642
        %3929 = vmatmul.mubr.f32.gmra.mrb[0].mxu0 %v2641
        %v3930 = vpop.f32.mrb[0].mxu0
        %v3931 = vadd.f32 %v3114, %v3930
        %v3932 = vpop.f32.mrb[0].mxu0
        %v3933 = vadd.f32 %v3118, %v3932
        %3934 = vdwg.mxu0
        %3935 = vmatprep.subr.mxu0 %v2874
        %3936 = vmatpush1.msra.mxu0 %v2873
        %3937 = vmatprep.subr.mxu0 %v2881
        %3938 = vmatpush1.msra.mxu0 %v2880
        %3939 = vmatprep.subr.mxu0 %v2888
        %3940 = vmatpush1.msra.mxu0 %v2887
        %3941 = vmatprep.subr.mxu0 %v2895
        %3942 = vmatpush1.msra.mxu0 %v2894
        %3943 = vmatprep.subr.mxu0 %v2902
        %3944 = vmatpush1.msra.mxu0 %v2901
        %3945 = vmatprep.subr.mxu0 %v2909
        %3946 = vmatpush1.msra.mxu0 %v2908
        %3947 = vmatprep.subr.mxu0 %v2916
        %3948 = vmatpush1.msra.mxu0 %v2915
        %3949 = vmatprep.subr.mxu0 %v2923
        %3950 = vmatpush1.msra.mxu0 %v2922
        %3951 = vmatprep.subr.mxu0 %v2930
        %3952 = vmatpush1.msra.mxu0 %v2929
        %3953 = vmatprep.subr.mxu0 %v2937
        %3954 = vmatpush1.msra.mxu0 %v2936
        %3955 = vmatprep.subr.mxu0 %v2944
        %3956 = vmatpush1.msra.mxu0 %v2943
        %3957 = vmatprep.subr.mxu0 %v2951
        %3958 = vmatpush1.msra.mxu0 %v2950
        %3959 = vmatprep.subr.mxu0 %v2958
        %3960 = vmatpush1.msra.mxu0 %v2957
        %3961 = vmatprep.subr.mxu0 %v2965
        %3962 = vmatpush1.msra.mxu0 %v2964
        %3963 = vmatprep.subr.mxu0 %v2972
        %3964 = vmatpush1.msra.mxu0 %v2971
        %3965 = vmatprep.subr.mxu0 %v2979
        %3966 = vmatpush1.msra.mxu0 %v2978
        %3967 = vmatprep.subr.mxu0 %v2986
        %3968 = vmatpush1.msra.mxu0 %v2985
        %3969 = vmatprep.subr.mxu0 %v2993
        %3970 = vmatpush1.msra.mxu0 %v2992
        %3971 = vmatprep.subr.mxu0 %v3000
        %3972 = vmatpush1.msra.mxu0 %v2999
        %3973 = vmatprep.subr.mxu0 %v3007
        %3974 = vmatpush1.msra.mxu0 %v3006
        %3975 = vmatprep.subr.mxu0 %v3014
        %3976 = vmatpush1.msra.mxu0 %v3013
        %3977 = vmatprep.subr.mxu0 %v3021
        %3978 = vmatpush1.msra.mxu0 %v3020
        %3979 = vmatprep.subr.mxu0 %v3028
        %3980 = vmatpush1.msra.mxu0 %v3027
        %3981 = vmatprep.subr.mxu0 %v3035
        %3982 = vmatpush1.msra.mxu0 %v3034
        %3983 = vmatprep.subr.mxu0 %v3042
        %3984 = vmatpush1.msra.mxu0 %v3041
        %3985 = vmatprep.subr.mxu0 %v3049
        %3986 = vmatpush1.msra.mxu0 %v3048
        %3987 = vmatprep.subr.mxu0 %v3056
        %3988 = vmatpush1.msra.mxu0 %v3055
        %3989 = vmatprep.subr.mxu0 %v3063
        %3990 = vmatpush1.msra.mxu0 %v3062
        %3991 = vmatprep.subr.mxu0 %v3070
        %3992 = vmatpush1.msra.mxu0 %v3069
        %3993 = vmatprep.subr.mxu0 %v3077
        %3994 = vmatpush1.msra.mxu0 %v3076
        %3995 = vmatprep.subr.mxu0 %v3084
        %3996 = vmatpush1.msra.mxu0 %v3083
        %3997 = vmatprep.subr.mxu0 %v3091
        %3998 = vmatpush1.msra.mxu0 %v3090
        %3999 = vmatprep.mubr.f32.mxu0 %v2584
        %4000 = vmatmul.mubr.f32.gmra.mrb[0].mxu0 %v2583
        %v4001 = vpop.f32.mrb[0].mxu0
        %v4002 = vadd.f32 %v3841, %v4001
        %v4003 = vpop.f32.mrb[0].mxu0
        %v4004 = vadd.f32 %v3843, %v4003
        %4005 = vmatprep.mubr.f32.mxu0 %v2588
        %4006 = vmatmul.mubr.f32.gmra.mrb[0].mxu0 %v2587
        %v4007 = vpop.f32.mrb[0].mxu0
        %v4008 = vadd.f32 %v3847, %v4007
        %v4009 = vpop.f32.mrb[0].mxu0
        %v4010 = vadd.f32 %v3849, %v4009
        %4011 = vmatprep.mubr.f32.mxu0 %v2592
        %4012 = vmatmul.mubr.f32.gmra.mrb[0].mxu0 %v2591
        %v4013 = vpop.f32.mrb[0].mxu0
        %v4014 = vadd.f32 %v3853, %v4013
        %v4015 = vpop.f32.mrb[0].mxu0
        %v4016 = vadd.f32 %v3855, %v4015
        %4017 = vmatprep.mubr.f32.mxu0 %v2596
        %4018 = vmatmul.mubr.f32.gmra.mrb[0].mxu0 %v2595
        %v4019 = vpop.f32.mrb[0].mxu0
        %v4020 = vadd.f32 %v3859, %v4019
        %v4021 = vpop.f32.mrb[0].mxu0
        %v4022 = vadd.f32 %v3861, %v4021
        %4023 = vmatprep.mubr.f32.mxu0 %v2600
        %4024 = vmatmul.mubr.f32.gmra.mrb[0].mxu0 %v2599
        %v4025 = vpop.f32.mrb[0].mxu0
        %v4026 = vadd.f32 %v3865, %v4025
        %v4027 = vpop.f32.mrb[0].mxu0
        %v4028 = vadd.f32 %v3867, %v4027
        %4029 = vmatprep.mubr.f32.mxu0 %v2604
        %4030 = vmatmul.mubr.f32.gmra.mrb[0].mxu0 %v2603
        %v4031 = vpop.f32.mrb[0].mxu0
        %v4032 = vadd.f32 %v3871, %v4031
        %v4033 = vpop.f32.mrb[0].mxu0
        %v4034 = vadd.f32 %v3873, %v4033
        %4035 = vmatprep.mubr.f32.mxu0 %v2608
        %4036 = vmatmul.mubr.f32.gmra.mrb[0].mxu0 %v2607
        %v4037 = vpop.f32.mrb[0].mxu0
        %v4038 = vadd.f32 %v3877, %v4037
        %v4039 = vpop.f32.mrb[0].mxu0
        %v4040 = vadd.f32 %v3879, %v4039
        %4041 = vmatprep.mubr.f32.mxu0 %v2612
        %4042 = vmatmul.mubr.f32.gmra.mrb[0].mxu0 %v2611
        %v4043 = vpop.f32.mrb[0].mxu0
        %v4044 = vadd.f32 %v3883, %v4043
        %v4045 = vpop.f32.mrb[0].mxu0
        %v4046 = vadd.f32 %v3885, %v4045
        %4047 = vmatprep.mubr.f32.mxu0 %v2616
        %4048 = vmatmul.mubr.f32.gmra.mrb[0].mxu0 %v2615
        %v4049 = vpop.f32.mrb[0].mxu0
        %v4050 = vadd.f32 %v3889, %v4049
        %v4051 = vpop.f32.mrb[0].mxu0
        %v4052 = vadd.f32 %v3891, %v4051
        %4053 = vmatprep.mubr.f32.mxu0 %v2620
        %4054 = vmatmul.mubr.f32.gmra.mrb[0].mxu0 %v2619
        %v4055 = vpop.f32.mrb[0].mxu0
        %v4056 = vadd.f32 %v3895, %v4055
        %v4057 = vpop.f32.mrb[0].mxu0
        %v4058 = vadd.f32 %v3897, %v4057
        %4059 = vmatprep.mubr.f32.mxu0 %v2624
        %4060 = vmatmul.mubr.f32.gmra.mrb[0].mxu0 %v2623
        %v4061 = vpop.f32.mrb[0].mxu0
        %v4062 = vadd.f32 %v3901, %v4061
        %v4063 = vpop.f32.mrb[0].mxu0
        %v4064 = vadd.f32 %v3903, %v4063
        %4065 = vmatprep.mubr.f32.mxu0 %v2628
        %4066 = vmatmul.mubr.f32.gmra.mrb[0].mxu0 %v2627
        %v4067 = vpop.f32.mrb[0].mxu0
        %v4068 = vadd.f32 %v3907, %v4067
        %v4069 = vpop.f32.mrb[0].mxu0
        %v4070 = vadd.f32 %v3909, %v4069
        %4071 = vmatprep.mubr.f32.mxu0 %v2632
        %4072 = vmatmul.mubr.f32.gmra.mrb[0].mxu0 %v2631
        %v4073 = vpop.f32.mrb[0].mxu0
        %v4074 = vadd.f32 %v3913, %v4073
        %v4075 = vpop.f32.mrb[0].mxu0
        %v4076 = vadd.f32 %v3915, %v4075
        %4077 = vmatprep.mubr.f32.mxu0 %v2636
        %4078 = vmatmul.mubr.f32.gmra.mrb[0].mxu0 %v2635
        %v4079 = vpop.f32.mrb[0].mxu0
        %v4080 = vadd.f32 %v3919, %v4079
        %v4081 = vpop.f32.mrb[0].mxu0
        %v4082 = vadd.f32 %v3921, %v4081
        %4083 = vmatprep.mubr.f32.mxu0 %v2640
        %4084 = vmatmul.mubr.f32.gmra.mrb[0].mxu0 %v2639
        %v4085 = vpop.f32.mrb[0].mxu0
        %v4086 = vadd.f32 %v3925, %v4085
        %v4087 = vpop.f32.mrb[0].mxu0
        %v4088 = vadd.f32 %v3927, %v4087
        %4089 = vmatprep.mubr.f32.mxu0 %v2644
        %4090 = vmatmul.mubr.f32.gmra.mrb[0].mxu0 %v2643
        %v4091 = vpop.f32.mrb[0].mxu0
        %v4092 = vadd.f32 %v3931, %v4091
        %v4093 = vpop.f32.mrb[0].mxu0
        %v4094 = vadd.f32 %v3933, %v4093
        %4095 = vdwg.mxu0
        %4096 = vmatprep.subr.mxu0 0.0
        %4097 = vmatpush1.msra.mxu0 %v2651
        %4098 = vmatprep.subr.mxu0 0.0
        %4099 = vmatpush1.msra.mxu0 %v2658
        %4100 = vmatprep.subr.mxu0 0.0
        %4101 = vmatpush1.msra.mxu0 %v2665
        %4102 = vmatprep.subr.mxu0 0.0
        %4103 = vmatpush1.msra.mxu0 %v2672
        %4104 = vmatprep.subr.mxu0 0.0
        %4105 = vmatpush1.msra.mxu0 %v2679
        %4106 = vmatprep.subr.mxu0 0.0
        %4107 = vmatpush1.msra.mxu0 %v2686
        %4108 = vmatprep.subr.mxu0 0.0
        %4109 = vmatpush1.msra.mxu0 %v2693
        %4110 = vmatprep.subr.mxu0 0.0
        %4111 = vmatpush1.msra.mxu0 %v2700
        %4112 = vmatprep.subr.mxu0 0.0
        %4113 = vmatpush1.msra.mxu0 %v2707
        %4114 = vmatprep.subr.mxu0 0.0
        %4115 = vmatpush1.msra.mxu0 %v2714
        %4116 = vmatprep.subr.mxu0 0.0
        %4117 = vmatpush1.msra.mxu0 %v2721
        %4118 = vmatprep.subr.mxu0 0.0
        %4119 = vmatpush1.msra.mxu0 %v2728
        %4120 = vmatprep.subr.mxu0 0.0
        %4121 = vmatpush1.msra.mxu0 %v2735
        %4122 = vmatprep.subr.mxu0 0.0
        %4123 = vmatpush1.msra.mxu0 %v2742
        %4124 = vmatprep.subr.mxu0 0.0
        %4125 = vmatpush1.msra.mxu0 %v2749
        %4126 = vmatprep.subr.mxu0 0.0
        %4127 = vmatpush1.msra.mxu0 %v2756
        %4128 = vmatprep.subr.mxu0 0.0
        %4129 = vmatpush1.msra.mxu0 %v2763
        %4130 = vmatprep.subr.mxu0 0.0
        %4131 = vmatpush1.msra.mxu0 %v2770
        %4132 = vmatprep.subr.mxu0 0.0
        %4133 = vmatpush1.msra.mxu0 %v2777
        %4134 = vmatprep.subr.mxu0 0.0
        %4135 = vmatpush1.msra.mxu0 %v2784
        %4136 = vmatprep.subr.mxu0 0.0
        %4137 = vmatpush1.msra.mxu0 %v2791
        %4138 = vmatprep.subr.mxu0 0.0
        %4139 = vmatpush1.msra.mxu0 %v2798
        %4140 = vmatprep.subr.mxu0 0.0
        %4141 = vmatpush1.msra.mxu0 %v2805
        %4142 = vmatprep.subr.mxu0 0.0
        %4143 = vmatpush1.msra.mxu0 %v2812
        %4144 = vmatprep.subr.mxu0 0.0
        %4145 = vmatpush1.msra.mxu0 %v2819
        %4146 = vmatprep.subr.mxu0 0.0
        %4147 = vmatpush1.msra.mxu0 %v2826
        %4148 = vmatprep.subr.mxu0 0.0
        %4149 = vmatpush1.msra.mxu0 %v2833
        %4150 = vmatprep.subr.mxu0 0.0
        %4151 = vmatpush1.msra.mxu0 %v2840
        %4152 = vmatprep.subr.mxu0 0.0
        %4153 = vmatpush1.msra.mxu0 %v2847
        %4154 = vmatprep.subr.mxu0 0.0
        %4155 = vmatpush1.msra.mxu0 %v2854
        %4156 = vmatprep.subr.mxu0 0.0
        %4157 = vmatpush1.msra.mxu0 %v2861
        %4158 = vmatprep.subr.mxu0 0.0
        %4159 = vmatpush1.msra.mxu0 %v2868
        %4160 = vmatprep.mubr.f32.mxu0 %v2582
        %4161 = vmatmul.mubr.f32.gmra.mrb[0].mxu0 %v2581
        %v4162 = vpop.f32.mrb[0].mxu0
        %v4163 = vadd.f32 %v3122, %v4162
        %v4164 = vpop.f32.mrb[0].mxu0
        %4165 = vmatprep.mubr.f32.mxu0 %v2586
        %4166 = vmatmul.mubr.f32.gmra.mrb[0].mxu0 %v2585
        %v4167 = vpop.f32.mrb[0].mxu0
        %v4168 = vadd.f32 %v3122, %v4167
        %v4169 = vpop.f32.mrb[0].mxu0
        %4170 = vmatprep.mubr.f32.mxu0 %v2590
        %4171 = vmatmul.mubr.f32.gmra.mrb[0].mxu0 %v2589
        %v4172 = vpop.f32.mrb[0].mxu0
        %v4173 = vadd.f32 %v3122, %v4172
        %v4174 = vpop.f32.mrb[0].mxu0
        %4175 = vmatprep.mubr.f32.mxu0 %v2594
        %4176 = vmatmul.mubr.f32.gmra.mrb[0].mxu0 %v2593
        %v4177 = vpop.f32.mrb[0].mxu0
        %v4178 = vadd.f32 %v3122, %v4177
        %v4179 = vpop.f32.mrb[0].mxu0
        %4180 = vmatprep.mubr.f32.mxu0 %v2598
        %4181 = vmatmul.mubr.f32.gmra.mrb[0].mxu0 %v2597
        %v4182 = vpop.f32.mrb[0].mxu0
        %v4183 = vadd.f32 %v3122, %v4182
        %v4184 = vpop.f32.mrb[0].mxu0
        %4185 = vmatprep.mubr.f32.mxu0 %v2602
        %4186 = vmatmul.mubr.f32.gmra.mrb[0].mxu0 %v2601
        %v4187 = vpop.f32.mrb[0].mxu0
        %v4188 = vadd.f32 %v3122, %v4187
        %v4189 = vpop.f32.mrb[0].mxu0
        %4190 = vmatprep.mubr.f32.mxu0 %v2606
        %4191 = vmatmul.mubr.f32.gmra.mrb[0].mxu0 %v2605
        %v4192 = vpop.f32.mrb[0].mxu0
        %v4193 = vadd.f32 %v3122, %v4192
        %v4194 = vpop.f32.mrb[0].mxu0
        %4195 = vmatprep.mubr.f32.mxu0 %v2610
        %4196 = vmatmul.mubr.f32.gmra.mrb[0].mxu0 %v2609
        %v4197 = vpop.f32.mrb[0].mxu0
        %v4198 = vadd.f32 %v3122, %v4197
        %v4199 = vpop.f32.mrb[0].mxu0
        %4200 = vmatprep.mubr.f32.mxu0 %v2614
        %4201 = vmatmul.mubr.f32.gmra.mrb[0].mxu0 %v2613
        %v4202 = vpop.f32.mrb[0].mxu0
        %v4203 = vadd.f32 %v3122, %v4202
        %v4204 = vpop.f32.mrb[0].mxu0
        %4205 = vmatprep.mubr.f32.mxu0 %v2618
        %4206 = vmatmul.mubr.f32.gmra.mrb[0].mxu0 %v2617
        %v4207 = vpop.f32.mrb[0].mxu0
        %v4208 = vadd.f32 %v3122, %v4207
        %v4209 = vpop.f32.mrb[0].mxu0
        %4210 = vmatprep.mubr.f32.mxu0 %v2622
        %4211 = vmatmul.mubr.f32.gmra.mrb[0].mxu0 %v2621
        %v4212 = vpop.f32.mrb[0].mxu0
        %v4213 = vadd.f32 %v3122, %v4212
        %v4214 = vpop.f32.mrb[0].mxu0
        %4215 = vmatprep.mubr.f32.mxu0 %v2626
        %4216 = vmatmul.mubr.f32.gmra.mrb[0].mxu0 %v2625
        %v4217 = vpop.f32.mrb[0].mxu0
        %v4218 = vadd.f32 %v3122, %v4217
        %v4219 = vpop.f32.mrb[0].mxu0
        %4220 = vmatprep.mubr.f32.mxu0 %v2630
        %4221 = vmatmul.mubr.f32.gmra.mrb[0].mxu0 %v2629
        %v4222 = vpop.f32.mrb[0].mxu0
        %v4223 = vadd.f32 %v3122, %v4222
        %v4224 = vpop.f32.mrb[0].mxu0
        %4225 = vmatprep.mubr.f32.mxu0 %v2634
        %4226 = vmatmul.mubr.f32.gmra.mrb[0].mxu0 %v2633
        %v4227 = vpop.f32.mrb[0].mxu0
        %v4228 = vadd.f32 %v3122, %v4227
        %v4229 = vpop.f32.mrb[0].mxu0
        %4230 = vmatprep.mubr.f32.mxu0 %v2638
        %4231 = vmatmul.mubr.f32.gmra.mrb[0].mxu0 %v2637
        %v4232 = vpop.f32.mrb[0].mxu0
        %v4233 = vadd.f32 %v3122, %v4232
        %v4234 = vpop.f32.mrb[0].mxu0
        %4235 = vmatprep.mubr.f32.mxu0 %v2642
        %4236 = vmatmul.mubr.f32.gmra.mrb[0].mxu0 %v2641
        %v4237 = vpop.f32.mrb[0].mxu0
        %v4238 = vadd.f32 %v3122, %v4237
        %v4239 = vpop.f32.mrb[0].mxu0
        %4240 = vdwg.mxu0
        %4241 = vmatprep.subr.mxu0 0.0
        %4242 = vmatpush1.msra.mxu0 %v2875
        %4243 = vmatprep.subr.mxu0 0.0
        %4244 = vmatpush1.msra.mxu0 %v2882
        %4245 = vmatprep.subr.mxu0 0.0
        %4246 = vmatpush1.msra.mxu0 %v2889
        %4247 = vmatprep.subr.mxu0 0.0
        %4248 = vmatpush1.msra.mxu0 %v2896
        %4249 = vmatprep.subr.mxu0 0.0
        %4250 = vmatpush1.msra.mxu0 %v2903
        %4251 = vmatprep.subr.mxu0 0.0
        %4252 = vmatpush1.msra.mxu0 %v2910
        %4253 = vmatprep.subr.mxu0 0.0
        %4254 = vmatpush1.msra.mxu0 %v2917
        %4255 = vmatprep.subr.mxu0 0.0
        %4256 = vmatpush1.msra.mxu0 %v2924
        %4257 = vmatprep.subr.mxu0 0.0
        %4258 = vmatpush1.msra.mxu0 %v2931
        %4259 = vmatprep.subr.mxu0 0.0
        %4260 = vmatpush1.msra.mxu0 %v2938
        %4261 = vmatprep.subr.mxu0 0.0
        %4262 = vmatpush1.msra.mxu0 %v2945
        %4263 = vmatprep.subr.mxu0 0.0
        %4264 = vmatpush1.msra.mxu0 %v2952
        %4265 = vmatprep.subr.mxu0 0.0
        %4266 = vmatpush1.msra.mxu0 %v2959
        %4267 = vmatprep.subr.mxu0 0.0
        %4268 = vmatpush1.msra.mxu0 %v2966
        %4269 = vmatprep.subr.mxu0 0.0
        %4270 = vmatpush1.msra.mxu0 %v2973
        %4271 = vmatprep.subr.mxu0 0.0
        %4272 = vmatpush1.msra.mxu0 %v2980
        %4273 = vmatprep.subr.mxu0 0.0
        %4274 = vmatpush1.msra.mxu0 %v2987
        %4275 = vmatprep.subr.mxu0 0.0
        %4276 = vmatpush1.msra.mxu0 %v2994
        %4277 = vmatprep.subr.mxu0 0.0
        %4278 = vmatpush1.msra.mxu0 %v3001
        %4279 = vmatprep.subr.mxu0 0.0
        %4280 = vmatpush1.msra.mxu0 %v3008
        %4281 = vmatprep.subr.mxu0 0.0
        %4282 = vmatpush1.msra.mxu0 %v3015
        %4283 = vmatprep.subr.mxu0 0.0
        %4284 = vmatpush1.msra.mxu0 %v3022
        %4285 = vmatprep.subr.mxu0 0.0
        %4286 = vmatpush1.msra.mxu0 %v3029
        %4287 = vmatprep.subr.mxu0 0.0
        %4288 = vmatpush1.msra.mxu0 %v3036
        %4289 = vmatprep.subr.mxu0 0.0
        %4290 = vmatpush1.msra.mxu0 %v3043
        %4291 = vmatprep.subr.mxu0 0.0
        %4292 = vmatpush1.msra.mxu0 %v3050
        %4293 = vmatprep.subr.mxu0 0.0
        %4294 = vmatpush1.msra.mxu0 %v3057
        %4295 = vmatprep.subr.mxu0 0.0
        %4296 = vmatpush1.msra.mxu0 %v3064
        %4297 = vmatprep.subr.mxu0 0.0
        %4298 = vmatpush1.msra.mxu0 %v3071
        %4299 = vmatprep.subr.mxu0 0.0
        %4300 = vmatpush1.msra.mxu0 %v3078
        %4301 = vmatprep.subr.mxu0 0.0
        %4302 = vmatpush1.msra.mxu0 %v3085
        %4303 = vmatprep.subr.mxu0 0.0
        %4304 = vmatpush1.msra.mxu0 %v3092
        %4305 = vmatprep.mubr.f32.mxu0 %v2584
        %4306 = vmatmul.mubr.f32.gmra.mrb[0].mxu0 %v2583
        %v4307 = vpop.f32.mrb[0].mxu0
        %v4308 = vadd.f32 %v4163, %v4307
        %v4309 = vpop.f32.mrb[0].mxu0
        %4310 = vmatprep.mubr.f32.mxu0 %v2588
        %4311 = vmatmul.mubr.f32.gmra.mrb[0].mxu0 %v2587
        %v4312 = vpop.f32.mrb[0].mxu0
        %v4313 = vadd.f32 %v4168, %v4312
        %v4314 = vpop.f32.mrb[0].mxu0
        %4315 = vmatprep.mubr.f32.mxu0 %v2592
        %4316 = vmatmul.mubr.f32.gmra.mrb[0].mxu0 %v2591
        %v4317 = vpop.f32.mrb[0].mxu0
        %v4318 = vadd.f32 %v4173, %v4317
        %v4319 = vpop.f32.mrb[0].mxu0
        %4320 = vmatprep.mubr.f32.mxu0 %v2596
        %4321 = vmatmul.mubr.f32.gmra.mrb[0].mxu0 %v2595
        %v4322 = vpop.f32.mrb[0].mxu0
        %v4323 = vadd.f32 %v4178, %v4322
        %v4324 = vpop.f32.mrb[0].mxu0
        %4325 = vmatprep.mubr.f32.mxu0 %v2600
        %4326 = vmatmul.mubr.f32.gmra.mrb[0].mxu0 %v2599
        %v4327 = vpop.f32.mrb[0].mxu0
        %v4328 = vadd.f32 %v4183, %v4327
        %v4329 = vpop.f32.mrb[0].mxu0
        %4330 = vmatprep.mubr.f32.mxu0 %v2604
        %4331 = vmatmul.mubr.f32.gmra.mrb[0].mxu0 %v2603
        %v4332 = vpop.f32.mrb[0].mxu0
        %v4333 = vadd.f32 %v4188, %v4332
        %v4334 = vpop.f32.mrb[0].mxu0
        %4335 = vmatprep.mubr.f32.mxu0 %v2608
        %4336 = vmatmul.mubr.f32.gmra.mrb[0].mxu0 %v2607
        %v4337 = vpop.f32.mrb[0].mxu0
        %v4338 = vadd.f32 %v4193, %v4337
        %v4339 = vpop.f32.mrb[0].mxu0
        %4340 = vmatprep.mubr.f32.mxu0 %v2612
        %4341 = vmatmul.mubr.f32.gmra.mrb[0].mxu0 %v2611
        %v4342 = vpop.f32.mrb[0].mxu0
        %v4343 = vadd.f32 %v4198, %v4342
        %v4344 = vpop.f32.mrb[0].mxu0
        %4345 = vmatprep.mubr.f32.mxu0 %v2616
        %4346 = vmatmul.mubr.f32.gmra.mrb[0].mxu0 %v2615
        %v4347 = vpop.f32.mrb[0].mxu0
        %v4348 = vadd.f32 %v4203, %v4347
        %v4349 = vpop.f32.mrb[0].mxu0
        %4350 = vmatprep.mubr.f32.mxu0 %v2620
        %4351 = vmatmul.mubr.f32.gmra.mrb[0].mxu0 %v2619
        %v4352 = vpop.f32.mrb[0].mxu0
        %v4353 = vadd.f32 %v4208, %v4352
        %v4354 = vpop.f32.mrb[0].mxu0
        %4355 = vmatprep.mubr.f32.mxu0 %v2624
        %4356 = vmatmul.mubr.f32.gmra.mrb[0].mxu0 %v2623
        %v4357 = vpop.f32.mrb[0].mxu0
        %v4358 = vadd.f32 %v4213, %v4357
        %v4359 = vpop.f32.mrb[0].mxu0
        %4360 = vmatprep.mubr.f32.mxu0 %v2628
        %4361 = vmatmul.mubr.f32.gmra.mrb[0].mxu0 %v2627
        %v4362 = vpop.f32.mrb[0].mxu0
        %v4363 = vadd.f32 %v4218, %v4362
        %v4364 = vpop.f32.mrb[0].mxu0
        %4365 = vmatprep.mubr.f32.mxu0 %v2632
        %4366 = vmatmul.mubr.f32.gmra.mrb[0].mxu0 %v2631
        %v4367 = vpop.f32.mrb[0].mxu0
        %v4368 = vadd.f32 %v4223, %v4367
        %v4369 = vpop.f32.mrb[0].mxu0
        %4370 = vmatprep.mubr.f32.mxu0 %v2636
        %4371 = vmatmul.mubr.f32.gmra.mrb[0].mxu0 %v2635
        %v4372 = vpop.f32.mrb[0].mxu0
        %v4373 = vadd.f32 %v4228, %v4372
        %v4374 = vpop.f32.mrb[0].mxu0
        %4375 = vmatprep.mubr.f32.mxu0 %v2640
        %4376 = vmatmul.mubr.f32.gmra.mrb[0].mxu0 %v2639
        %v4377 = vpop.f32.mrb[0].mxu0
        %v4378 = vadd.f32 %v4233, %v4377
        %v4379 = vpop.f32.mrb[0].mxu0
        %4380 = vmatprep.mubr.f32.mxu0 %v2644
        %4381 = vmatmul.mubr.f32.gmra.mrb[0].mxu0 %v2643
        %v4382 = vpop.f32.mrb[0].mxu0
        %v4383 = vadd.f32 %v4238, %v4382
        %v4384 = vpop.f32.mrb[0].mxu0
        %4385 = vdwg.mxu0
        %v4386 = vxor.u32 %v3358, 2147483648
        %v4387 = vxor.u32 %v3360, 2147483648
        %v4388 = vxor.u32 %v3680, 2147483648
        %v4389 = vxor.u32 %v3682, 2147483648
        %v4390 = vxor.u32 %v4002, 2147483648
        %v4391 = vxor.u32 %v4004, 2147483648
        %v4392 = vxor.u32 %v4308, 2147483648
        %v4393 = vxor.u32 %v3364, 2147483648
        %v4394 = vxor.u32 %v3366, 2147483648
        %v4395 = vxor.u32 %v3686, 2147483648
        %v4396 = vxor.u32 %v3688, 2147483648
        %v4397 = vxor.u32 %v4008, 2147483648
        %v4398 = vxor.u32 %v4010, 2147483648
        %v4399 = vxor.u32 %v4313, 2147483648
        %v4400 = vxor.u32 %v3370, 2147483648
        %v4401 = vxor.u32 %v3372, 2147483648
        %v4402 = vxor.u32 %v3692, 2147483648
        %v4403 = vxor.u32 %v3694, 2147483648
        %v4404 = vxor.u32 %v4014, 2147483648
        %v4405 = vxor.u32 %v4016, 2147483648
        %v4406 = vxor.u32 %v4318, 2147483648
        %v4407 = vxor.u32 %v3376, 2147483648
        %v4408 = vxor.u32 %v3378, 2147483648
        %v4409 = vxor.u32 %v3698, 2147483648
        %v4410 = vxor.u32 %v3700, 2147483648
        %v4411 = vxor.u32 %v4020, 2147483648
        %v4412 = vxor.u32 %v4022, 2147483648
        %v4413 = vxor.u32 %v4323, 2147483648
        %v4414 = vxor.u32 %v3382, 2147483648
        %v4415 = vxor.u32 %v3384, 2147483648
        %v4416 = vxor.u32 %v3704, 2147483648
        %v4417 = vxor.u32 %v3706, 2147483648
        %v4418 = vxor.u32 %v4026, 2147483648
        %v4419 = vxor.u32 %v4028, 2147483648
        %v4420 = vxor.u32 %v4328, 2147483648
        %v4421 = vxor.u32 %v3388, 2147483648
        %v4422 = vxor.u32 %v3390, 2147483648
        %v4423 = vxor.u32 %v3710, 2147483648
        %v4424 = vxor.u32 %v3712, 2147483648
        %v4425 = vxor.u32 %v4032, 2147483648
        %v4426 = vxor.u32 %v4034, 2147483648
        %v4427 = vxor.u32 %v4333, 2147483648
        %v4428 = vxor.u32 %v3394, 2147483648
        %v4429 = vxor.u32 %v3396, 2147483648
        %v4430 = vxor.u32 %v3716, 2147483648
        %v4431 = vxor.u32 %v3718, 2147483648
        %v4432 = vxor.u32 %v4038, 2147483648
        %v4433 = vxor.u32 %v4040, 2147483648
        %v4434 = vxor.u32 %v4338, 2147483648
        %v4435 = vxor.u32 %v3400, 2147483648
        %v4436 = vxor.u32 %v3402, 2147483648
        %v4437 = vxor.u32 %v3722, 2147483648
        %v4438 = vxor.u32 %v3724, 2147483648
        %v4439 = vxor.u32 %v4044, 2147483648
        %v4440 = vxor.u32 %v4046, 2147483648
        %v4441 = vxor.u32 %v4343, 2147483648
        %v4442 = vxor.u32 %v3406, 2147483648
        %v4443 = vxor.u32 %v3408, 2147483648
        %v4444 = vxor.u32 %v3728, 2147483648
        %v4445 = vxor.u32 %v3730, 2147483648
        %v4446 = vxor.u32 %v4050, 2147483648
        %v4447 = vxor.u32 %v4052, 2147483648
        %v4448 = vxor.u32 %v4348, 2147483648
        %v4449 = vxor.u32 %v3412, 2147483648
        %v4450 = vxor.u32 %v3414, 2147483648
        %v4451 = vxor.u32 %v3734, 2147483648
        %v4452 = vxor.u32 %v3736, 2147483648
        %v4453 = vxor.u32 %v4056, 2147483648
        %v4454 = vxor.u32 %v4058, 2147483648
        %v4455 = vxor.u32 %v4353, 2147483648
        %v4456 = vxor.u32 %v3418, 2147483648
        %v4457 = vxor.u32 %v3420, 2147483648
        %v4458 = vxor.u32 %v3740, 2147483648
        %v4459 = vxor.u32 %v3742, 2147483648
        %v4460 = vxor.u32 %v4062, 2147483648
        %v4461 = vxor.u32 %v4064, 2147483648
        %v4462 = vxor.u32 %v4358, 2147483648
        %v4463 = vxor.u32 %v3424, 2147483648
        %v4464 = vxor.u32 %v3426, 2147483648
        %v4465 = vxor.u32 %v3746, 2147483648
        %v4466 = vxor.u32 %v3748, 2147483648
        %v4467 = vxor.u32 %v4068, 2147483648
        %v4468 = vxor.u32 %v4070, 2147483648
        %v4469 = vxor.u32 %v4363, 2147483648
        %v4470 = vxor.u32 %v3430, 2147483648
        %v4471 = vxor.u32 %v3432, 2147483648
        %v4472 = vxor.u32 %v3752, 2147483648
        %v4473 = vxor.u32 %v3754, 2147483648
        %v4474 = vxor.u32 %v4074, 2147483648
        %v4475 = vxor.u32 %v4076, 2147483648
        %v4476 = vxor.u32 %v4368, 2147483648
        %v4477 = vxor.u32 %v3436, 2147483648
        %v4478 = vxor.u32 %v3438, 2147483648
        %v4479 = vxor.u32 %v3758, 2147483648
        %v4480 = vxor.u32 %v3760, 2147483648
        %v4481 = vxor.u32 %v4080, 2147483648
        %v4482 = vxor.u32 %v4082, 2147483648
        %v4483 = vxor.u32 %v4373, 2147483648
        %v4484 = vxor.u32 %v3442, 2147483648
        %v4485 = vxor.u32 %v3444, 2147483648
        %v4486 = vxor.u32 %v3764, 2147483648
        %v4487 = vxor.u32 %v3766, 2147483648
        %v4488 = vxor.u32 %v4086, 2147483648
        %v4489 = vxor.u32 %v4088, 2147483648
        %v4490 = vxor.u32 %v4378, 2147483648
        %v4491 = vxor.u32 %v3448, 2147483648
        %v4492 = vxor.u32 %v3450, 2147483648
        %v4493 = vxor.u32 %v3770, 2147483648
        %v4494 = vxor.u32 %v3772, 2147483648
        %v4495 = vxor.u32 %v4092, 2147483648
        %v4496 = vxor.u32 %v4094, 2147483648
        %v4497 = vxor.u32 %v4383, 2147483648
        %v4498 = vmul.f32 %v4386, 1.442695
        %v4499 = vpow.pop %v4498
        %v4500 = vmul.f32 %v4387, 1.442695
        %v4501 = vpow.pop %v4500
        %v4502 = vmul.f32 %v4388, 1.442695
        %v4503 = vpow.pop %v4502
        %v4504 = vmul.f32 %v4389, 1.442695
        %v4505 = vpow.pop %v4504
        %v4506 = vmul.f32 %v4390, 1.442695
        %v4507 = vpow.pop %v4506
        %v4508 = vmul.f32 %v4391, 1.442695
        %v4509 = vpow.pop %v4508
        %v4510 = vmul.f32 %v4392, 1.442695
        %v4511 = vpow.pop %v4510
        %v4512 = vmul.f32 %v4393, 1.442695
        %v4513 = vpow.pop %v4512
        %v4514 = vmul.f32 %v4394, 1.442695
        %v4515 = vpow.pop %v4514
        %v4516 = vmul.f32 %v4395, 1.442695
        %v4517 = vpow.pop %v4516
        %v4518 = vmul.f32 %v4396, 1.442695
        %v4519 = vpow.pop %v4518
        %v4520 = vmul.f32 %v4397, 1.442695
        %v4521 = vpow.pop %v4520
        %v4522 = vmul.f32 %v4398, 1.442695
        %v4523 = vpow.pop %v4522
        %v4524 = vmul.f32 %v4399, 1.442695
        %v4525 = vpow.pop %v4524
        %v4526 = vmul.f32 %v4400, 1.442695
        %v4527 = vpow.pop %v4526
        %v4528 = vmul.f32 %v4401, 1.442695
        %v4529 = vpow.pop %v4528
        %v4530 = vmul.f32 %v4402, 1.442695
        %v4531 = vpow.pop %v4530
        %v4532 = vmul.f32 %v4403, 1.442695
        %v4533 = vpow.pop %v4532
        %v4534 = vmul.f32 %v4404, 1.442695
        %v4535 = vpow.pop %v4534
        %v4536 = vmul.f32 %v4405, 1.442695
        %v4537 = vpow.pop %v4536
        %v4538 = vmul.f32 %v4406, 1.442695
        %v4539 = vpow.pop %v4538
        %v4540 = vmul.f32 %v4407, 1.442695
        %v4541 = vpow.pop %v4540
        %v4542 = vmul.f32 %v4408, 1.442695
        %v4543 = vpow.pop %v4542
        %v4544 = vmul.f32 %v4409, 1.442695
        %v4545 = vpow.pop %v4544
        %v4546 = vmul.f32 %v4410, 1.442695
        %v4547 = vpow.pop %v4546
        %v4548 = vmul.f32 %v4411, 1.442695
        %v4549 = vpow.pop %v4548
        %v4550 = vmul.f32 %v4412, 1.442695
        %v4551 = vpow.pop %v4550
        %v4552 = vmul.f32 %v4413, 1.442695
        %v4553 = vpow.pop %v4552
        %v4554 = vmul.f32 %v4414, 1.442695
        %v4555 = vpow.pop %v4554
        %v4556 = vmul.f32 %v4415, 1.442695
        %v4557 = vpow.pop %v4556
        %v4558 = vmul.f32 %v4416, 1.442695
        %v4559 = vpow.pop %v4558
        %v4560 = vmul.f32 %v4417, 1.442695
        %v4561 = vpow.pop %v4560
        %v4562 = vmul.f32 %v4418, 1.442695
        %v4563 = vpow.pop %v4562
        %v4564 = vmul.f32 %v4419, 1.442695
        %v4565 = vpow.pop %v4564
        %v4566 = vmul.f32 %v4420, 1.442695
        %v4567 = vpow.pop %v4566
        %v4568 = vmul.f32 %v4421, 1.442695
        %v4569 = vpow.pop %v4568
        %v4570 = vmul.f32 %v4422, 1.442695
        %v4571 = vpow.pop %v4570
        %v4572 = vmul.f32 %v4423, 1.442695
        %v4573 = vpow.pop %v4572
        %v4574 = vmul.f32 %v4424, 1.442695
        %v4575 = vpow.pop %v4574
        %v4576 = vmul.f32 %v4425, 1.442695
        %v4577 = vpow.pop %v4576
        %v4578 = vmul.f32 %v4426, 1.442695
        %v4579 = vpow.pop %v4578
        %v4580 = vmul.f32 %v4427, 1.442695
        %v4581 = vpow.pop %v4580
        %v4582 = vmul.f32 %v4428, 1.442695
        %v4583 = vpow.pop %v4582
        %v4584 = vmul.f32 %v4429, 1.442695
        %v4585 = vpow.pop %v4584
        %v4586 = vmul.f32 %v4430, 1.442695
        %v4587 = vpow.pop %v4586
        %v4588 = vmul.f32 %v4431, 1.442695
        %v4589 = vpow.pop %v4588
        %v4590 = vmul.f32 %v4432, 1.442695
        %v4591 = vpow.pop %v4590
        %v4592 = vmul.f32 %v4433, 1.442695
        %v4593 = vpow.pop %v4592
        %v4594 = vmul.f32 %v4434, 1.442695
        %v4595 = vpow.pop %v4594
        %v4596 = vmul.f32 %v4435, 1.442695
        %v4597 = vpow.pop %v4596
        %v4598 = vmul.f32 %v4436, 1.442695
        %v4599 = vpow.pop %v4598
        %v4600 = vmul.f32 %v4437, 1.442695
        %v4601 = vpow.pop %v4600
        %v4602 = vmul.f32 %v4438, 1.442695
        %v4603 = vpow.pop %v4602
        %v4604 = vmul.f32 %v4439, 1.442695
        %v4605 = vpow.pop %v4604
        %v4606 = vmul.f32 %v4440, 1.442695
        %v4607 = vpow.pop %v4606
        %v4608 = vmul.f32 %v4441, 1.442695
        %v4609 = vpow.pop %v4608
        %v4610 = vmul.f32 %v4442, 1.442695
        %v4611 = vpow.pop %v4610
        %v4612 = vmul.f32 %v4443, 1.442695
        %v4613 = vpow.pop %v4612
        %v4614 = vmul.f32 %v4444, 1.442695
        %v4615 = vpow.pop %v4614
        %v4616 = vmul.f32 %v4445, 1.442695
        %v4617 = vpow.pop %v4616
        %v4618 = vmul.f32 %v4446, 1.442695
        %v4619 = vpow.pop %v4618
        %v4620 = vmul.f32 %v4447, 1.442695
        %v4621 = vpow.pop %v4620
        %v4622 = vmul.f32 %v4448, 1.442695
        %v4623 = vpow.pop %v4622
        %v4624 = vmul.f32 %v4449, 1.442695
        %v4625 = vpow.pop %v4624
        %v4626 = vmul.f32 %v4450, 1.442695
        %v4627 = vpow.pop %v4626
        %v4628 = vmul.f32 %v4451, 1.442695
        %v4629 = vpow.pop %v4628
        %v4630 = vmul.f32 %v4452, 1.442695
        %v4631 = vpow.pop %v4630
        %v4632 = vmul.f32 %v4453, 1.442695
        %v4633 = vpow.pop %v4632
        %v4634 = vmul.f32 %v4454, 1.442695
        %v4635 = vpow.pop %v4634
        %v4636 = vmul.f32 %v4455, 1.442695
        %v4637 = vpow.pop %v4636
        %v4638 = vmul.f32 %v4456, 1.442695
        %v4639 = vpow.pop %v4638
        %v4640 = vmul.f32 %v4457, 1.442695
        %v4641 = vpow.pop %v4640
        %v4642 = vmul.f32 %v4458, 1.442695
        %v4643 = vpow.pop %v4642
        %v4644 = vmul.f32 %v4459, 1.442695
        %v4645 = vpow.pop %v4644
        %v4646 = vmul.f32 %v4460, 1.442695
        %v4647 = vpow.pop %v4646
        %v4648 = vmul.f32 %v4461, 1.442695
        %v4649 = vpow.pop %v4648
        %v4650 = vmul.f32 %v4462, 1.442695
        %v4651 = vpow.pop %v4650
        %v4652 = vmul.f32 %v4463, 1.442695
        %v4653 = vpow.pop %v4652
        %v4654 = vmul.f32 %v4464, 1.442695
        %v4655 = vpow.pop %v4654
        %v4656 = vmul.f32 %v4465, 1.442695
        %v4657 = vpow.pop %v4656
        %v4658 = vmul.f32 %v4466, 1.442695
        %v4659 = vpow.pop %v4658
        %v4660 = vmul.f32 %v4467, 1.442695
        %v4661 = vpow.pop %v4660
        %v4662 = vmul.f32 %v4468, 1.442695
        %v4663 = vpow.pop %v4662
        %v4664 = vmul.f32 %v4469, 1.442695
        %v4665 = vpow.pop %v4664
        %v4666 = vmul.f32 %v4470, 1.442695
        %v4667 = vpow.pop %v4666
        %v4668 = vmul.f32 %v4471, 1.442695
        %v4669 = vpow.pop %v4668
        %v4670 = vmul.f32 %v4472, 1.442695
        %v4671 = vpow.pop %v4670
        %v4672 = vmul.f32 %v4473, 1.442695
        %v4673 = vpow.pop %v4672
        %v4674 = vmul.f32 %v4474, 1.442695
        %v4675 = vpow.pop %v4674
        %v4676 = vmul.f32 %v4475, 1.442695
        %v4677 = vpow.pop %v4676
        %v4678 = vmul.f32 %v4476, 1.442695
        %v4679 = vpow.pop %v4678
        %v4680 = vmul.f32 %v4477, 1.442695
        %v4681 = vpow.pop %v4680
        %v4682 = vmul.f32 %v4478, 1.442695
        %v4683 = vpow.pop %v4682
        %v4684 = vmul.f32 %v4479, 1.442695
        %v4685 = vpow.pop %v4684
        %v4686 = vmul.f32 %v4480, 1.442695
        %v4687 = vpow.pop %v4686
        %v4688 = vmul.f32 %v4481, 1.442695
        %v4689 = vpow.pop %v4688
        %v4690 = vmul.f32 %v4482, 1.442695
        %v4691 = vpow.pop %v4690
        %v4692 = vmul.f32 %v4483, 1.442695
        %v4693 = vpow.pop %v4692
        %v4694 = vmul.f32 %v4484, 1.442695
        %v4695 = vpow.pop %v4694
        %v4696 = vmul.f32 %v4485, 1.442695
        %v4697 = vpow.pop %v4696
        %v4698 = vmul.f32 %v4486, 1.442695
        %v4699 = vpow.pop %v4698
        %v4700 = vmul.f32 %v4487, 1.442695
        %v4701 = vpow.pop %v4700
        %v4702 = vmul.f32 %v4488, 1.442695
        %v4703 = vpow.pop %v4702
        %v4704 = vmul.f32 %v4489, 1.442695
        %v4705 = vpow.pop %v4704
        %v4706 = vmul.f32 %v4490, 1.442695
        %v4707 = vpow.pop %v4706
        %v4708 = vmul.f32 %v4491, 1.442695
        %v4709 = vpow.pop %v4708
        %v4710 = vmul.f32 %v4492, 1.442695
        %v4711 = vpow.pop %v4710
        %v4712 = vmul.f32 %v4493, 1.442695
        %v4713 = vpow.pop %v4712
        %v4714 = vmul.f32 %v4494, 1.442695
        %v4715 = vpow.pop %v4714
        %v4716 = vmul.f32 %v4495, 1.442695
        %v4717 = vpow.pop %v4716
        %v4718 = vmul.f32 %v4496, 1.442695
        %v4719 = vpow.pop %v4718
        %v4720 = vmul.f32 %v4497, 1.442695
        %v4721 = vpow.pop %v4720
        %v4722 = vadd.f32 %v4499, 1.0
        %v4723 = vadd.f32 %v4501, 1.0
        %v4724 = vadd.f32 %v4503, 1.0
        %v4725 = vadd.f32 %v4505, 1.0
        %v4726 = vadd.f32 %v4507, 1.0
        %v4727 = vadd.f32 %v4509, 1.0
        %v4728 = vadd.f32 %v4511, 1.0
        %v4729 = vadd.f32 %v4513, 1.0
        %v4730 = vadd.f32 %v4515, 1.0
        %v4731 = vadd.f32 %v4517, 1.0
        %v4732 = vadd.f32 %v4519, 1.0
        %v4733 = vadd.f32 %v4521, 1.0
        %v4734 = vadd.f32 %v4523, 1.0
        %v4735 = vadd.f32 %v4525, 1.0
        %v4736 = vadd.f32 %v4527, 1.0
        %v4737 = vadd.f32 %v4529, 1.0
        %v4738 = vadd.f32 %v4531, 1.0
        %v4739 = vadd.f32 %v4533, 1.0
        %v4740 = vadd.f32 %v4535, 1.0
        %v4741 = vadd.f32 %v4537, 1.0
        %v4742 = vadd.f32 %v4539, 1.0
        %v4743 = vadd.f32 %v4541, 1.0
        %v4744 = vadd.f32 %v4543, 1.0
        %v4745 = vadd.f32 %v4545, 1.0
        %v4746 = vadd.f32 %v4547, 1.0
        %v4747 = vadd.f32 %v4549, 1.0
        %v4748 = vadd.f32 %v4551, 1.0
        %v4749 = vadd.f32 %v4553, 1.0
        %v4750 = vadd.f32 %v4555, 1.0
        %v4751 = vadd.f32 %v4557, 1.0
        %v4752 = vadd.f32 %v4559, 1.0
        %v4753 = vadd.f32 %v4561, 1.0
        %v4754 = vadd.f32 %v4563, 1.0
        %v4755 = vadd.f32 %v4565, 1.0
        %v4756 = vadd.f32 %v4567, 1.0
        %v4757 = vadd.f32 %v4569, 1.0
        %v4758 = vadd.f32 %v4571, 1.0
        %v4759 = vadd.f32 %v4573, 1.0
        %v4760 = vadd.f32 %v4575, 1.0
        %v4761 = vadd.f32 %v4577, 1.0
        %v4762 = vadd.f32 %v4579, 1.0
        %v4763 = vadd.f32 %v4581, 1.0
        %v4764 = vadd.f32 %v4583, 1.0
        %v4765 = vadd.f32 %v4585, 1.0
        %v4766 = vadd.f32 %v4587, 1.0
        %v4767 = vadd.f32 %v4589, 1.0
        %v4768 = vadd.f32 %v4591, 1.0
        %v4769 = vadd.f32 %v4593, 1.0
        %v4770 = vadd.f32 %v4595, 1.0
        %v4771 = vadd.f32 %v4597, 1.0
        %v4772 = vadd.f32 %v4599, 1.0
        %v4773 = vadd.f32 %v4601, 1.0
        %v4774 = vadd.f32 %v4603, 1.0
        %v4775 = vadd.f32 %v4605, 1.0
        %v4776 = vadd.f32 %v4607, 1.0
        %v4777 = vadd.f32 %v4609, 1.0
        %v4778 = vadd.f32 %v4611, 1.0
        %v4779 = vadd.f32 %v4613, 1.0
        %v4780 = vadd.f32 %v4615, 1.0
        %v4781 = vadd.f32 %v4617, 1.0
        %v4782 = vadd.f32 %v4619, 1.0
        %v4783 = vadd.f32 %v4621, 1.0
        %v4784 = vadd.f32 %v4623, 1.0
        %v4785 = vadd.f32 %v4625, 1.0
        %v4786 = vadd.f32 %v4627, 1.0
        %v4787 = vadd.f32 %v4629, 1.0
        %v4788 = vadd.f32 %v4631, 1.0
        %v4789 = vadd.f32 %v4633, 1.0
        %v4790 = vadd.f32 %v4635, 1.0
        %v4791 = vadd.f32 %v4637, 1.0
        %v4792 = vadd.f32 %v4639, 1.0
        %v4793 = vadd.f32 %v4641, 1.0
        %v4794 = vadd.f32 %v4643, 1.0
        %v4795 = vadd.f32 %v4645, 1.0
        %v4796 = vadd.f32 %v4647, 1.0
        %v4797 = vadd.f32 %v4649, 1.0
        %v4798 = vadd.f32 %v4651, 1.0
        %v4799 = vadd.f32 %v4653, 1.0
        %v4800 = vadd.f32 %v4655, 1.0
        %v4801 = vadd.f32 %v4657, 1.0
        %v4802 = vadd.f32 %v4659, 1.0
        %v4803 = vadd.f32 %v4661, 1.0
        %v4804 = vadd.f32 %v4663, 1.0
        %v4805 = vadd.f32 %v4665, 1.0
        %v4806 = vadd.f32 %v4667, 1.0
        %v4807 = vadd.f32 %v4669, 1.0
        %v4808 = vadd.f32 %v4671, 1.0
        %v4809 = vadd.f32 %v4673, 1.0
        %v4810 = vadd.f32 %v4675, 1.0
        %v4811 = vadd.f32 %v4677, 1.0
        %v4812 = vadd.f32 %v4679, 1.0
        %v4813 = vadd.f32 %v4681, 1.0
        %v4814 = vadd.f32 %v4683, 1.0
        %v4815 = vadd.f32 %v4685, 1.0
        %v4816 = vadd.f32 %v4687, 1.0
        %v4817 = vadd.f32 %v4689, 1.0
        %v4818 = vadd.f32 %v4691, 1.0
        %v4819 = vadd.f32 %v4693, 1.0
        %v4820 = vadd.f32 %v4695, 1.0
        %v4821 = vadd.f32 %v4697, 1.0
        %v4822 = vadd.f32 %v4699, 1.0
        %v4823 = vadd.f32 %v4701, 1.0
        %v4824 = vadd.f32 %v4703, 1.0
        %v4825 = vadd.f32 %v4705, 1.0
        %v4826 = vadd.f32 %v4707, 1.0
        %v4827 = vadd.f32 %v4709, 1.0
        %v4828 = vadd.f32 %v4711, 1.0
        %v4829 = vadd.f32 %v4713, 1.0
        %v4830 = vadd.f32 %v4715, 1.0
        %v4831 = vadd.f32 %v4717, 1.0
        %v4832 = vadd.f32 %v4719, 1.0
        %v4833 = vadd.f32 %v4721, 1.0
        %v4834 = vrcp.pop %v4722
        %v4835 = vmul.f32 1.0, %v4834
        %v4836 = vrcp.pop %v4723
        %v4837 = vmul.f32 1.0, %v4836
        %v4838 = vrcp.pop %v4724
        %v4839 = vmul.f32 1.0, %v4838
        %v4840 = vrcp.pop %v4725
        %v4841 = vmul.f32 1.0, %v4840
        %v4842 = vrcp.pop %v4726
        %v4843 = vmul.f32 1.0, %v4842
        %v4844 = vrcp.pop %v4727
        %v4845 = vmul.f32 1.0, %v4844
        %v4846 = vrcp.pop %v4728
        %v4847 = vmul.f32 1.0, %v4846
        %v4848 = vrcp.pop %v4729
        %v4849 = vmul.f32 1.0, %v4848
        %v4850 = vrcp.pop %v4730
        %v4851 = vmul.f32 1.0, %v4850
        %v4852 = vrcp.pop %v4731
        %v4853 = vmul.f32 1.0, %v4852
        %v4854 = vrcp.pop %v4732
        %v4855 = vmul.f32 1.0, %v4854
        %v4856 = vrcp.pop %v4733
        %v4857 = vmul.f32 1.0, %v4856
        %v4858 = vrcp.pop %v4734
        %v4859 = vmul.f32 1.0, %v4858
        %v4860 = vrcp.pop %v4735
        %v4861 = vmul.f32 1.0, %v4860
        %v4862 = vrcp.pop %v4736
        %v4863 = vmul.f32 1.0, %v4862
        %v4864 = vrcp.pop %v4737
        %v4865 = vmul.f32 1.0, %v4864
        %v4866 = vrcp.pop %v4738
        %v4867 = vmul.f32 1.0, %v4866
        %v4868 = vrcp.pop %v4739
        %v4869 = vmul.f32 1.0, %v4868
        %v4870 = vrcp.pop %v4740
        %v4871 = vmul.f32 1.0, %v4870
        %v4872 = vrcp.pop %v4741
        %v4873 = vmul.f32 1.0, %v4872
        %v4874 = vrcp.pop %v4742
        %v4875 = vmul.f32 1.0, %v4874
        %v4876 = vrcp.pop %v4743
        %v4877 = vmul.f32 1.0, %v4876
        %v4878 = vrcp.pop %v4744
        %v4879 = vmul.f32 1.0, %v4878
        %v4880 = vrcp.pop %v4745
        %v4881 = vmul.f32 1.0, %v4880
        %v4882 = vrcp.pop %v4746
        %v4883 = vmul.f32 1.0, %v4882
        %v4884 = vrcp.pop %v4747
        %v4885 = vmul.f32 1.0, %v4884
        %v4886 = vrcp.pop %v4748
        %v4887 = vmul.f32 1.0, %v4886
        %v4888 = vrcp.pop %v4749
        %v4889 = vmul.f32 1.0, %v4888
        %v4890 = vrcp.pop %v4750
        %v4891 = vmul.f32 1.0, %v4890
        %v4892 = vrcp.pop %v4751
        %v4893 = vmul.f32 1.0, %v4892
        %v4894 = vrcp.pop %v4752
        %v4895 = vmul.f32 1.0, %v4894
        %v4896 = vrcp.pop %v4753
        %v4897 = vmul.f32 1.0, %v4896
        %v4898 = vrcp.pop %v4754
        %v4899 = vmul.f32 1.0, %v4898
        %v4900 = vrcp.pop %v4755
        %v4901 = vmul.f32 1.0, %v4900
        %v4902 = vrcp.pop %v4756
        %v4903 = vmul.f32 1.0, %v4902
        %v4904 = vrcp.pop %v4757
        %v4905 = vmul.f32 1.0, %v4904
        %v4906 = vrcp.pop %v4758
        %v4907 = vmul.f32 1.0, %v4906
        %v4908 = vrcp.pop %v4759
        %v4909 = vmul.f32 1.0, %v4908
        %v4910 = vrcp.pop %v4760
        %v4911 = vmul.f32 1.0, %v4910
        %v4912 = vrcp.pop %v4761
        %v4913 = vmul.f32 1.0, %v4912
        %v4914 = vrcp.pop %v4762
        %v4915 = vmul.f32 1.0, %v4914
        %v4916 = vrcp.pop %v4763
        %v4917 = vmul.f32 1.0, %v4916
        %v4918 = vrcp.pop %v4764
        %v4919 = vmul.f32 1.0, %v4918
        %v4920 = vrcp.pop %v4765
        %v4921 = vmul.f32 1.0, %v4920
        %v4922 = vrcp.pop %v4766
        %v4923 = vmul.f32 1.0, %v4922
        %v4924 = vrcp.pop %v4767
        %v4925 = vmul.f32 1.0, %v4924
        %v4926 = vrcp.pop %v4768
        %v4927 = vmul.f32 1.0, %v4926
        %v4928 = vrcp.pop %v4769
        %v4929 = vmul.f32 1.0, %v4928
        %v4930 = vrcp.pop %v4770
        %v4931 = vmul.f32 1.0, %v4930
        %v4932 = vrcp.pop %v4771
        %v4933 = vmul.f32 1.0, %v4932
        %v4934 = vrcp.pop %v4772
        %v4935 = vmul.f32 1.0, %v4934
        %v4936 = vrcp.pop %v4773
        %v4937 = vmul.f32 1.0, %v4936
        %v4938 = vrcp.pop %v4774
        %v4939 = vmul.f32 1.0, %v4938
        %v4940 = vrcp.pop %v4775
        %v4941 = vmul.f32 1.0, %v4940
        %v4942 = vrcp.pop %v4776
        %v4943 = vmul.f32 1.0, %v4942
        %v4944 = vrcp.pop %v4777
        %v4945 = vmul.f32 1.0, %v4944
        %v4946 = vrcp.pop %v4778
        %v4947 = vmul.f32 1.0, %v4946
        %v4948 = vrcp.pop %v4779
        %v4949 = vmul.f32 1.0, %v4948
        %v4950 = vrcp.pop %v4780
        %v4951 = vmul.f32 1.0, %v4950
        %v4952 = vrcp.pop %v4781
        %v4953 = vmul.f32 1.0, %v4952
        %v4954 = vrcp.pop %v4782
        %v4955 = vmul.f32 1.0, %v4954
        %v4956 = vrcp.pop %v4783
        %v4957 = vmul.f32 1.0, %v4956
        %v4958 = vrcp.pop %v4784
        %v4959 = vmul.f32 1.0, %v4958
        %v4960 = vrcp.pop %v4785
        %v4961 = vmul.f32 1.0, %v4960
        %v4962 = vrcp.pop %v4786
        %v4963 = vmul.f32 1.0, %v4962
        %v4964 = vrcp.pop %v4787
        %v4965 = vmul.f32 1.0, %v4964
        %v4966 = vrcp.pop %v4788
        %v4967 = vmul.f32 1.0, %v4966
        %v4968 = vrcp.pop %v4789
        %v4969 = vmul.f32 1.0, %v4968
        %v4970 = vrcp.pop %v4790
        %v4971 = vmul.f32 1.0, %v4970
        %v4972 = vrcp.pop %v4791
        %v4973 = vmul.f32 1.0, %v4972
        %v4974 = vrcp.pop %v4792
        %v4975 = vmul.f32 1.0, %v4974
        %v4976 = vrcp.pop %v4793
        %v4977 = vmul.f32 1.0, %v4976
        %v4978 = vrcp.pop %v4794
        %v4979 = vmul.f32 1.0, %v4978
        %v4980 = vrcp.pop %v4795
        %v4981 = vmul.f32 1.0, %v4980
        %v4982 = vrcp.pop %v4796
        %v4983 = vmul.f32 1.0, %v4982
        %v4984 = vrcp.pop %v4797
        %v4985 = vmul.f32 1.0, %v4984
        %v4986 = vrcp.pop %v4798
        %v4987 = vmul.f32 1.0, %v4986
        %v4988 = vrcp.pop %v4799
        %v4989 = vmul.f32 1.0, %v4988
        %v4990 = vrcp.pop %v4800
        %v4991 = vmul.f32 1.0, %v4990
        %v4992 = vrcp.pop %v4801
        %v4993 = vmul.f32 1.0, %v4992
        %v4994 = vrcp.pop %v4802
        %v4995 = vmul.f32 1.0, %v4994
        %v4996 = vrcp.pop %v4803
        %v4997 = vmul.f32 1.0, %v4996
        %v4998 = vrcp.pop %v4804
        %v4999 = vmul.f32 1.0, %v4998
        %v5000 = vrcp.pop %v4805
        %v5001 = vmul.f32 1.0, %v5000
        %v5002 = vrcp.pop %v4806
        %v5003 = vmul.f32 1.0, %v5002
        %v5004 = vrcp.pop %v4807
        %v5005 = vmul.f32 1.0, %v5004
        %v5006 = vrcp.pop %v4808
        %v5007 = vmul.f32 1.0, %v5006
        %v5008 = vrcp.pop %v4809
        %v5009 = vmul.f32 1.0, %v5008
        %v5010 = vrcp.pop %v4810
        %v5011 = vmul.f32 1.0, %v5010
        %v5012 = vrcp.pop %v4811
        %v5013 = vmul.f32 1.0, %v5012
        %v5014 = vrcp.pop %v4812
        %v5015 = vmul.f32 1.0, %v5014
        %v5016 = vrcp.pop %v4813
        %v5017 = vmul.f32 1.0, %v5016
        %v5018 = vrcp.pop %v4814
        %v5019 = vmul.f32 1.0, %v5018
        %v5020 = vrcp.pop %v4815
        %v5021 = vmul.f32 1.0, %v5020
        %v5022 = vrcp.pop %v4816
        %v5023 = vmul.f32 1.0, %v5022
        %v5024 = vrcp.pop %v4817
        %v5025 = vmul.f32 1.0, %v5024
        %v5026 = vrcp.pop %v4818
        %v5027 = vmul.f32 1.0, %v5026
        %v5028 = vrcp.pop %v4819
        %v5029 = vmul.f32 1.0, %v5028
        %v5030 = vrcp.pop %v4820
        %v5031 = vmul.f32 1.0, %v5030
        %v5032 = vrcp.pop %v4821
        %v5033 = vmul.f32 1.0, %v5032
        %v5034 = vrcp.pop %v4822
        %v5035 = vmul.f32 1.0, %v5034
        %v5036 = vrcp.pop %v4823
        %v5037 = vmul.f32 1.0, %v5036
        %v5038 = vrcp.pop %v4824
        %v5039 = vmul.f32 1.0, %v5038
        %v5040 = vrcp.pop %v4825
        %v5041 = vmul.f32 1.0, %v5040
        %v5042 = vrcp.pop %v4826
        %v5043 = vmul.f32 1.0, %v5042
        %v5044 = vrcp.pop %v4827
        %v5045 = vmul.f32 1.0, %v5044
        %v5046 = vrcp.pop %v4828
        %v5047 = vmul.f32 1.0, %v5046
        %v5048 = vrcp.pop %v4829
        %v5049 = vmul.f32 1.0, %v5048
        %v5050 = vrcp.pop %v4830
        %v5051 = vmul.f32 1.0, %v5050
        %v5052 = vrcp.pop %v4831
        %v5053 = vmul.f32 1.0, %v5052
        %v5054 = vrcp.pop %v4832
        %v5055 = vmul.f32 1.0, %v5054
        %v5056 = vrcp.pop %v4833
        %v5057 = vmul.f32 1.0, %v5056
        %5058 = vst [vmem:[%s515] sm:$0xff] %v4835
        %5059 = vst [vmem:[%s515 + $0x8] sm:$0xff] %v4837
        %5060 = vst [vmem:[%s515 + $0x10] sm:$0xff] %v4839
        %5061 = vst [vmem:[%s515 + $0x18] sm:$0xff] %v4841
        %5062 = vst [vmem:[%s515 + $0x20] sm:$0xff] %v4843
        %5063 = vst [vmem:[%s515 + $0x28] sm:$0xff] %v4845
        %5064 = vst [vmem:[%s515 + $0x30] sm:$0xff] %v4847
        %5065 = vst [vmem:[%s515 + $0x38] sm:$0xff] %v4849
        %5066 = vst [vmem:[%s515 + $0x40] sm:$0xff] %v4851
        %5067 = vst [vmem:[%s515 + $0x48] sm:$0xff] %v4853
        %5068 = vst [vmem:[%s515 + $0x50] sm:$0xff] %v4855
        %5069 = vst [vmem:[%s515 + $0x58] sm:$0xff] %v4857
        %5070 = vst [vmem:[%s515 + $0x60] sm:$0xff] %v4859
        %5071 = vst [vmem:[%s515 + $0x68] sm:$0xff] %v4861
        %5072 = vst [vmem:[%s515 + $0x70] sm:$0xff] %v4863
        %5073 = vst [vmem:[%s515 + $0x78] sm:$0xff] %v4865
        %5074 = vst [vmem:[%s515 + $0x80] sm:$0xff] %v4867
        %5075 = vst [vmem:[%s515 + $0x88] sm:$0xff] %v4869
        %5076 = vst [vmem:[%s515 + $0x90] sm:$0xff] %v4871
        %5077 = vst [vmem:[%s515 + $0x98] sm:$0xff] %v4873
        %5078 = vst [vmem:[%s515 + $0xa0] sm:$0xff] %v4875
        %5079 = vst [vmem:[%s515 + $0xa8] sm:$0xff] %v4877
        %5080 = vst [vmem:[%s515 + $0xb0] sm:$0xff] %v4879
        %5081 = vst [vmem:[%s515 + $0xb8] sm:$0xff] %v4881
        %5082 = vst [vmem:[%s515 + $0xc0] sm:$0xff] %v4883
        %5083 = vst [vmem:[%s515 + $0xc8] sm:$0xff] %v4885
        %5084 = vst [vmem:[%s515 + $0xd0] sm:$0xff] %v4887
        %5085 = vst [vmem:[%s515 + $0xd8] sm:$0xff] %v4889
        %5086 = vst [vmem:[%s515 + $0xe0] sm:$0xff] %v4891
        %5087 = vst [vmem:[%s515 + $0xe8] sm:$0xff] %v4893
        %5088 = vst [vmem:[%s515 + $0xf0] sm:$0xff] %v4895
        %5089 = vst [vmem:[%s515 + $0xf8] sm:$0xff] %v4897
        %5090 = vst [vmem:[%s515 + $0x100] sm:$0xff] %v4899
        %5091 = vst [vmem:[%s515 + $0x108] sm:$0xff] %v4901
        %5092 = vst [vmem:[%s515 + $0x110] sm:$0xff] %v4903
        %5093 = vst [vmem:[%s515 + $0x118] sm:$0xff] %v4905
        %5094 = vst [vmem:[%s515 + $0x120] sm:$0xff] %v4907
        %5095 = vst [vmem:[%s515 + $0x128] sm:$0xff] %v4909
        %5096 = vst [vmem:[%s515 + $0x130] sm:$0xff] %v4911
        %5097 = vst [vmem:[%s515 + $0x138] sm:$0xff] %v4913
        %5098 = vst [vmem:[%s515 + $0x140] sm:$0xff] %v4915
        %5099 = vst [vmem:[%s515 + $0x148] sm:$0xff] %v4917
        %5100 = vst [vmem:[%s515 + $0x150] sm:$0xff] %v4919
        %5101 = vst [vmem:[%s515 + $0x158] sm:$0xff] %v4921
        %5102 = vst [vmem:[%s515 + $0x160] sm:$0xff] %v4923
        %5103 = vst [vmem:[%s515 + $0x168] sm:$0xff] %v4925
        %5104 = vst [vmem:[%s515 + $0x170] sm:$0xff] %v4927
        %5105 = vst [vmem:[%s515 + $0x178] sm:$0xff] %v4929
        %5106 = vst [vmem:[%s515 + $0x180] sm:$0xff] %v4931
        %5107 = vst [vmem:[%s515 + $0x188] sm:$0xff] %v4933
        %5108 = vst [vmem:[%s515 + $0x190] sm:$0xff] %v4935
        %5109 = vst [vmem:[%s515 + $0x198] sm:$0xff] %v4937
        %5110 = vst [vmem:[%s515 + $0x1a0] sm:$0xff] %v4939
        %5111 = vst [vmem:[%s515 + $0x1a8] sm:$0xff] %v4941
        %5112 = vst [vmem:[%s515 + $0x1b0] sm:$0xff] %v4943
        %5113 = vst [vmem:[%s515 + $0x1b8] sm:$0xff] %v4945
        %5114 = vst [vmem:[%s515 + $0x1c0] sm:$0xff] %v4947
        %5115 = vst [vmem:[%s515 + $0x1c8] sm:$0xff] %v4949
        %5116 = vst [vmem:[%s515 + $0x1d0] sm:$0xff] %v4951
        %5117 = vst [vmem:[%s515 + $0x1d8] sm:$0xff] %v4953
        %5118 = vst [vmem:[%s515 + $0x1e0] sm:$0xff] %v4955
        %5119 = vst [vmem:[%s515 + $0x1e8] sm:$0xff] %v4957
        %5120 = vst [vmem:[%s515 + $0x1f0] sm:$0xff] %v4959
        %5121 = vst [vmem:[%s515 + $0x1f8] sm:$0xff] %v4961
        %5122 = vst [vmem:[%s515 + $0x200] sm:$0xff] %v4963
        %5123 = vst [vmem:[%s515 + $0x208] sm:$0xff] %v4965
        %5124 = vst [vmem:[%s515 + $0x210] sm:$0xff] %v4967
        %5125 = vst [vmem:[%s515 + $0x218] sm:$0xff] %v4969
        %5126 = vst [vmem:[%s515 + $0x220] sm:$0xff] %v4971
        %5127 = vst [vmem:[%s515 + $0x228] sm:$0xff] %v4973
        %5128 = vst [vmem:[%s515 + $0x230] sm:$0xff] %v4975
        %5129 = vst [vmem:[%s515 + $0x238] sm:$0xff] %v4977
        %5130 = vst [vmem:[%s515 + $0x240] sm:$0xff] %v4979
        %5131 = vst [vmem:[%s515 + $0x248] sm:$0xff] %v4981
        %5132 = vst [vmem:[%s515 + $0x250] sm:$0xff] %v4983
        %5133 = vst [vmem:[%s515 + $0x258] sm:$0xff] %v4985
        %5134 = vst [vmem:[%s515 + $0x260] sm:$0xff] %v4987
        %5135 = vst [vmem:[%s515 + $0x268] sm:$0xff] %v4989
        %5136 = vst [vmem:[%s515 + $0x270] sm:$0xff] %v4991
        %5137 = vst [vmem:[%s515 + $0x278] sm:$0xff] %v4993
        %5138 = vst [vmem:[%s515 + $0x280] sm:$0xff] %v4995
        %5139 = vst [vmem:[%s515 + $0x288] sm:$0xff] %v4997
        %5140 = vst [vmem:[%s515 + $0x290] sm:$0xff] %v4999
        %5141 = vst [vmem:[%s515 + $0x298] sm:$0xff] %v5001
        %5142 = vst [vmem:[%s515 + $0x2a0] sm:$0xff] %v5003
        %5143 = vst [vmem:[%s515 + $0x2a8] sm:$0xff] %v5005
        %5144 = vst [vmem:[%s515 + $0x2b0] sm:$0xff] %v5007
        %5145 = vst [vmem:[%s515 + $0x2b8] sm:$0xff] %v5009
        %5146 = vst [vmem:[%s515 + $0x2c0] sm:$0xff] %v5011
        %5147 = vst [vmem:[%s515 + $0x2c8] sm:$0xff] %v5013
        %5148 = vst [vmem:[%s515 + $0x2d0] sm:$0xff] %v5015
        %5149 = vst [vmem:[%s515 + $0x2d8] sm:$0xff] %v5017
        %5150 = vst [vmem:[%s515 + $0x2e0] sm:$0xff] %v5019
        %5151 = vst [vmem:[%s515 + $0x2e8] sm:$0xff] %v5021
        %5152 = vst [vmem:[%s515 + $0x2f0] sm:$0xff] %v5023
        %5153 = vst [vmem:[%s515 + $0x2f8] sm:$0xff] %v5025
        %5154 = vst [vmem:[%s515 + $0x300] sm:$0xff] %v5027
        %5155 = vst [vmem:[%s515 + $0x308] sm:$0xff] %v5029
        %5156 = vst [vmem:[%s515 + $0x310] sm:$0xff] %v5031
        %5157 = vst [vmem:[%s515 + $0x318] sm:$0xff] %v5033
        %5158 = vst [vmem:[%s515 + $0x320] sm:$0xff] %v5035
        %5159 = vst [vmem:[%s515 + $0x328] sm:$0xff] %v5037
        %5160 = vst [vmem:[%s515 + $0x330] sm:$0xff] %v5039
        %5161 = vst [vmem:[%s515 + $0x338] sm:$0xff] %v5041
        %5162 = vst [vmem:[%s515 + $0x340] sm:$0xff] %v5043
        %5163 = vst [vmem:[%s515 + $0x348] sm:$0xff] %v5045
        %5164 = vst [vmem:[%s515 + $0x350] sm:$0xff] %v5047
        %5165 = vst [vmem:[%s515 + $0x358] sm:$0xff] %v5049
        %5166 = vst [vmem:[%s515 + $0x360] sm:$0xff] %v5051
        %5167 = vst [vmem:[%s515 + $0x368] sm:$0xff] %v5053
        %5168 = vst [vmem:[%s515 + $0x370] sm:$0xff] %v5055
        %5169 = vst [vmem:[%s515 + $0x378] sm:$0xff] %v5057
        %s5170 = sand.u32 %s275, 1
        %s5171 = scalar_lea.sflag [#allocation4], %s5170
        %s5172 = sand.u32 %s275, 1
        %s5173 = smul.addr %s5172, 896
        %s5174 = scalar_lea.vmem [#allocation19], %s5173
        // Predicated region
        $region105: #{tpu_custom_call.1} parent=63 // pred_check
          %p5175 = pneg %p285
        $region106: #{tpu_custom_call.1} parent=63 // pred_check_branch
          %5177 = sbr.rel (%p5175) target = $region108
        $region107: #{tpu_custom_call.1} parent=63 // pred_region
          %s5179 = ssub.s32 14336, 14336
          %5180 = vsyncadd %s5171, %s5179
          %s5181 = smul.addr %s31, 112
          %s5182 = smul.addr %s5181, 128
          %s5183 = scalar_lea.hbm %s11, %s5182
          %s5184 = sshll.u32 %s5174, 4
          %s5185 = int_to_ptr.vmem [resolvable:$true] %s5184
          %5190 = dma.vmem_to_hbm [thread:$0]  %s5185, 14336, %s5183, %s5171, 896, 896, 56
        $region108: #{tpu_custom_call.1} parent=63 // pred_fallthru
          _
      $region64: #{tpu_custom_call.1} parent=5 // pred_fallthru
        _
      %p5191 = scmp.le.s32.totalorder 2, %s26
      // Predicated region
      $region109: #{tpu_custom_call.1} parent=5 // pred_check
        %p5192 = pneg %p5191
      $region110: #{tpu_custom_call.1} parent=5 // pred_check_branch
        %5194 = sbr.rel (%p5192) target = $region112
      $region111: #{tpu_custom_call.1} parent=5 // pred_region
        %s5195 = ssub.s32 %s26, 2
        // Predicated region
        $region113: #{tpu_custom_call.1} parent=111 // pred_check
          %p5196 = pneg %p291
        $region114: #{tpu_custom_call.1} parent=111 // pred_check_branch
          %5198 = sbr.rel (%p5196) target = $region116
        $region115: #{tpu_custom_call.1} parent=111 // pred_region
          %s5199 = sand.u32 %s276, 1
          %s5200 = scalar_lea.sflag [#allocation4], %s5199
          %s5201 = sand.u32 %s276, 1
          %s5202 = smul.addr %s5201, 896
          %s5203 = scalar_lea.vmem [#allocation19], %s5202
          %5204 = dma.done %s5200, 14336
        $region116: #{tpu_custom_call.1} parent=111 // pred_fallthru
          _
      $region112: #{tpu_custom_call.1} parent=5 // pred_fallthru
        _
    $region6: #{tpu_custom_call.1} parent=1 // loop_footer
      %s30 = sadd.s32 1, %s26
    $region7: #{tpu_custom_call.1} parent=1 // loop_footer_branch
      %25 = sbr.rel target = $region3
    $region8: #{tpu_custom_call.1} parent=1 // loop_exit
      _
    %5205 = vsyncpa [#allocation3], 1
    %s5206 = scalar_lea.sflag [#allocation3], 1
    %5207 = vsyncpa %s5206, 1
    %5208 = vsyncpa [#allocation6], 1
    %5209 = vsyncpa [#allocation9], 1
    %5210 = vsyncpa [#allocation12], 1
    %5211 = vsyncpa [#allocation15], 1
    %5212 = vsyncpa [#allocation18], 1
    %5213 = vsyncpa [#allocation4], 1
    %s5214 = scalar_lea.sflag [#allocation4], 1
    %5215 = vsyncpa %s5214, 1

</llo_original>
